<compile_context>
chip_gen: v7x
topology: tpu7x:2x2x1
jax: 0.10.0
libtpu: 0.0.40
codegen_flags: <defaults>
</compile_context>

<pallas_src>
import functools

import numpy as np
import jax
import jax.numpy as jnp
from jax.experimental import pallas as pl
from jax.experimental.pallas import tpu as pltpu


def resblock_kernel(x_ref, eo_ref, maskl_ref, maskr_ref,
                    g1_ref, be1_ref,
                    red_ref, exp_ref,
                    w1_ref, b1_ref,
                    g2_ref, be2_ref,
                    w2_ref, b2_ref,
                    out_ref,
                    pad_ref,
                    *, H, W, C, Cout, groups, eps):
    HW = H * W
    cg = C // groups

    x = x_ref[0]                      # (HW, C) f32
    maskl = maskl_ref[...]            # (HW, 1) bf16  (valid when j >= 1)
    maskr = maskr_ref[...]            # (HW, 1) bf16  (valid when j <= W-2)
    red = red_ref[...]                # (C, G) f32
    expm = exp_ref[...]               # (G, C) f32

    # Zero the halo rows of the padded conv scratch once; the body rows are
    # fully overwritten before each conv, so the halos stay zero.
    pad_ref[pl.ds(0, W + 1), :] = jnp.zeros((W + 1, C), jnp.bfloat16)
    pad_ref[pl.ds(W + 1 + HW, W + 1), :] = jnp.zeros((W + 1, C), jnp.bfloat16)

    def group_norm(v, gamma, beta):
        # Two-pass (centered) GroupNorm: robust vs. E[x^2]-E[x]^2 cancellation.
        n = jnp.float32(cg * HW)
        s = jnp.sum(v, axis=0, keepdims=True)                         # (1, C)
        gsum = jnp.dot(s, red, preferred_element_type=jnp.float32)    # (1, G)
        mean_c = jnp.dot(gsum / n, expm,
                         preferred_element_type=jnp.float32)          # (1, C)
        d = v - mean_c
        ss = jnp.sum(d * d, axis=0, keepdims=True)                    # (1, C)
        gss = jnp.dot(ss, red, preferred_element_type=jnp.float32)    # (1, G)
        var_c = jnp.dot(gss / n, expm,
                        preferred_element_type=jnp.float32)           # (1, C)
        inv = jax.lax.rsqrt(jnp.maximum(var_c, 0.0) + eps)
        return d * (inv * gamma) + beta

    def conv3x3(v, w_ref_, bias, cin, cout):
        # 3x3 "same" conv: write the activation into the zero-row-padded bf16
        # scratch once, then each of the 9 taps is a static-offset (HW, cin)
        # slice; only the dw=+/-1 taps need a column mask.  All tap matmuls
        # run bf16 x bf16 on the MXU with f32 accumulation.
        pad_ref[pl.ds(W + 1, HW), :] = v.astype(jnp.bfloat16)
        acc = jnp.zeros((HW, cout), jnp.float32)
        k = 0
        for dh in (-1, 0, 1):
            for dw in (-1, 0, 1):
                tap = pad_ref[pl.ds((W + 1) + dh * W + dw, HW), :]    # (HW, cin) bf16
                if dw == 1:
                    tap = tap * maskr
                elif dw == -1:
                    tap = tap * maskl
                wk = w_ref_[pl.ds(k * cin, cin), :]                   # (cin, cout) bf16
                acc = acc + jnp.dot(tap, wk, preferred_element_type=jnp.float32)
                k += 1
        return acc + bias

    # ---- in_layers: GroupNorm32 -> SiLU -> Conv3x3(pad=1) ----
    h = group_norm(x, g1_ref[...], be1_ref[...])
    h = h * jax.nn.sigmoid(h)
    h = conv3x3(h, w1_ref, b1_ref[...], C, Cout)

    # ---- emb_layers result (computed in the wrapper), broadcast over spatial ----
    h = h + eo_ref[0]                                                 # (1, Cout)

    # ---- out_layers: GroupNorm32 -> SiLU -> Dropout(identity in eval) -> Conv3x3 ----
    # TODO(synk): training-mode RNG Dropout not implemented (eval semantics only).
    h = group_norm(h, g2_ref[...], be2_ref[...])
    h = h * jax.nn.sigmoid(h)
    h = conv3x3(h, w2_ref, b2_ref[...], Cout, Cout)

    # ---- skip_connection = Identity (out_channels == channels) ----
    out_ref[0] = (x + h).astype(out_ref.dtype)


def resblock_forward(x_nchw, emb, params, *, groups=32, eps=1e-5):
    B, C, H, W = x_nchw.shape
    Cout = params["w1"].shape[0]
    HW = H * W
    G = groups
    assert C == Cout, "kernel implements the Identity skip path (out_channels == channels)"
    assert C % groups == 0 and Cout % groups == 0

    x_flat = jnp.transpose(x_nchw, (0, 2, 3, 1)).reshape(B, HW, C).astype(jnp.float32)

    # emb_layers (SiLU -> Linear) is tiny; do it in plain XLA and hand the
    # per-batch (1, Cout) result to the kernel.
    e = emb.astype(jnp.float32)
    eo = (e * jax.nn.sigmoid(e)) @ params["w_emb"] + params["b_emb"][None, :]
    eo3 = eo.reshape(B, 1, Cout)

    def flat_conv_w(w):  # PyTorch OIHW (Co, Ci, 3, 3) -> (9*Ci, Co), tap-major, bf16
        co, ci = w.shape[0], w.shape[1]
        return jnp.transpose(w, (2, 3, 1, 0)).reshape(9 * ci, co).astype(jnp.bfloat16)

    # Small group-reduce / expand matrices (C, G) and (G, C): shrinks the old
    # (C, C) "same-group" matrix by a factor of cg.
    gid = jnp.arange(C) // (C // G)
    red = (gid[:, None] == jnp.arange(G)[None, :]).astype(jnp.float32)   # (C, G)
    expm = red.T                                                         # (G, C)

    # Column-validity masks for the dw=+/-1 conv taps, precomputed once.
    j = jnp.arange(HW, dtype=jnp.int32) % W
    maskl = (j >= 1).astype(jnp.bfloat16).reshape(HW, 1)
    maskr = (j <= W - 2).astype(jnp.bfloat16).reshape(HW, 1)

    args = (
        x_flat, eo3, maskl, maskr,
        params["gn1_w"].reshape(1, C).astype(jnp.float32),
        params["gn1_b"].reshape(1, C).astype(jnp.float32),
        red, expm,
        flat_conv_w(params["w1"]), params["b1"].reshape(1, Cout).astype(jnp.float32),
        params["gn2_w"].reshape(1, Cout).astype(jnp.float32),
        params["gn2_b"].reshape(1, Cout).astype(jnp.float32),
        flat_conv_w(params["w2"]), params["b2"].reshape(1, Cout).astype(jnp.float32),
    )

    def const(shape):
        return pl.BlockSpec(shape, lambda b, _s=shape: tuple(0 for _ in _s))

    in_specs = [
        pl.BlockSpec((1, HW, C), lambda b: (b, 0, 0)),     # x, per batch
        pl.BlockSpec((1, 1, Cout), lambda b: (b, 0, 0)),   # emb projection, per batch
        const((HW, 1)), const((HW, 1)),                    # column masks
        const((1, C)), const((1, C)),                      # gn1 gamma/beta
        const((C, G)), const((G, C)),                      # group reduce / expand
        const((9 * C, Cout)), const((1, Cout)),            # conv1 w/b
        const((1, Cout)), const((1, Cout)),                # gn2 gamma/beta
        const((9 * Cout, Cout)), const((1, Cout)),         # conv2 w/b
    ]

    kernel = functools.partial(resblock_kernel, H=H, W=W, C=C, Cout=Cout,
                               groups=groups, eps=eps)

    out_flat = pl.pallas_call(
        kernel,
        out_shape=jax.ShapeDtypeStruct((B, HW, Cout), jnp.float32),
        grid=(B,),
        in_specs=in_specs,
        out_specs=pl.BlockSpec((1, HW, Cout), lambda b: (b, 0, 0)),
        scratch_shapes=[pltpu.VMEM((HW + 2 * W + 2, C), jnp.bfloat16)],
        compiler_params=pltpu.CompilerParams(
            dimension_semantics=("parallel",),
            vmem_limit_bytes=48 * 1024 * 1024),
    )(*args)

    return jnp.transpose(out_flat.reshape(B, H, W, Cout), (0, 3, 1, 2))


# ---------------- pure-JAX reference (for correctness check) ----------------
def ref_group_norm(x, gamma, beta, groups, eps=1e-5):
    B, C, H, W = x.shape
    xr = x.reshape(B, groups, -1)
    mean = xr.mean(axis=-1, keepdims=True)
    var = xr.var(axis=-1, keepdims=True)  # biased, matches nn.GroupNorm
    xn = ((xr - mean) / jnp.sqrt(var + eps)).reshape(B, C, H, W)
    return xn * gamma[None, :, None, None] + beta[None, :, None, None]


def ref_forward(x, emb, p, groups=32):
    def conv(v, w, b):
        y = jax.lax.conv_general_dilated(
            v, w, window_strides=(1, 1), padding=((1, 1), (1, 1)),
            dimension_numbers=("NCHW", "OIHW", "NCHW"))
        return y + b[None, :, None, None]

    silu = lambda v: v * jax.nn.sigmoid(v)
    h = ref_group_norm(x, p["gn1_w"], p["gn1_b"], groups)
    h = silu(h)
    h = conv(h, p["w1"], p["b1"])
    eo = silu(emb) @ p["w_emb"] + p["b_emb"]
    h = h + eo[:, :, None, None]
    h = ref_group_norm(h, p["gn2_w"], p["gn2_b"], groups)
    h = silu(h)
    h = conv(h, p["w2"], p["b2"])
    return x + h


if __name__ == "__main__":
    # GroupNorm32 requires channels % 32 == 0, so use channels=32 at small spatial size.
    B, C, H, W = 2, 32, 8, 8
    E = 16                       # emb_channels
    Cout = C                     # out_channels=None -> channels (Identity skip)

    key = jax.random.PRNGKey(0)
    ks = jax.random.split(key, 12)
    x = jax.random.normal(ks[0], (B, C, H, W), jnp.float32)
    emb = jax.random.normal(ks[1], (B, E), jnp.float32)

    params = {
        "gn1_w": 1.0 + 0.1 * jax.random.normal(ks[2], (C,), jnp.float32),
        "gn1_b": 0.1 * jax.random.normal(ks[3], (C,), jnp.float32),
        "w1": 0.05 * jax.random.normal(ks[4], (Cout, C, 3, 3), jnp.float32),
        "b1": 0.05 * jax.random.normal(ks[5], (Cout,), jnp.float32),
        "w_emb": 0.05 * jax.random.normal(ks[6], (E, Cout), jnp.float32),  # Linear(E, Cout)
        "b_emb": 0.05 * jax.random.normal(ks[7], (Cout,), jnp.float32),
        "gn2_w": 1.0 + 0.1 * jax.random.normal(ks[8], (Cout,), jnp.float32),
        "gn2_b": 0.1 * jax.random.normal(ks[9], (Cout,), jnp.float32),
        # zero_module() zeroes these in the PyTorch __init__; we use small nonzero
        # deterministic values so the second-conv path is actually exercised.
        "w2": 0.05 * jax.random.normal(ks[10], (Cout, Cout, 3, 3), jnp.float32),
        "b2": 0.05 * jax.random.normal(ks[11], (Cout,), jnp.float32),
    }

    out = jax.block_until_ready(resblock_forward(x, emb, params))
    ref = jax.block_until_ready(ref_forward(x, emb, params))
    np.testing.assert_allclose(np.asarray(out), np.asarray(ref), rtol=2e-2, atol=2e-2)
    print("KERNEL_OK")
</pallas_src>

<mosaic_0001>
module attributes {stable_mosaic.version = 11 : i64} {
  func.func @resblock_kernel(%arg0: i32, %arg1: memref<1x64x32xf32, #tpu.memory_space<vmem>>, %arg2: memref<1x1x32xf32, #tpu.memory_space<vmem>>, %arg3: memref<64x1xbf16, #tpu.memory_space<vmem>>, %arg4: memref<64x1xbf16, #tpu.memory_space<vmem>>, %arg5: memref<1x32xf32, #tpu.memory_space<vmem>>, %arg6: memref<1x32xf32, #tpu.memory_space<vmem>>, %arg7: memref<32x32xf32, #tpu.memory_space<vmem>>, %arg8: memref<32x32xf32, #tpu.memory_space<vmem>>, %arg9: memref<288x32xbf16, #tpu.memory_space<vmem>>, %arg10: memref<1x32xf32, #tpu.memory_space<vmem>>, %arg11: memref<1x32xf32, #tpu.memory_space<vmem>>, %arg12: memref<1x32xf32, #tpu.memory_space<vmem>>, %arg13: memref<288x32xbf16, #tpu.memory_space<vmem>>, %arg14: memref<1x32xf32, #tpu.memory_space<vmem>>, %arg15: memref<1x64x32xf32, #tpu.memory_space<vmem>>, %arg16: memref<82x32xbf16, #tpu.memory_space<vmem>>) attributes {dimension_semantics = [#tpu.dimension_semantics<parallel>], iteration_bounds = array<i64: 2>, scalar_prefetch = 0 : i64, scratch_operands = 1 : i64, tpu.core_type = #tpu.core_type<tc>, window_params = [{transform_indices = @transform_0, window_bounds = array<i64: 1, 64, 32>}, {transform_indices = @transform_1, window_bounds = array<i64: 1, 1, 32>}, {pipeline_mode = #tpu.pipeline_mode<synchronous>, transform_indices = @transform_2, window_bounds = array<i64: 64, 1>}, {pipeline_mode = #tpu.pipeline_mode<synchronous>, transform_indices = @transform_3, window_bounds = array<i64: 64, 1>}, {pipeline_mode = #tpu.pipeline_mode<synchronous>, transform_indices = @transform_4, window_bounds = array<i64: 1, 32>}, {pipeline_mode = #tpu.pipeline_mode<synchronous>, transform_indices = @transform_5, window_bounds = array<i64: 1, 32>}, {pipeline_mode = #tpu.pipeline_mode<synchronous>, transform_indices = @transform_6, window_bounds = array<i64: 32, 32>}, {pipeline_mode = #tpu.pipeline_mode<synchronous>, transform_indices = @transform_7, window_bounds = array<i64: 32, 32>}, {pipeline_mode = #tpu.pipeline_mode<synchronous>, transform_indices = @transform_8, window_bounds = array<i64: 288, 32>}, {pipeline_mode = #tpu.pipeline_mode<synchronous>, transform_indices = @transform_9, window_bounds = array<i64: 1, 32>}, {pipeline_mode = #tpu.pipeline_mode<synchronous>, transform_indices = @transform_10, window_bounds = array<i64: 1, 32>}, {pipeline_mode = #tpu.pipeline_mode<synchronous>, transform_indices = @transform_11, window_bounds = array<i64: 1, 32>}, {pipeline_mode = #tpu.pipeline_mode<synchronous>, transform_indices = @transform_12, window_bounds = array<i64: 288, 32>}, {pipeline_mode = #tpu.pipeline_mode<synchronous>, transform_indices = @transform_13, window_bounds = array<i64: 1, 32>}, {transform_indices = @transform_14, window_bounds = array<i64: 1, 64, 32>}]} {
    %c0 = arith.constant 0 : index
    %c0_0 = arith.constant 0 : index
    %c0_1 = arith.constant 0 : index
    %0 = vector.load %arg1[%c0, %c0_0, %c0_1] : memref<1x64x32xf32, #tpu.memory_space<vmem>>, vector<1x64x32xf32>
    %1 = vector.shape_cast %0 : vector<1x64x32xf32> to vector<64x32xf32>
    %c0_2 = arith.constant 0 : index
    %c0_3 = arith.constant 0 : index
    %2 = vector.load %arg3[%c0_2, %c0_3] : memref<64x1xbf16, #tpu.memory_space<vmem>>, vector<64x1xbf16>
    %c0_4 = arith.constant 0 : index
    %c0_5 = arith.constant 0 : index
    %3 = vector.load %arg4[%c0_4, %c0_5] : memref<64x1xbf16, #tpu.memory_space<vmem>>, vector<64x1xbf16>
    %c0_6 = arith.constant 0 : index
    %c0_7 = arith.constant 0 : index
    %4 = vector.load %arg7[%c0_6, %c0_7] : memref<32x32xf32, #tpu.memory_space<vmem>>, vector<32x32xf32>
    %c0_8 = arith.constant 0 : index
    %c0_9 = arith.constant 0 : index
    %5 = vector.load %arg8[%c0_8, %c0_9] : memref<32x32xf32, #tpu.memory_space<vmem>>, vector<32x32xf32>
    %cst = arith.constant 0.000000e+00 : bf16
    %6 = vector.broadcast %cst : bf16 to vector<9x32xbf16>
    %c0_10 = arith.constant 0 : index
    %c0_11 = arith.constant 0 : index
    %7 = vector.load %arg16[%c0_10, %c0_11] : memref<82x32xbf16, #tpu.memory_space<vmem>>, vector<9x32xbf16>
    tpu.vector_store %arg16[%c0_10, %c0_11], %6 {strides = array<i32>} : memref<82x32xbf16, #tpu.memory_space<vmem>>, vector<9x32xbf16>,
    %cst_12 = arith.constant 0.000000e+00 : bf16
    %8 = vector.broadcast %cst_12 : bf16 to vector<9x32xbf16>
    %c73 = arith.constant 73 : index
    %c0_13 = arith.constant 0 : index
    %9 = vector.load %arg16[%c73, %c0_13] : memref<82x32xbf16, #tpu.memory_space<vmem>>, vector<9x32xbf16>
    tpu.vector_store %arg16[%c73, %c0_13], %8 {strides = array<i32>} : memref<82x32xbf16, #tpu.memory_space<vmem>>, vector<9x32xbf16>,
    %c0_14 = arith.constant 0 : index
    %c0_15 = arith.constant 0 : index
    %10 = vector.load %arg5[%c0_14, %c0_15] : memref<1x32xf32, #tpu.memory_space<vmem>>, vector<1x32xf32>
    %c0_16 = arith.constant 0 : index
    %c0_17 = arith.constant 0 : index
    %11 = vector.load %arg6[%c0_16, %c0_17] : memref<1x32xf32, #tpu.memory_space<vmem>>, vector<1x32xf32>
    %cst_18 = arith.constant dense<0.000000e+00> : vector<32xf32>
    %12 = vector.multi_reduction <add>, %1, %cst_18 [0] : vector<64x32xf32> to vector<32xf32>
    %13 = vector.shape_cast %12 : vector<32xf32> to vector<1x32xf32>
    %cst_19 = arith.constant dense<0.000000e+00> : vector<1x32xf32>
    %14 = tpu.matmul %13, %4, %cst_19 {dimension_numbers = #tpu.dot_dimension_numbers<[1], [0], [0], [1], [0, 0, 1, 1], [], []>} : vector<1x32xf32>, vector<32x32xf32>, vector<1x32xf32> -> vector<1x32xf32>
    %cst_20 = arith.constant 6.400000e+01 : f32
    %15 = vector.broadcast %cst_20 : f32 to vector<1x32xf32>
    %16 = arith.divf %14, %15 : vector<1x32xf32>
    %cst_21 = arith.constant dense<0.000000e+00> : vector<1x32xf32>
    %17 = tpu.matmul %16, %5, %cst_21 {dimension_numbers = #tpu.dot_dimension_numbers<[1], [0], [0], [1], [0, 0, 1, 1], [], []>} : vector<1x32xf32>, vector<32x32xf32>, vector<1x32xf32> -> vector<1x32xf32>
    %18 = vector.broadcast %17 : vector<1x32xf32> to vector<64x32xf32>
    %19 = arith.subf %1, %18 : vector<64x32xf32>
    %20 = arith.mulf %19, %19 : vector<64x32xf32>
    %cst_22 = arith.constant dense<0.000000e+00> : vector<32xf32>
    %21 = vector.multi_reduction <add>, %20, %cst_22 [0] : vector<64x32xf32> to vector<32xf32>
    %22 = vector.shape_cast %21 : vector<32xf32> to vector<1x32xf32>
    %cst_23 = arith.constant dense<0.000000e+00> : vector<1x32xf32>
    %23 = tpu.matmul %22, %4, %cst_23 {dimension_numbers = #tpu.dot_dimension_numbers<[1], [0], [0], [1], [0, 0, 1, 1], [], []>} : vector<1x32xf32>, vector<32x32xf32>, vector<1x32xf32> -> vector<1x32xf32>
    %cst_24 = arith.constant 6.400000e+01 : f32
    %24 = vector.broadcast %cst_24 : f32 to vector<1x32xf32>
    %25 = arith.divf %23, %24 : vector<1x32xf32>
    %cst_25 = arith.constant dense<0.000000e+00> : vector<1x32xf32>
    %26 = tpu.matmul %25, %5, %cst_25 {dimension_numbers = #tpu.dot_dimension_numbers<[1], [0], [0], [1], [0, 0, 1, 1], [], []>} : vector<1x32xf32>, vector<32x32xf32>, vector<1x32xf32> -> vector<1x32xf32>
    %cst_26 = arith.constant 0.000000e+00 : f32
    %27 = vector.broadcast %cst_26 : f32 to vector<1x32xf32>
    %28 = arith.maximumf %26, %27 : vector<1x32xf32>
    %cst_27 = arith.constant 9.99999974E-6 : f32
    %29 = vector.broadcast %cst_27 : f32 to vector<1x32xf32>
    %30 = arith.addf %28, %29 : vector<1x32xf32>
    %31 = math.rsqrt %30 : vector<1x32xf32>
    %32 = arith.mulf %31, %10 : vector<1x32xf32>
    %33 = vector.broadcast %32 : vector<1x32xf32> to vector<64x32xf32>
    %34 = arith.mulf %19, %33 : vector<64x32xf32>
    %35 = vector.broadcast %11 : vector<1x32xf32> to vector<64x32xf32>
    %36 = arith.addf %34, %35 : vector<64x32xf32>
    %37 = arith.negf %36 : vector<64x32xf32>
    %38 = math.exp %37 : vector<64x32xf32>
    %cst_28 = arith.constant 1.000000e+00 : f32
    %39 = vector.broadcast %cst_28 : f32 to vector<64x32xf32>
    %40 = arith.addf %39, %38 : vector<64x32xf32>
    %41 = arith.divf %39, %40 : vector<64x32xf32>
    %42 = arith.mulf %36, %41 : vector<64x32xf32>
    %c0_29 = arith.constant 0 : index
    %c0_30 = arith.constant 0 : index
    %43 = vector.load %arg10[%c0_29, %c0_30] : memref<1x32xf32, #tpu.memory_space<vmem>>, vector<1x32xf32>
    %44 = arith.truncf %42 : vector<64x32xf32> to vector<64x32xbf16>
    %c9 = arith.constant 9 : index
    %c0_31 = arith.constant 0 : index
    %45 = vector.load %arg16[%c9, %c0_31] : memref<82x32xbf16, #tpu.memory_space<vmem>>, vector<64x32xbf16>
    tpu.vector_store %arg16[%c9, %c0_31], %44 {strides = array<i32>} : memref<82x32xbf16, #tpu.memory_space<vmem>>, vector<64x32xbf16>,
    %cst_32 = arith.constant 0.000000e+00 : f32
    %46 = vector.broadcast %cst_32 : f32 to vector<64x32xf32>
    %c0_33 = arith.constant 0 : index
    %c0_34 = arith.constant 0 : index
    %47 = vector.load %arg16[%c0_33, %c0_34] : memref<82x32xbf16, #tpu.memory_space<vmem>>, vector<64x32xbf16>
    %48 = vector.broadcast %2 : vector<64x1xbf16> to vector<64x32xbf16>
    %49 = arith.mulf %47, %48 : vector<64x32xbf16>
    %c0_35 = arith.constant 0 : index
    %c0_36 = arith.constant 0 : index
    %50 = vector.load %arg9[%c0_35, %c0_36] : memref<288x32xbf16, #tpu.memory_space<vmem>>, vector<32x32xbf16>
    %cst_37 = arith.constant dense<0.000000e+00> : vector<64x32xf32>
    %51 = tpu.matmul %49, %50, %cst_37 {dimension_numbers = #tpu.dot_dimension_numbers<[1], [0], [0], [1], [0, 0, 1, 1], [], []>} : vector<64x32xbf16>, vector<32x32xbf16>, vector<64x32xf32> -> vector<64x32xf32>
    %52 = arith.addf %46, %51 : vector<64x32xf32>
    %c1 = arith.constant 1 : index
    %c0_38 = arith.constant 0 : index
    %53 = vector.load %arg16[%c1, %c0_38] : memref<82x32xbf16, #tpu.memory_space<vmem>>, vector<64x32xbf16>
    %c32 = arith.constant 32 : index
    %c0_39 = arith.constant 0 : index
    %54 = vector.load %arg9[%c32, %c0_39] : memref<288x32xbf16, #tpu.memory_space<vmem>>, vector<32x32xbf16>
    %cst_40 = arith.constant dense<0.000000e+00> : vector<64x32xf32>
    %55 = tpu.matmul %53, %54, %cst_40 {dimension_numbers = #tpu.dot_dimension_numbers<[1], [0], [0], [1], [0, 0, 1, 1], [], []>} : vector<64x32xbf16>, vector<32x32xbf16>, vector<64x32xf32> -> vector<64x32xf32>
    %56 = arith.addf %52, %55 : vector<64x32xf32>
    %c2 = arith.constant 2 : index
    %c0_41 = arith.constant 0 : index
    %57 = vector.load %arg16[%c2, %c0_41] : memref<82x32xbf16, #tpu.memory_space<vmem>>, vector<64x32xbf16>
    %58 = vector.broadcast %3 : vector<64x1xbf16> to vector<64x32xbf16>
    %59 = arith.mulf %57, %58 : vector<64x32xbf16>
    %c64 = arith.constant 64 : index
    %c0_42 = arith.constant 0 : index
    %60 = vector.load %arg9[%c64, %c0_42] : memref<288x32xbf16, #tpu.memory_space<vmem>>, vector<32x32xbf16>
    %cst_43 = arith.constant dense<0.000000e+00> : vector<64x32xf32>
    %61 = tpu.matmul %59, %60, %cst_43 {dimension_numbers = #tpu.dot_dimension_numbers<[1], [0], [0], [1], [0, 0, 1, 1], [], []>} : vector<64x32xbf16>, vector<32x32xbf16>, vector<64x32xf32> -> vector<64x32xf32>
    %62 = arith.addf %56, %61 : vector<64x32xf32>
    %c8 = arith.constant 8 : index
    %c0_44 = arith.constant 0 : index
    %63 = vector.load %arg16[%c8, %c0_44] : memref<82x32xbf16, #tpu.memory_space<vmem>>, vector<64x32xbf16>
    %64 = vector.broadcast %2 : vector<64x1xbf16> to vector<64x32xbf16>
    %65 = arith.mulf %63, %64 : vector<64x32xbf16>
    %c96 = arith.constant 96 : index
    %c0_45 = arith.constant 0 : index
    %66 = vector.load %arg9[%c96, %c0_45] : memref<288x32xbf16, #tpu.memory_space<vmem>>, vector<32x32xbf16>
    %cst_46 = arith.constant dense<0.000000e+00> : vector<64x32xf32>
    %67 = tpu.matmul %65, %66, %cst_46 {dimension_numbers = #tpu.dot_dimension_numbers<[1], [0], [0], [1], [0, 0, 1, 1], [], []>} : vector<64x32xbf16>, vector<32x32xbf16>, vector<64x32xf32> -> vector<64x32xf32>
    %68 = arith.addf %62, %67 : vector<64x32xf32>
    %c9_47 = arith.constant 9 : index
    %c0_48 = arith.constant 0 : index
    %69 = vector.load %arg16[%c9_47, %c0_48] : memref<82x32xbf16, #tpu.memory_space<vmem>>, vector<64x32xbf16>
    %c128 = arith.constant 128 : index
    %c0_49 = arith.constant 0 : index
    %70 = vector.load %arg9[%c128, %c0_49] : memref<288x32xbf16, #tpu.memory_space<vmem>>, vector<32x32xbf16>
    %cst_50 = arith.constant dense<0.000000e+00> : vector<64x32xf32>
    %71 = tpu.matmul %69, %70, %cst_50 {dimension_numbers = #tpu.dot_dimension_numbers<[1], [0], [0], [1], [0, 0, 1, 1], [], []>} : vector<64x32xbf16>, vector<32x32xbf16>, vector<64x32xf32> -> vector<64x32xf32>
    %72 = arith.addf %68, %71 : vector<64x32xf32>
    %c10 = arith.constant 10 : index
    %c0_51 = arith.constant 0 : index
    %73 = vector.load %arg16[%c10, %c0_51] : memref<82x32xbf16, #tpu.memory_space<vmem>>, vector<64x32xbf16>
    %74 = vector.broadcast %3 : vector<64x1xbf16> to vector<64x32xbf16>
    %75 = arith.mulf %73, %74 : vector<64x32xbf16>
    %c160 = arith.constant 160 : index
    %c0_52 = arith.constant 0 : index
    %76 = vector.load %arg9[%c160, %c0_52] : memref<288x32xbf16, #tpu.memory_space<vmem>>, vector<32x32xbf16>
    %cst_53 = arith.constant dense<0.000000e+00> : vector<64x32xf32>
    %77 = tpu.matmul %75, %76, %cst_53 {dimension_numbers = #tpu.dot_dimension_numbers<[1], [0], [0], [1], [0, 0, 1, 1], [], []>} : vector<64x32xbf16>, vector<32x32xbf16>, vector<64x32xf32> -> vector<64x32xf32>
    %78 = arith.addf %72, %77 : vector<64x32xf32>
    %c16 = arith.constant 16 : index
    %c0_54 = arith.constant 0 : index
    %79 = vector.load %arg16[%c16, %c0_54] : memref<82x32xbf16, #tpu.memory_space<vmem>>, vector<64x32xbf16>
    %80 = vector.broadcast %2 : vector<64x1xbf16> to vector<64x32xbf16>
    %81 = arith.mulf %79, %80 : vector<64x32xbf16>
    %c192 = arith.constant 192 : index
    %c0_55 = arith.constant 0 : index
    %82 = vector.load %arg9[%c192, %c0_55] : memref<288x32xbf16, #tpu.memory_space<vmem>>, vector<32x32xbf16>
    %cst_56 = arith.constant dense<0.000000e+00> : vector<64x32xf32>
    %83 = tpu.matmul %81, %82, %cst_56 {dimension_numbers = #tpu.dot_dimension_numbers<[1], [0], [0], [1], [0, 0, 1, 1], [], []>} : vector<64x32xbf16>, vector<32x32xbf16>, vector<64x32xf32> -> vector<64x32xf32>
    %84 = arith.addf %78, %83 : vector<64x32xf32>
    %c17 = arith.constant 17 : index
    %c0_57 = arith.constant 0 : index
    %85 = vector.load %arg16[%c17, %c0_57] : memref<82x32xbf16, #tpu.memory_space<vmem>>, vector<64x32xbf16>
    %c224 = arith.constant 224 : index
    %c0_58 = arith.constant 0 : index
    %86 = vector.load %arg9[%c224, %c0_58] : memref<288x32xbf16, #tpu.memory_space<vmem>>, vector<32x32xbf16>
    %cst_59 = arith.constant dense<0.000000e+00> : vector<64x32xf32>
    %87 = tpu.matmul %85, %86, %cst_59 {dimension_numbers = #tpu.dot_dimension_numbers<[1], [0], [0], [1], [0, 0, 1, 1], [], []>} : vector<64x32xbf16>, vector<32x32xbf16>, vector<64x32xf32> -> vector<64x32xf32>
    %88 = arith.addf %84, %87 : vector<64x32xf32>
    %c18 = arith.constant 18 : index
    %c0_60 = arith.constant 0 : index
    %89 = vector.load %arg16[%c18, %c0_60] : memref<82x32xbf16, #tpu.memory_space<vmem>>, vector<64x32xbf16>
    %90 = vector.broadcast %3 : vector<64x1xbf16> to vector<64x32xbf16>
    %91 = arith.mulf %89, %90 : vector<64x32xbf16>
    %c256 = arith.constant 256 : index
    %c0_61 = arith.constant 0 : index
    %92 = vector.load %arg9[%c256, %c0_61] : memref<288x32xbf16, #tpu.memory_space<vmem>>, vector<32x32xbf16>
    %cst_62 = arith.constant dense<0.000000e+00> : vector<64x32xf32>
    %93 = tpu.matmul %91, %92, %cst_62 {dimension_numbers = #tpu.dot_dimension_numbers<[1], [0], [0], [1], [0, 0, 1, 1], [], []>} : vector<64x32xbf16>, vector<32x32xbf16>, vector<64x32xf32> -> vector<64x32xf32>
    %94 = arith.addf %88, %93 : vector<64x32xf32>
    %95 = vector.broadcast %43 : vector<1x32xf32> to vector<64x32xf32>
    %96 = arith.addf %94, %95 : vector<64x32xf32>
    %c0_63 = arith.constant 0 : index
    %c0_64 = arith.constant 0 : index
    %c0_65 = arith.constant 0 : index
    %97 = vector.load %arg2[%c0_63, %c0_64, %c0_65] : memref<1x1x32xf32, #tpu.memory_space<vmem>>, vector<1x1x32xf32>
    %98 = vector.shape_cast %97 : vector<1x1x32xf32> to vector<1x32xf32>
    %99 = vector.broadcast %98 : vector<1x32xf32> to vector<64x32xf32>
    %100 = arith.addf %96, %99 : vector<64x32xf32>
    %c0_66 = arith.constant 0 : index
    %c0_67 = arith.constant 0 : index
    %101 = vector.load %arg11[%c0_66, %c0_67] : memref<1x32xf32, #tpu.memory_space<vmem>>, vector<1x32xf32>
    %c0_68 = arith.constant 0 : index
    %c0_69 = arith.constant 0 : index
    %102 = vector.load %arg12[%c0_68, %c0_69] : memref<1x32xf32, #tpu.memory_space<vmem>>, vector<1x32xf32>
    %cst_70 = arith.constant dense<0.000000e+00> : vector<32xf32>
    %103 = vector.multi_reduction <add>, %100, %cst_70 [0] : vector<64x32xf32> to vector<32xf32>
    %104 = vector.shape_cast %103 : vector<32xf32> to vector<1x32xf32>
    %cst_71 = arith.constant dense<0.000000e+00> : vector<1x32xf32>
    %105 = tpu.matmul %104, %4, %cst_71 {dimension_numbers = #tpu.dot_dimension_numbers<[1], [0], [0], [1], [0, 0, 1, 1], [], []>} : vector<1x32xf32>, vector<32x32xf32>, vector<1x32xf32> -> vector<1x32xf32>
    %cst_72 = arith.constant 6.400000e+01 : f32
    %106 = vector.broadcast %cst_72 : f32 to vector<1x32xf32>
    %107 = arith.divf %105, %106 : vector<1x32xf32>
    %cst_73 = arith.constant dense<0.000000e+00> : vector<1x32xf32>
    %108 = tpu.matmul %107, %5, %cst_73 {dimension_numbers = #tpu.dot_dimension_numbers<[1], [0], [0], [1], [0, 0, 1, 1], [], []>} : vector<1x32xf32>, vector<32x32xf32>, vector<1x32xf32> -> vector<1x32xf32>
    %109 = vector.broadcast %108 : vector<1x32xf32> to vector<64x32xf32>
    %110 = arith.subf %100, %109 : vector<64x32xf32>
    %111 = arith.mulf %110, %110 : vector<64x32xf32>
    %cst_74 = arith.constant dense<0.000000e+00> : vector<32xf32>
    %112 = vector.multi_reduction <add>, %111, %cst_74 [0] : vector<64x32xf32> to vector<32xf32>
    %113 = vector.shape_cast %112 : vector<32xf32> to vector<1x32xf32>
    %cst_75 = arith.constant dense<0.000000e+00> : vector<1x32xf32>
    %114 = tpu.matmul %113, %4, %cst_75 {dimension_numbers = #tpu.dot_dimension_numbers<[1], [0], [0], [1], [0, 0, 1, 1], [], []>} : vector<1x32xf32>, vector<32x32xf32>, vector<1x32xf32> -> vector<1x32xf32>
    %cst_76 = arith.constant 6.400000e+01 : f32
    %115 = vector.broadcast %cst_76 : f32 to vector<1x32xf32>
    %116 = arith.divf %114, %115 : vector<1x32xf32>
    %cst_77 = arith.constant dense<0.000000e+00> : vector<1x32xf32>
    %117 = tpu.matmul %116, %5, %cst_77 {dimension_numbers = #tpu.dot_dimension_numbers<[1], [0], [0], [1], [0, 0, 1, 1], [], []>} : vector<1x32xf32>, vector<32x32xf32>, vector<1x32xf32> -> vector<1x32xf32>
    %cst_78 = arith.constant 0.000000e+00 : f32
    %118 = vector.broadcast %cst_78 : f32 to vector<1x32xf32>
    %119 = arith.maximumf %117, %118 : vector<1x32xf32>
    %cst_79 = arith.constant 9.99999974E-6 : f32
    %120 = vector.broadcast %cst_79 : f32 to vector<1x32xf32>
    %121 = arith.addf %119, %120 : vector<1x32xf32>
    %122 = math.rsqrt %121 : vector<1x32xf32>
    %123 = arith.mulf %122, %101 : vector<1x32xf32>
    %124 = vector.broadcast %123 : vector<1x32xf32> to vector<64x32xf32>
    %125 = arith.mulf %110, %124 : vector<64x32xf32>
    %126 = vector.broadcast %102 : vector<1x32xf32> to vector<64x32xf32>
    %127 = arith.addf %125, %126 : vector<64x32xf32>
    %128 = arith.negf %127 : vector<64x32xf32>
    %129 = math.exp %128 : vector<64x32xf32>
    %cst_80 = arith.constant 1.000000e+00 : f32
    %130 = vector.broadcast %cst_80 : f32 to vector<64x32xf32>
    %131 = arith.addf %130, %129 : vector<64x32xf32>
    %132 = arith.divf %130, %131 : vector<64x32xf32>
    %133 = arith.mulf %127, %132 : vector<64x32xf32>
    %c0_81 = arith.constant 0 : index
    %c0_82 = arith.constant 0 : index
    %134 = vector.load %arg14[%c0_81, %c0_82] : memref<1x32xf32, #tpu.memory_space<vmem>>, vector<1x32xf32>
    %135 = arith.truncf %133 : vector<64x32xf32> to vector<64x32xbf16>
    %c9_83 = arith.constant 9 : index
    %c0_84 = arith.constant 0 : index
    %136 = vector.load %arg16[%c9_83, %c0_84] : memref<82x32xbf16, #tpu.memory_space<vmem>>, vector<64x32xbf16>
    tpu.vector_store %arg16[%c9_83, %c0_84], %135 {strides = array<i32>} : memref<82x32xbf16, #tpu.memory_space<vmem>>, vector<64x32xbf16>,
    %cst_85 = arith.constant 0.000000e+00 : f32
    %137 = vector.broadcast %cst_85 : f32 to vector<64x32xf32>
    %c0_86 = arith.constant 0 : index
    %c0_87 = arith.constant 0 : index
    %138 = vector.load %arg16[%c0_86, %c0_87] : memref<82x32xbf16, #tpu.memory_space<vmem>>, vector<64x32xbf16>
    %139 = vector.broadcast %2 : vector<64x1xbf16> to vector<64x32xbf16>
    %140 = arith.mulf %138, %139 : vector<64x32xbf16>
    %c0_88 = arith.constant 0 : index
    %c0_89 = arith.constant 0 : index
    %141 = vector.load %arg13[%c0_88, %c0_89] : memref<288x32xbf16, #tpu.memory_space<vmem>>, vector<32x32xbf16>
    %cst_90 = arith.constant dense<0.000000e+00> : vector<64x32xf32>
    %142 = tpu.matmul %140, %141, %cst_90 {dimension_numbers = #tpu.dot_dimension_numbers<[1], [0], [0], [1], [0, 0, 1, 1], [], []>} : vector<64x32xbf16>, vector<32x32xbf16>, vector<64x32xf32> -> vector<64x32xf32>
    %143 = arith.addf %137, %142 : vector<64x32xf32>
    %c1_91 = arith.constant 1 : index
    %c0_92 = arith.constant 0 : index
    %144 = vector.load %arg16[%c1_91, %c0_92] : memref<82x32xbf16, #tpu.memory_space<vmem>>, vector<64x32xbf16>
    %c32_93 = arith.constant 32 : index
    %c0_94 = arith.constant 0 : index
    %145 = vector.load %arg13[%c32_93, %c0_94] : memref<288x32xbf16, #tpu.memory_space<vmem>>, vector<32x32xbf16>
    %cst_95 = arith.constant dense<0.000000e+00> : vector<64x32xf32>
    %146 = tpu.matmul %144, %145, %cst_95 {dimension_numbers = #tpu.dot_dimension_numbers<[1], [0], [0], [1], [0, 0, 1, 1], [], []>} : vector<64x32xbf16>, vector<32x32xbf16>, vector<64x32xf32> -> vector<64x32xf32>
    %147 = arith.addf %143, %146 : vector<64x32xf32>
    %c2_96 = arith.constant 2 : index
    %c0_97 = arith.constant 0 : index
    %148 = vector.load %arg16[%c2_96, %c0_97] : memref<82x32xbf16, #tpu.memory_space<vmem>>, vector<64x32xbf16>
    %149 = vector.broadcast %3 : vector<64x1xbf16> to vector<64x32xbf16>
    %150 = arith.mulf %148, %149 : vector<64x32xbf16>
    %c64_98 = arith.constant 64 : index
    %c0_99 = arith.constant 0 : index
    %151 = vector.load %arg13[%c64_98, %c0_99] : memref<288x32xbf16, #tpu.memory_space<vmem>>, vector<32x32xbf16>
    %cst_100 = arith.constant dense<0.000000e+00> : vector<64x32xf32>
    %152 = tpu.matmul %150, %151, %cst_100 {dimension_numbers = #tpu.dot_dimension_numbers<[1], [0], [0], [1], [0, 0, 1, 1], [], []>} : vector<64x32xbf16>, vector<32x32xbf16>, vector<64x32xf32> -> vector<64x32xf32>
    %153 = arith.addf %147, %152 : vector<64x32xf32>
    %c8_101 = arith.constant 8 : index
    %c0_102 = arith.constant 0 : index
    %154 = vector.load %arg16[%c8_101, %c0_102] : memref<82x32xbf16, #tpu.memory_space<vmem>>, vector<64x32xbf16>
    %155 = vector.broadcast %2 : vector<64x1xbf16> to vector<64x32xbf16>
    %156 = arith.mulf %154, %155 : vector<64x32xbf16>
    %c96_103 = arith.constant 96 : index
    %c0_104 = arith.constant 0 : index
    %157 = vector.load %arg13[%c96_103, %c0_104] : memref<288x32xbf16, #tpu.memory_space<vmem>>, vector<32x32xbf16>
    %cst_105 = arith.constant dense<0.000000e+00> : vector<64x32xf32>
    %158 = tpu.matmul %156, %157, %cst_105 {dimension_numbers = #tpu.dot_dimension_numbers<[1], [0], [0], [1], [0, 0, 1, 1], [], []>} : vector<64x32xbf16>, vector<32x32xbf16>, vector<64x32xf32> -> vector<64x32xf32>
    %159 = arith.addf %153, %158 : vector<64x32xf32>
    %c9_106 = arith.constant 9 : index
    %c0_107 = arith.constant 0 : index
    %160 = vector.load %arg16[%c9_106, %c0_107] : memref<82x32xbf16, #tpu.memory_space<vmem>>, vector<64x32xbf16>
    %c128_108 = arith.constant 128 : index
    %c0_109 = arith.constant 0 : index
    %161 = vector.load %arg13[%c128_108, %c0_109] : memref<288x32xbf16, #tpu.memory_space<vmem>>, vector<32x32xbf16>
    %cst_110 = arith.constant dense<0.000000e+00> : vector<64x32xf32>
    %162 = tpu.matmul %160, %161, %cst_110 {dimension_numbers = #tpu.dot_dimension_numbers<[1], [0], [0], [1], [0, 0, 1, 1], [], []>} : vector<64x32xbf16>, vector<32x32xbf16>, vector<64x32xf32> -> vector<64x32xf32>
    %163 = arith.addf %159, %162 : vector<64x32xf32>
    %c10_111 = arith.constant 10 : index
    %c0_112 = arith.constant 0 : index
    %164 = vector.load %arg16[%c10_111, %c0_112] : memref<82x32xbf16, #tpu.memory_space<vmem>>, vector<64x32xbf16>
    %165 = vector.broadcast %3 : vector<64x1xbf16> to vector<64x32xbf16>
    %166 = arith.mulf %164, %165 : vector<64x32xbf16>
    %c160_113 = arith.constant 160 : index
    %c0_114 = arith.constant 0 : index
    %167 = vector.load %arg13[%c160_113, %c0_114] : memref<288x32xbf16, #tpu.memory_space<vmem>>, vector<32x32xbf16>
    %cst_115 = arith.constant dense<0.000000e+00> : vector<64x32xf32>
    %168 = tpu.matmul %166, %167, %cst_115 {dimension_numbers = #tpu.dot_dimension_numbers<[1], [0], [0], [1], [0, 0, 1, 1], [], []>} : vector<64x32xbf16>, vector<32x32xbf16>, vector<64x32xf32> -> vector<64x32xf32>
    %169 = arith.addf %163, %168 : vector<64x32xf32>
    %c16_116 = arith.constant 16 : index
    %c0_117 = arith.constant 0 : index
    %170 = vector.load %arg16[%c16_116, %c0_117] : memref<82x32xbf16, #tpu.memory_space<vmem>>, vector<64x32xbf16>
    %171 = vector.broadcast %2 : vector<64x1xbf16> to vector<64x32xbf16>
    %172 = arith.mulf %170, %171 : vector<64x32xbf16>
    %c192_118 = arith.constant 192 : index
    %c0_119 = arith.constant 0 : index
    %173 = vector.load %arg13[%c192_118, %c0_119] : memref<288x32xbf16, #tpu.memory_space<vmem>>, vector<32x32xbf16>
    %cst_120 = arith.constant dense<0.000000e+00> : vector<64x32xf32>
    %174 = tpu.matmul %172, %173, %cst_120 {dimension_numbers = #tpu.dot_dimension_numbers<[1], [0], [0], [1], [0, 0, 1, 1], [], []>} : vector<64x32xbf16>, vector<32x32xbf16>, vector<64x32xf32> -> vector<64x32xf32>
    %175 = arith.addf %169, %174 : vector<64x32xf32>
    %c17_121 = arith.constant 17 : index
    %c0_122 = arith.constant 0 : index
    %176 = vector.load %arg16[%c17_121, %c0_122] : memref<82x32xbf16, #tpu.memory_space<vmem>>, vector<64x32xbf16>
    %c224_123 = arith.constant 224 : index
    %c0_124 = arith.constant 0 : index
    %177 = vector.load %arg13[%c224_123, %c0_124] : memref<288x32xbf16, #tpu.memory_space<vmem>>, vector<32x32xbf16>
    %cst_125 = arith.constant dense<0.000000e+00> : vector<64x32xf32>
    %178 = tpu.matmul %176, %177, %cst_125 {dimension_numbers = #tpu.dot_dimension_numbers<[1], [0], [0], [1], [0, 0, 1, 1], [], []>} : vector<64x32xbf16>, vector<32x32xbf16>, vector<64x32xf32> -> vector<64x32xf32>
    %179 = arith.addf %175, %178 : vector<64x32xf32>
    %c18_126 = arith.constant 18 : index
    %c0_127 = arith.constant 0 : index
    %180 = vector.load %arg16[%c18_126, %c0_127] : memref<82x32xbf16, #tpu.memory_space<vmem>>, vector<64x32xbf16>
    %181 = vector.broadcast %3 : vector<64x1xbf16> to vector<64x32xbf16>
    %182 = arith.mulf %180, %181 : vector<64x32xbf16>
    %c256_128 = arith.constant 256 : index
    %c0_129 = arith.constant 0 : index
    %183 = vector.load %arg13[%c256_128, %c0_129] : memref<288x32xbf16, #tpu.memory_space<vmem>>, vector<32x32xbf16>
    %cst_130 = arith.constant dense<0.000000e+00> : vector<64x32xf32>
    %184 = tpu.matmul %182, %183, %cst_130 {dimension_numbers = #tpu.dot_dimension_numbers<[1], [0], [0], [1], [0, 0, 1, 1], [], []>} : vector<64x32xbf16>, vector<32x32xbf16>, vector<64x32xf32> -> vector<64x32xf32>
    %185 = arith.addf %179, %184 : vector<64x32xf32>
    %186 = vector.broadcast %134 : vector<1x32xf32> to vector<64x32xf32>
    %187 = arith.addf %185, %186 : vector<64x32xf32>
    %188 = arith.addf %1, %187 : vector<64x32xf32>
    %c0_131 = arith.constant 0 : index
    %c0_132 = arith.constant 0 : index
    %c0_133 = arith.constant 0 : index
    %189 = vector.load %arg15[%c0_131, %c0_132, %c0_133] : memref<1x64x32xf32, #tpu.memory_space<vmem>>, vector<1x64x32xf32>
    %190 = vector.shape_cast %189 : vector<1x64x32xf32> to vector<64x32xf32>
    %191 = vector.shape_cast %188 : vector<64x32xf32> to vector<1x64x32xf32>
    tpu.vector_store %arg15[%c0_131, %c0_132, %c0_133], %191 {strides = array<i32>} : memref<1x64x32xf32, #tpu.memory_space<vmem>>, vector<1x64x32xf32>,
    return
  }
  func.func @transform_0(%arg0: i32) -> (i32, i32, i32) {
    %c0_i32 = arith.constant 0 : i32
    %c0_i32_0 = arith.constant 0 : i32
    %c0_i32_1 = arith.constant 0 : i32
    return %arg0, %c0_i32, %c0_i32_0 : i32, i32, i32
  }
  func.func @transform_1(%arg0: i32) -> (i32, i32, i32) {
    %c0_i32 = arith.constant 0 : i32
    %c0_i32_0 = arith.constant 0 : i32
    %c0_i32_1 = arith.constant 0 : i32
    return %arg0, %c0_i32, %c0_i32_0 : i32, i32, i32
  }
  func.func @transform_2(%arg0: i32) -> (i32, i32) {
    %c0_i32 = arith.constant 0 : i32
    %c0_i32_0 = arith.constant 0 : i32
    %c0_i32_1 = arith.constant 0 : i32
    return %c0_i32, %c0_i32_0 : i32, i32
  }
  func.func @transform_3(%arg0: i32) -> (i32, i32) {
    %c0_i32 = arith.constant 0 : i32
    %c0_i32_0 = arith.constant 0 : i32
    %c0_i32_1 = arith.constant 0 : i32
    return %c0_i32, %c0_i32_0 : i32, i32
  }
  func.func @transform_4(%arg0: i32) -> (i32, i32) {
    %c0_i32 = arith.constant 0 : i32
    %c0_i32_0 = arith.constant 0 : i32
    %c0_i32_1 = arith.constant 0 : i32
    return %c0_i32, %c0_i32_0 : i32, i32
  }
  func.func @transform_5(%arg0: i32) -> (i32, i32) {
    %c0_i32 = arith.constant 0 : i32
    %c0_i32_0 = arith.constant 0 : i32
    %c0_i32_1 = arith.constant 0 : i32
    return %c0_i32, %c0_i32_0 : i32, i32
  }
  func.func @transform_6(%arg0: i32) -> (i32, i32) {
    %c0_i32 = arith.constant 0 : i32
    %c0_i32_0 = arith.constant 0 : i32
    %c0_i32_1 = arith.constant 0 : i32
    return %c0_i32, %c0_i32_0 : i32, i32
  }
  func.func @transform_7(%arg0: i32) -> (i32, i32) {
    %c0_i32 = arith.constant 0 : i32
    %c0_i32_0 = arith.constant 0 : i32
    %c0_i32_1 = arith.constant 0 : i32
    return %c0_i32, %c0_i32_0 : i32, i32
  }
  func.func @transform_8(%arg0: i32) -> (i32, i32) {
    %c0_i32 = arith.constant 0 : i32
    %c0_i32_0 = arith.constant 0 : i32
    %c0_i32_1 = arith.constant 0 : i32
    return %c0_i32, %c0_i32_0 : i32, i32
  }
  func.func @transform_9(%arg0: i32) -> (i32, i32) {
    %c0_i32 = arith.constant 0 : i32
    %c0_i32_0 = arith.constant 0 : i32
    %c0_i32_1 = arith.constant 0 : i32
    return %c0_i32, %c0_i32_0 : i32, i32
  }
  func.func @transform_10(%arg0: i32) -> (i32, i32) {
    %c0_i32 = arith.constant 0 : i32
    %c0_i32_0 = arith.constant 0 : i32
    %c0_i32_1 = arith.constant 0 : i32
    return %c0_i32, %c0_i32_0 : i32, i32
  }
  func.func @transform_11(%arg0: i32) -> (i32, i32) {
    %c0_i32 = arith.constant 0 : i32
    %c0_i32_0 = arith.constant 0 : i32
    %c0_i32_1 = arith.constant 0 : i32
    return %c0_i32, %c0_i32_0 : i32, i32
  }
  func.func @transform_12(%arg0: i32) -> (i32, i32) {
    %c0_i32 = arith.constant 0 : i32
    %c0_i32_0 = arith.constant 0 : i32
    %c0_i32_1 = arith.constant 0 : i32
    return %c0_i32, %c0_i32_0 : i32, i32
  }
  func.func @transform_13(%arg0: i32) -> (i32, i32) {
    %c0_i32 = arith.constant 0 : i32
    %c0_i32_0 = arith.constant 0 : i32
    %c0_i32_1 = arith.constant 0 : i32
    return %c0_i32, %c0_i32_0 : i32, i32
  }
  func.func @transform_14(%arg0: i32) -> (i32, i32, i32) {
    %c0_i32 = arith.constant 0 : i32
    %c0_i32_0 = arith.constant 0 : i32
    %c0_i32_1 = arith.constant 0 : i32
    return %arg0, %c0_i32, %c0_i32_0 : i32, i32, i32
  }
}

</mosaic_0001>

<llo_original>
// kernel: tpu_custom_call.1
$region0: #{tpu_custom_call.1}
  #allocation0 [shape = 'u32[]', space=smem, size = 0x4, offset = 0x4, fixed_abs, tag = 'smem constant byte address 0x4 - core index']
  #allocation1 [shape = 'u32[144,128]{1,0:T(1,128)}', space=vmem, size = 0x12000, scoped, tag = 'internal scratch']
  #allocation2 [shape = 'bf16[82,32]{1,0:T(8,128)(2,1)}', space=vmem, size = 0x5800, scoped, tag = 'scratch operand']
  %s0 = inlined_call_operand.vmem [shape: f32[2,64,32], index: 0, kind: input, shape index: {}]
  %s1 = inlined_call_operand.vmem [shape: f32[2,1,32], index: 1, kind: input, shape index: {}]
  %s2 = inlined_call_operand.vmem [shape: bf16[64,1], index: 2, kind: input, shape index: {}]
  %s3 = inlined_call_operand.vmem [shape: bf16[64,1], index: 3, kind: input, shape index: {}]
  %s4 = inlined_call_operand.vmem [shape: f32[1,32], index: 4, kind: input, shape index: {}]
  %s5 = inlined_call_operand.vmem [shape: f32[1,32], index: 5, kind: input, shape index: {}]
  %s6 = inlined_call_operand.vmem [shape: f32[32,32], index: 6, kind: input, shape index: {}]
  %s7 = inlined_call_operand.vmem [shape: f32[32,32], index: 7, kind: input, shape index: {}]
  %s8 = inlined_call_operand.vmem [shape: bf16[288,32], index: 8, kind: input, shape index: {}]
  %s9 = inlined_call_operand.vmem [shape: f32[1,32], index: 9, kind: input, shape index: {}]
  %s10 = inlined_call_operand.vmem [shape: f32[1,32], index: 10, kind: input, shape index: {}]
  %s11 = inlined_call_operand.vmem [shape: f32[1,32], index: 11, kind: input, shape index: {}]
  %s12 = inlined_call_operand.vmem [shape: bf16[288,32], index: 12, kind: input, shape index: {}]
  %s13 = inlined_call_operand.vmem [shape: f32[1,32], index: 13, kind: input, shape index: {}]
  %s14 = inlined_call_operand.vmem [shape: f32[2,64,32], index: 14, kind: output, shape index: {}]
  %s15 = sld [smem:[#allocation0]]
  $region89: #{tpu_custom_call.1} parent=0
    _
  %s17 = ssub.s32 1, %s15
  %s18 = scalar_select 0, %s17, %s15
  loop: start=0, step=1, limit=4
  $region2: #{tpu_custom_call.1} parent=0 // loop_pre_header
    _
  $region3: #{tpu_custom_call.1} parent=0 // loop_header
    %s20 = sphi 0, %s24
    %p21 = scmp.ge.s32.totalorder %s20, 4
    %s30 = sphi 0, %s32
    %s33 = sphi 0, %s30
    %s34 = sphi 0, %s33
    %s50 = sphi 0, %s34
    %s56 = sphi 0, %s58
    %s59 = sphi 0, %s56
    %s60 = sphi 0, %s59
    %s76 = sphi 0, %s60
    %s80 = sphi 0, %s80
    %s82 = sphi 0, %s80
    %s83 = sphi 0, %s82
    %s97 = sphi 0, %s83
    %s101 = sphi 0, %s101
    %s103 = sphi 0, %s101
    %s104 = sphi 0, %s103
    %s118 = sphi 0, %s104
    %s122 = sphi 0, %s122
    %s124 = sphi 0, %s122
    %s125 = sphi 0, %s124
    %s139 = sphi 0, %s125
    %s143 = sphi 0, %s143
    %s145 = sphi 0, %s143
    %s146 = sphi 0, %s145
    %s160 = sphi 0, %s146
    %s164 = sphi 0, %s164
    %s166 = sphi 0, %s164
    %s167 = sphi 0, %s166
    %s181 = sphi 0, %s167
    %s185 = sphi 0, %s185
    %s187 = sphi 0, %s185
    %s188 = sphi 0, %s187
    %s202 = sphi 0, %s188
    %s206 = sphi 0, %s206
    %s208 = sphi 0, %s206
    %s209 = sphi 0, %s208
    %s223 = sphi 0, %s209
    %s227 = sphi 0, %s227
    %s229 = sphi 0, %s227
    %s230 = sphi 0, %s229
    %s244 = sphi 0, %s230
    %s248 = sphi 0, %s248
    %s250 = sphi 0, %s248
    %s251 = sphi 0, %s250
    %s265 = sphi 0, %s251
    %s269 = sphi 0, %s269
    %s271 = sphi 0, %s269
    %s272 = sphi 0, %s271
    %s286 = sphi 0, %s272
    %s290 = sphi 0, %s290
    %s292 = sphi 0, %s290
    %s293 = sphi 0, %s292
    %s307 = sphi 0, %s293
    %s311 = sphi 0, %s311
    %s313 = sphi 0, %s311
    %s314 = sphi 0, %s313
    %s328 = sphi 0, %s314
    %s334 = sphi 0, %s336
    %s337 = sphi 0, %s334
    %s338 = sphi 0, %s337
    %s354 = sphi 0, %s338
  $region4: #{tpu_custom_call.1} parent=0 // loop_header_branch
    %23 = sbr.rel (%p21) target = $region8
  $region5: #{tpu_custom_call.1} parent=0 // loop_body
    %s25 = ssub.s32 %s20, 1
    %s26 = ssub.s32 %s20, 2
    %s27 = sadd.s32 %s20, 1
    %s28 = ssub.s32 %s20, %s27
    %p29 = scmp.eq.s32.totalorder %s28, 0
    %s31 = sadd.s32 %s30, 1
    %s32 = scalar_select %p29, %s30, %s31
    %p35 = pneg %p29
    %p36 = scmp.eq.s32.totalorder %s20, 1
    %p37 = por %p35, %p36
    %p38 = scmp.ne.s32.totalorder %s30, %s33
    %p39 = scmp.eq.s32.totalorder %s20, 0
    %p40 = por %p38, %p39
    %p41 = scmp.ne.s32.totalorder %s30, %s33
    %p42 = scmp.eq.s32.totalorder %s25, 1
    %p43 = por %p41, %p42
    %p44 = scmp.ne.s32.totalorder %s33, %s34
    %p45 = scmp.eq.s32.totalorder %s25, 0
    %p46 = por %p44, %p45
    %p47 = scmp.ne.s32.totalorder %s33, %s34
    %p48 = scmp.eq.s32.totalorder %s26, 1
    %p49 = por %p47, %p48
    %p51 = scmp.ne.s32.totalorder %s34, %s50
    %p52 = scmp.eq.s32.totalorder %s26, 0
    %p53 = por %p51, %p52
    %s54 = ssub.s32 %s20, %s27
    %p55 = scmp.eq.s32.totalorder %s54, 0
    %s57 = sadd.s32 %s56, 1
    %s58 = scalar_select %p55, %s56, %s57
    %p61 = pneg %p55
    %p62 = scmp.eq.s32.totalorder %s20, 1
    %p63 = por %p61, %p62
    %p64 = scmp.ne.s32.totalorder %s56, %s59
    %p65 = scmp.eq.s32.totalorder %s20, 0
    %p66 = por %p64, %p65
    %p67 = scmp.ne.s32.totalorder %s56, %s59
    %p68 = scmp.eq.s32.totalorder %s25, 1
    %p69 = por %p67, %p68
    %p70 = scmp.ne.s32.totalorder %s59, %s60
    %p71 = scmp.eq.s32.totalorder %s25, 0
    %p72 = por %p70, %p71
    %p73 = scmp.ne.s32.totalorder %s59, %s60
    %p74 = scmp.eq.s32.totalorder %s26, 1
    %p75 = por %p73, %p74
    %p77 = scmp.ne.s32.totalorder %s60, %s76
    %p78 = scmp.eq.s32.totalorder %s26, 0
    %p79 = por %p77, %p78
    %s81 = sadd.s32 %s80, 1
    %p84 = scmp.eq.s32.totalorder %s20, 1
    %p85 = scmp.ne.s32.totalorder %s80, %s82
    %p86 = scmp.eq.s32.totalorder %s20, 0
    %p87 = por %p85, %p86
    %p88 = scmp.ne.s32.totalorder %s80, %s82
    %p89 = scmp.eq.s32.totalorder %s25, 1
    %p90 = por %p88, %p89
    %p91 = scmp.ne.s32.totalorder %s82, %s83
    %p92 = scmp.eq.s32.totalorder %s25, 0
    %p93 = por %p91, %p92
    %p94 = scmp.ne.s32.totalorder %s82, %s83
    %p95 = scmp.eq.s32.totalorder %s26, 1
    %p96 = por %p94, %p95
    %p98 = scmp.ne.s32.totalorder %s83, %s97
    %p99 = scmp.eq.s32.totalorder %s26, 0
    %p100 = por %p98, %p99
    %s102 = sadd.s32 %s101, 1
    %p105 = scmp.eq.s32.totalorder %s20, 1
    %p106 = scmp.ne.s32.totalorder %s101, %s103
    %p107 = scmp.eq.s32.totalorder %s20, 0
    %p108 = por %p106, %p107
    %p109 = scmp.ne.s32.totalorder %s101, %s103
    %p110 = scmp.eq.s32.totalorder %s25, 1
    %p111 = por %p109, %p110
    %p112 = scmp.ne.s32.totalorder %s103, %s104
    %p113 = scmp.eq.s32.totalorder %s25, 0
    %p114 = por %p112, %p113
    %p115 = scmp.ne.s32.totalorder %s103, %s104
    %p116 = scmp.eq.s32.totalorder %s26, 1
    %p117 = por %p115, %p116
    %p119 = scmp.ne.s32.totalorder %s104, %s118
    %p120 = scmp.eq.s32.totalorder %s26, 0
    %p121 = por %p119, %p120
    %s123 = sadd.s32 %s122, 1
    %p126 = scmp.eq.s32.totalorder %s20, 1
    %p127 = scmp.ne.s32.totalorder %s122, %s124
    %p128 = scmp.eq.s32.totalorder %s20, 0
    %p129 = por %p127, %p128
    %p130 = scmp.ne.s32.totalorder %s122, %s124
    %p131 = scmp.eq.s32.totalorder %s25, 1
    %p132 = por %p130, %p131
    %p133 = scmp.ne.s32.totalorder %s124, %s125
    %p134 = scmp.eq.s32.totalorder %s25, 0
    %p135 = por %p133, %p134
    %p136 = scmp.ne.s32.totalorder %s124, %s125
    %p137 = scmp.eq.s32.totalorder %s26, 1
    %p138 = por %p136, %p137
    %p140 = scmp.ne.s32.totalorder %s125, %s139
    %p141 = scmp.eq.s32.totalorder %s26, 0
    %p142 = por %p140, %p141
    %s144 = sadd.s32 %s143, 1
    %p147 = scmp.eq.s32.totalorder %s20, 1
    %p148 = scmp.ne.s32.totalorder %s143, %s145
    %p149 = scmp.eq.s32.totalorder %s20, 0
    %p150 = por %p148, %p149
    %p151 = scmp.ne.s32.totalorder %s143, %s145
    %p152 = scmp.eq.s32.totalorder %s25, 1
    %p153 = por %p151, %p152
    %p154 = scmp.ne.s32.totalorder %s145, %s146
    %p155 = scmp.eq.s32.totalorder %s25, 0
    %p156 = por %p154, %p155
    %p157 = scmp.ne.s32.totalorder %s145, %s146
    %p158 = scmp.eq.s32.totalorder %s26, 1
    %p159 = por %p157, %p158
    %p161 = scmp.ne.s32.totalorder %s146, %s160
    %p162 = scmp.eq.s32.totalorder %s26, 0
    %p163 = por %p161, %p162
    %s165 = sadd.s32 %s164, 1
    %p168 = scmp.eq.s32.totalorder %s20, 1
    %p169 = scmp.ne.s32.totalorder %s164, %s166
    %p170 = scmp.eq.s32.totalorder %s20, 0
    %p171 = por %p169, %p170
    %p172 = scmp.ne.s32.totalorder %s164, %s166
    %p173 = scmp.eq.s32.totalorder %s25, 1
    %p174 = por %p172, %p173
    %p175 = scmp.ne.s32.totalorder %s166, %s167
    %p176 = scmp.eq.s32.totalorder %s25, 0
    %p177 = por %p175, %p176
    %p178 = scmp.ne.s32.totalorder %s166, %s167
    %p179 = scmp.eq.s32.totalorder %s26, 1
    %p180 = por %p178, %p179
    %p182 = scmp.ne.s32.totalorder %s167, %s181
    %p183 = scmp.eq.s32.totalorder %s26, 0
    %p184 = por %p182, %p183
    %s186 = sadd.s32 %s185, 1
    %p189 = scmp.eq.s32.totalorder %s20, 1
    %p190 = scmp.ne.s32.totalorder %s185, %s187
    %p191 = scmp.eq.s32.totalorder %s20, 0
    %p192 = por %p190, %p191
    %p193 = scmp.ne.s32.totalorder %s185, %s187
    %p194 = scmp.eq.s32.totalorder %s25, 1
    %p195 = por %p193, %p194
    %p196 = scmp.ne.s32.totalorder %s187, %s188
    %p197 = scmp.eq.s32.totalorder %s25, 0
    %p198 = por %p196, %p197
    %p199 = scmp.ne.s32.totalorder %s187, %s188
    %p200 = scmp.eq.s32.totalorder %s26, 1
    %p201 = por %p199, %p200
    %p203 = scmp.ne.s32.totalorder %s188, %s202
    %p204 = scmp.eq.s32.totalorder %s26, 0
    %p205 = por %p203, %p204
    %s207 = sadd.s32 %s206, 1
    %p210 = scmp.eq.s32.totalorder %s20, 1
    %p211 = scmp.ne.s32.totalorder %s206, %s208
    %p212 = scmp.eq.s32.totalorder %s20, 0
    %p213 = por %p211, %p212
    %p214 = scmp.ne.s32.totalorder %s206, %s208
    %p215 = scmp.eq.s32.totalorder %s25, 1
    %p216 = por %p214, %p215
    %p217 = scmp.ne.s32.totalorder %s208, %s209
    %p218 = scmp.eq.s32.totalorder %s25, 0
    %p219 = por %p217, %p218
    %p220 = scmp.ne.s32.totalorder %s208, %s209
    %p221 = scmp.eq.s32.totalorder %s26, 1
    %p222 = por %p220, %p221
    %p224 = scmp.ne.s32.totalorder %s209, %s223
    %p225 = scmp.eq.s32.totalorder %s26, 0
    %p226 = por %p224, %p225
    %s228 = sadd.s32 %s227, 1
    %p231 = scmp.eq.s32.totalorder %s20, 1
    %p232 = scmp.ne.s32.totalorder %s227, %s229
    %p233 = scmp.eq.s32.totalorder %s20, 0
    %p234 = por %p232, %p233
    %p235 = scmp.ne.s32.totalorder %s227, %s229
    %p236 = scmp.eq.s32.totalorder %s25, 1
    %p237 = por %p235, %p236
    %p238 = scmp.ne.s32.totalorder %s229, %s230
    %p239 = scmp.eq.s32.totalorder %s25, 0
    %p240 = por %p238, %p239
    %p241 = scmp.ne.s32.totalorder %s229, %s230
    %p242 = scmp.eq.s32.totalorder %s26, 1
    %p243 = por %p241, %p242
    %p245 = scmp.ne.s32.totalorder %s230, %s244
    %p246 = scmp.eq.s32.totalorder %s26, 0
    %p247 = por %p245, %p246
    %s249 = sadd.s32 %s248, 1
    %p252 = scmp.eq.s32.totalorder %s20, 1
    %p253 = scmp.ne.s32.totalorder %s248, %s250
    %p254 = scmp.eq.s32.totalorder %s20, 0
    %p255 = por %p253, %p254
    %p256 = scmp.ne.s32.totalorder %s248, %s250
    %p257 = scmp.eq.s32.totalorder %s25, 1
    %p258 = por %p256, %p257
    %p259 = scmp.ne.s32.totalorder %s250, %s251
    %p260 = scmp.eq.s32.totalorder %s25, 0
    %p261 = por %p259, %p260
    %p262 = scmp.ne.s32.totalorder %s250, %s251
    %p263 = scmp.eq.s32.totalorder %s26, 1
    %p264 = por %p262, %p263
    %p266 = scmp.ne.s32.totalorder %s251, %s265
    %p267 = scmp.eq.s32.totalorder %s26, 0
    %p268 = por %p266, %p267
    %s270 = sadd.s32 %s269, 1
    %p273 = scmp.eq.s32.totalorder %s20, 1
    %p274 = scmp.ne.s32.totalorder %s269, %s271
    %p275 = scmp.eq.s32.totalorder %s20, 0
    %p276 = por %p274, %p275
    %p277 = scmp.ne.s32.totalorder %s269, %s271
    %p278 = scmp.eq.s32.totalorder %s25, 1
    %p279 = por %p277, %p278
    %p280 = scmp.ne.s32.totalorder %s271, %s272
    %p281 = scmp.eq.s32.totalorder %s25, 0
    %p282 = por %p280, %p281
    %p283 = scmp.ne.s32.totalorder %s271, %s272
    %p284 = scmp.eq.s32.totalorder %s26, 1
    %p285 = por %p283, %p284
    %p287 = scmp.ne.s32.totalorder %s272, %s286
    %p288 = scmp.eq.s32.totalorder %s26, 0
    %p289 = por %p287, %p288
    %s291 = sadd.s32 %s290, 1
    %p294 = scmp.eq.s32.totalorder %s20, 1
    %p295 = scmp.ne.s32.totalorder %s290, %s292
    %p296 = scmp.eq.s32.totalorder %s20, 0
    %p297 = por %p295, %p296
    %p298 = scmp.ne.s32.totalorder %s290, %s292
    %p299 = scmp.eq.s32.totalorder %s25, 1
    %p300 = por %p298, %p299
    %p301 = scmp.ne.s32.totalorder %s292, %s293
    %p302 = scmp.eq.s32.totalorder %s25, 0
    %p303 = por %p301, %p302
    %p304 = scmp.ne.s32.totalorder %s292, %s293
    %p305 = scmp.eq.s32.totalorder %s26, 1
    %p306 = por %p304, %p305
    %p308 = scmp.ne.s32.totalorder %s293, %s307
    %p309 = scmp.eq.s32.totalorder %s26, 0
    %p310 = por %p308, %p309
    %s312 = sadd.s32 %s311, 1
    %p315 = scmp.eq.s32.totalorder %s20, 1
    %p316 = scmp.ne.s32.totalorder %s311, %s313
    %p317 = scmp.eq.s32.totalorder %s20, 0
    %p318 = por %p316, %p317
    %p319 = scmp.ne.s32.totalorder %s311, %s313
    %p320 = scmp.eq.s32.totalorder %s25, 1
    %p321 = por %p319, %p320
    %p322 = scmp.ne.s32.totalorder %s313, %s314
    %p323 = scmp.eq.s32.totalorder %s25, 0
    %p324 = por %p322, %p323
    %p325 = scmp.ne.s32.totalorder %s313, %s314
    %p326 = scmp.eq.s32.totalorder %s26, 1
    %p327 = por %p325, %p326
    %p329 = scmp.ne.s32.totalorder %s314, %s328
    %p330 = scmp.eq.s32.totalorder %s26, 0
    %p331 = por %p329, %p330
    %s332 = ssub.s32 %s20, %s27
    %p333 = scmp.eq.s32.totalorder %s332, 0
    %s335 = sadd.s32 %s334, 1
    %s336 = scalar_select %p333, %s334, %s335
    %p339 = pneg %p333
    %p340 = scmp.eq.s32.totalorder %s20, 1
    %p341 = por %p339, %p340
    %p342 = scmp.ne.s32.totalorder %s334, %s337
    %p343 = scmp.eq.s32.totalorder %s20, 0
    %p344 = por %p342, %p343
    %p345 = scmp.ne.s32.totalorder %s334, %s337
    %p346 = scmp.eq.s32.totalorder %s25, 1
    %p347 = por %p345, %p346
    %p348 = scmp.ne.s32.totalorder %s337, %s338
    %p349 = scmp.eq.s32.totalorder %s25, 0
    %p350 = por %p348, %p349
    %p351 = scmp.ne.s32.totalorder %s337, %s338
    %p352 = scmp.eq.s32.totalorder %s26, 1
    %p353 = por %p351, %p352
    %p355 = scmp.ne.s32.totalorder %s338, %s354
    %p356 = scmp.eq.s32.totalorder %s26, 0
    %p357 = por %p355, %p356
    %p358 = scmp.le.s32.totalorder 1, %s20
    %p359 = scmp.lt.s32.totalorder %s20, 3
    %p360 = pnand %p358, %p359
    %p361 = pneg %p360
    // Predicated region
    $region9: #{tpu_custom_call.1} parent=5 // pred_check
      _
    $region10: #{tpu_custom_call.1} parent=5 // pred_check_branch
      %363 = sbr.rel (%p360) target = $region12
    $region11: #{tpu_custom_call.1} parent=5 // pred_region
      %s364 = ssub.s32 %s20, 1
      // Predicated region
      $region13: #{tpu_custom_call.1} parent=11 // pred_check
        %p365 = pneg %p93
      $region14: #{tpu_custom_call.1} parent=11 // pred_check_branch
        %367 = sbr.rel (%p365) target = $region16
      $region15: #{tpu_custom_call.1} parent=11 // pred_region
        _
      $region16: #{tpu_custom_call.1} parent=11 // pred_fallthru
        _
      // Predicated region
      $region17: #{tpu_custom_call.1} parent=11 // pred_check
        %p368 = pneg %p114
      $region18: #{tpu_custom_call.1} parent=11 // pred_check_branch
        %370 = sbr.rel (%p368) target = $region20
      $region19: #{tpu_custom_call.1} parent=11 // pred_region
        _
      $region20: #{tpu_custom_call.1} parent=11 // pred_fallthru
        _
      // Predicated region
      $region21: #{tpu_custom_call.1} parent=11 // pred_check
        %p371 = pneg %p135
      $region22: #{tpu_custom_call.1} parent=11 // pred_check_branch
        %373 = sbr.rel (%p371) target = $region24
      $region23: #{tpu_custom_call.1} parent=11 // pred_region
        _
      $region24: #{tpu_custom_call.1} parent=11 // pred_fallthru
        _
      // Predicated region
      $region25: #{tpu_custom_call.1} parent=11 // pred_check
        %p374 = pneg %p156
      $region26: #{tpu_custom_call.1} parent=11 // pred_check_branch
        %376 = sbr.rel (%p374) target = $region28
      $region27: #{tpu_custom_call.1} parent=11 // pred_region
        _
      $region28: #{tpu_custom_call.1} parent=11 // pred_fallthru
        _
      // Predicated region
      $region29: #{tpu_custom_call.1} parent=11 // pred_check
        %p377 = pneg %p177
      $region30: #{tpu_custom_call.1} parent=11 // pred_check_branch
        %379 = sbr.rel (%p377) target = $region32
      $region31: #{tpu_custom_call.1} parent=11 // pred_region
        _
      $region32: #{tpu_custom_call.1} parent=11 // pred_fallthru
        _
      // Predicated region
      $region33: #{tpu_custom_call.1} parent=11 // pred_check
        %p380 = pneg %p198
      $region34: #{tpu_custom_call.1} parent=11 // pred_check_branch
        %382 = sbr.rel (%p380) target = $region36
      $region35: #{tpu_custom_call.1} parent=11 // pred_region
        _
      $region36: #{tpu_custom_call.1} parent=11 // pred_fallthru
        _
      // Predicated region
      $region37: #{tpu_custom_call.1} parent=11 // pred_check
        %p383 = pneg %p219
      $region38: #{tpu_custom_call.1} parent=11 // pred_check_branch
        %385 = sbr.rel (%p383) target = $region40
      $region39: #{tpu_custom_call.1} parent=11 // pred_region
        _
      $region40: #{tpu_custom_call.1} parent=11 // pred_fallthru
        _
      // Predicated region
      $region41: #{tpu_custom_call.1} parent=11 // pred_check
        %p386 = pneg %p240
      $region42: #{tpu_custom_call.1} parent=11 // pred_check_branch
        %388 = sbr.rel (%p386) target = $region44
      $region43: #{tpu_custom_call.1} parent=11 // pred_region
        _
      $region44: #{tpu_custom_call.1} parent=11 // pred_fallthru
        _
      // Predicated region
      $region45: #{tpu_custom_call.1} parent=11 // pred_check
        %p389 = pneg %p261
      $region46: #{tpu_custom_call.1} parent=11 // pred_check_branch
        %391 = sbr.rel (%p389) target = $region48
      $region47: #{tpu_custom_call.1} parent=11 // pred_region
        _
      $region48: #{tpu_custom_call.1} parent=11 // pred_fallthru
        _
      // Predicated region
      $region49: #{tpu_custom_call.1} parent=11 // pred_check
        %p392 = pneg %p282
      $region50: #{tpu_custom_call.1} parent=11 // pred_check_branch
        %394 = sbr.rel (%p392) target = $region52
      $region51: #{tpu_custom_call.1} parent=11 // pred_region
        _
      $region52: #{tpu_custom_call.1} parent=11 // pred_fallthru
        _
      // Predicated region
      $region53: #{tpu_custom_call.1} parent=11 // pred_check
        %p395 = pneg %p303
      $region54: #{tpu_custom_call.1} parent=11 // pred_check_branch
        %397 = sbr.rel (%p395) target = $region56
      $region55: #{tpu_custom_call.1} parent=11 // pred_region
        _
      $region56: #{tpu_custom_call.1} parent=11 // pred_fallthru
        _
      // Predicated region
      $region57: #{tpu_custom_call.1} parent=11 // pred_check
        %p398 = pneg %p324
      $region58: #{tpu_custom_call.1} parent=11 // pred_check_branch
        %400 = sbr.rel (%p398) target = $region60
      $region59: #{tpu_custom_call.1} parent=11 // pred_region
        _
      $region60: #{tpu_custom_call.1} parent=11 // pred_fallthru
        _
    $region12: #{tpu_custom_call.1} parent=5 // pred_fallthru
      _
    %p401 = scmp.lt.s32.totalorder %s20, 2
    // Predicated region
    $region61: #{tpu_custom_call.1} parent=5 // pred_check
      %p402 = pneg %p401
    $region62: #{tpu_custom_call.1} parent=5 // pred_check_branch
      %404 = sbr.rel (%p402) target = $region64
    $region63: #{tpu_custom_call.1} parent=5 // pred_region
      // Predicated region
      $region65: #{tpu_custom_call.1} parent=63 // pred_check
        %p405 = pneg %p40
      $region66: #{tpu_custom_call.1} parent=63 // pred_check_branch
        %407 = sbr.rel (%p405) target = $region68
      $region67: #{tpu_custom_call.1} parent=63 // pred_region
        %p408 = scmp.lt.s32.totalorder %s20, 1
        %s409 = scalar_select %p408, %s20, 1
        %s410 = smul.addr %s409, 8
        %s411 = smul.addr %s410, 8
        %s412 = scalar_lea.vmem %s0, %s411
      $region68: #{tpu_custom_call.1} parent=63 // pred_fallthru
        _
      // Predicated region
      $region69: #{tpu_custom_call.1} parent=63 // pred_check
        %p413 = pneg %p66
      $region70: #{tpu_custom_call.1} parent=63 // pred_check_branch
        %415 = sbr.rel (%p413) target = $region72
      $region71: #{tpu_custom_call.1} parent=63 // pred_region
        %p416 = scmp.lt.s32.totalorder %s20, 1
        %s417 = scalar_select %p416, %s20, 1
        %s418 = scalar_lea.vmem %s1, %s417
      $region72: #{tpu_custom_call.1} parent=63 // pred_fallthru
        _
    $region64: #{tpu_custom_call.1} parent=5 // pred_fallthru
      _
    %p419 = scmp.le.s32.totalorder 1, %s20
    %p420 = scmp.lt.s32.totalorder %s20, 3
    %p421 = pnand %p419, %p420
    %p422 = pneg %p421
    // Predicated region
    $region73: #{tpu_custom_call.1} parent=5 // pred_check
      _
    $region74: #{tpu_custom_call.1} parent=5 // pred_check_branch
      %424 = sbr.rel (%p421) target = $region76
    $region75: #{tpu_custom_call.1} parent=5 // pred_region
      %s425 = ssub.s32 %s20, 1
      %p426 = scmp.lt.s32.totalorder %s25, 1
      %s427 = scalar_select %p426, %s25, 1
      %s428 = smul.addr %s427, 8
      %s429 = smul.addr %s428, 8
      %s430 = scalar_lea.vmem %s0, %s429
      %p431 = pneg %p46
      %p432 = pneg %p43
      %p433 = scmp.lt.s32.totalorder %s25, 1
      %s434 = scalar_select %p433, %s25, 1
      %s435 = scalar_lea.vmem %s1, %s434
      %p436 = pneg %p72
      %p437 = pneg %p69
      %p438 = pneg %p93
      %p439 = pneg %p90
      %p440 = pneg %p114
      %p441 = pneg %p111
      %p442 = pneg %p135
      %p443 = pneg %p132
      %p444 = pneg %p156
      %p445 = pneg %p153
      %p446 = pneg %p177
      %p447 = pneg %p174
      %p448 = pneg %p198
      %p449 = pneg %p195
      %p450 = pneg %p219
      %p451 = pneg %p216
      %p452 = pneg %p240
      %p453 = pneg %p237
      %p454 = pneg %p261
      %p455 = pneg %p258
      %p456 = pneg %p282
      %p457 = pneg %p279
      %p458 = pneg %p303
      %p459 = pneg %p300
      %p460 = pneg %p324
      %p461 = pneg %p321
      %p462 = pneg %p350
      %p463 = pneg %p347
      %p464 = scmp.lt.s32.totalorder %s25, 1
      %s465 = scalar_select %p464, %s25, 1
      %s466 = smul.addr %s465, 8
      %s467 = smul.addr %s466, 8
      %s468 = scalar_lea.vmem %s14, %s467
      %p469 = scmp.lt.s32.totalorder %s25, 1
      %s470 = scalar_select %p469, %s25, 1
      %s471 = smul.addr %s470, 8
      %s472 = smul.addr %s471, 8
      %s473 = scalar_lea.vmem %s0, %s472
      %p474 = scmp.lt.s32.totalorder %s25, 1
      %s475 = scalar_select %p474, %s25, 1
      %s476 = scalar_lea.vmem %s1, %s475
      %p477 = scmp.lt.s32.totalorder %s25, 1
      %s478 = scalar_select %p477, %s25, 1
      %s479 = smul.addr %s478, 8
      %s480 = smul.addr %s479, 8
      %s481 = scalar_lea.vmem %s14, %s480
      %v483 = vld [vmem:[%s473] sm:$0xff]
      %v484 = vld [vmem:[%s473 + $0x8] sm:$0xff]
      %v485 = vld [vmem:[%s473 + $0x10] sm:$0xff]
      %v486 = vld [vmem:[%s473 + $0x18] sm:$0xff]
      %v487 = vld [vmem:[%s473 + $0x20] sm:$0xff]
      %v488 = vld [vmem:[%s473 + $0x28] sm:$0xff]
      %v489 = vld [vmem:[%s473 + $0x30] sm:$0xff]
      %v490 = vld [vmem:[%s473 + $0x38] sm:$0xff]
      %v491 = vld [vmem:[%s2] sm:$0xf]
      %v492 = vld [vmem:[%s2 + $0x4] sm:$0xf]
      %v493 = vld [vmem:[%s2 + $0x8] sm:$0xf]
      %v494 = vld [vmem:[%s2 + $0xc] sm:$0xf]
      %v495 = vld [vmem:[%s2 + $0x10] sm:$0xf]
      %v496 = vld [vmem:[%s2 + $0x14] sm:$0xf]
      %v497 = vld [vmem:[%s2 + $0x18] sm:$0xf]
      %v498 = vld [vmem:[%s2 + $0x1c] sm:$0xf]
      %v499 = vld [vmem:[%s3] sm:$0xf]
      %v500 = vld [vmem:[%s3 + $0x4] sm:$0xf]
      %v501 = vld [vmem:[%s3 + $0x8] sm:$0xf]
      %v502 = vld [vmem:[%s3 + $0xc] sm:$0xf]
      %v503 = vld [vmem:[%s3 + $0x10] sm:$0xf]
      %v504 = vld [vmem:[%s3 + $0x14] sm:$0xf]
      %v505 = vld [vmem:[%s3 + $0x18] sm:$0xf]
      %v506 = vld [vmem:[%s3 + $0x1c] sm:$0xf]
      %v507 = vld [vmem:[%s6] sm:$0xff]
      %v508 = vld [vmem:[%s6 + $0x8] sm:$0xff]
      %v509 = vld [vmem:[%s6 + $0x10] sm:$0xff]
      %v510 = vld [vmem:[%s6 + $0x18] sm:$0xff]
      %v511 = vld [vmem:[%s7] sm:$0xff]
      %v512 = vld [vmem:[%s7 + $0x8] sm:$0xff]
      %v513 = vld [vmem:[%s7 + $0x10] sm:$0xff]
      %v514 = vld [vmem:[%s7 + $0x18] sm:$0xff]
      %vm515 = vcmask 257024
      %516 = vst.msk [vmem:[#allocation2] sm:$0xf] %vm515, 0
      %vm517 = vcmask 253952
      %vm518 = vsmask.f32 256
      %vm519 = vmand %vm517, %vm518
      %v520 = vld [vmem:[#allocation2 + $0x4] sm:$0x1]
      %v521 = vsel %vm519, 0, %v520
      %522 = vst [vmem:[#allocation2 + $0x4] sm:$0x1] %v521
      %vm523 = vcmask 257024
      %vm524 = vsmask.f32 7938
      %vm525 = vmand %vm523, %vm524
      %v526 = vld [vmem:[#allocation2 + $0x24] sm:$0xf]
      %v527 = vsel %vm525, 0, %v526
      %528 = vst [vmem:[#allocation2 + $0x24] sm:$0xf] %v527
      %vm529 = vcmask 253952
      %530 = vst.msk [vmem:[#allocation2 + $0x28] sm:$0x1] %vm529, 0
      %v531 = vld [vmem:[%s4] sm:$0x1]
      %v532 = vld [vmem:[%s5] sm:$0x1]
      %vm533 = vcmask 261120
      %v534 = vsel %vm533, %v483, 0.0
      %v535 = vsel %vm533, %v484, 0.0
      %v536 = vadd.f32 %v534, %v535
      %v537 = vsel %vm533, %v485, 0.0
      %v538 = vadd.f32 %v536, %v537
      %v539 = vsel %vm533, %v486, 0.0
      %v540 = vadd.f32 %v538, %v539
      %v541 = vsel %vm533, %v487, 0.0
      %v542 = vadd.f32 %v540, %v541
      %v543 = vsel %vm533, %v488, 0.0
      %v544 = vadd.f32 %v542, %v543
      %v545 = vsel %vm533, %v489, 0.0
      %v546 = vadd.f32 %v544, %v545
      %v547 = vsel %vm533, %v490, 0.0
      %v548 = vadd.f32 %v546, %v547
      %v549 = vrot.slane %v548, 4
      %v550 = vadd.f32 %v548, %v549
      %v551 = vrot.slane %v550, 2
      %v552 = vadd.f32 %v550, %v551
      %v553 = vrot.slane %v552, 1
      %v554 = vadd.f32 %v552, %v553
      %v556 = vsel %vm533, %v554, 0
      %558 = vmatprep.subr.mxu0 0.0
      %559 = vmatpush1.msra.mxu0 %v507
      %560 = vmatprep.subr.mxu0 0.0
      %561 = vmatpush1.msra.mxu0 %v508
      %562 = vmatprep.subr.mxu0 0.0
      %563 = vmatpush1.msra.mxu0 %v509
      %564 = vmatprep.subr.mxu0 0.0
      %565 = vmatpush1.msra.mxu0 %v510
      %566 = vmatprep.subr.mxu0 0.0
      %567 = vmatpush1.msra.mxu0 0.0
      %568 = vmatprep.subr.mxu0 0.0
      %569 = vmatpush1.msra.mxu0 0.0
      %570 = vmatprep.subr.mxu0 0.0
      %571 = vmatpush1.msra.mxu0 0.0
      %572 = vmatprep.subr.mxu0 0.0
      %573 = vmatpush1.msra.mxu0 0.0
      %574 = vmatprep.subr.mxu0 0.0
      %575 = vmatpush1.msra.mxu0 0.0
      %576 = vmatprep.subr.mxu0 0.0
      %577 = vmatpush1.msra.mxu0 0.0
      %578 = vmatprep.subr.mxu0 0.0
      %579 = vmatpush1.msra.mxu0 0.0
      %580 = vmatprep.subr.mxu0 0.0
      %581 = vmatpush1.msra.mxu0 0.0
      %582 = vmatprep.subr.mxu0 0.0
      %583 = vmatpush1.msra.mxu0 0.0
      %584 = vmatprep.subr.mxu0 0.0
      %585 = vmatpush1.msra.mxu0 0.0
      %586 = vmatprep.subr.mxu0 0.0
      %587 = vmatpush1.msra.mxu0 0.0
      %588 = vmatprep.subr.mxu0 0.0
      %589 = vmatpush1.msra.mxu0 0.0
      %590 = vmatprep.subr.mxu0 0.0
      %591 = vmatpush1.msra.mxu0 0.0
      %592 = vmatprep.subr.mxu0 0.0
      %593 = vmatpush1.msra.mxu0 0.0
      %594 = vmatprep.subr.mxu0 0.0
      %595 = vmatpush1.msra.mxu0 0.0
      %596 = vmatprep.subr.mxu0 0.0
      %597 = vmatpush1.msra.mxu0 0.0
      %598 = vmatprep.subr.mxu0 0.0
      %599 = vmatpush1.msra.mxu0 0.0
      %600 = vmatprep.subr.mxu0 0.0
      %601 = vmatpush1.msra.mxu0 0.0
      %602 = vmatprep.subr.mxu0 0.0
      %603 = vmatpush1.msra.mxu0 0.0
      %604 = vmatprep.subr.mxu0 0.0
      %605 = vmatpush1.msra.mxu0 0.0
      %606 = vmatprep.subr.mxu0 0.0
      %607 = vmatpush1.msra.mxu0 0.0
      %608 = vmatprep.subr.mxu0 0.0
      %609 = vmatpush1.msra.mxu0 0.0
      %610 = vmatprep.subr.mxu0 0.0
      %611 = vmatpush1.msra.mxu0 0.0
      %612 = vmatprep.subr.mxu0 0.0
      %613 = vmatpush1.msra.mxu0 0.0
      %614 = vmatprep.subr.mxu0 0.0
      %615 = vmatpush1.msra.mxu0 0.0
      %616 = vmatprep.subr.mxu0 0.0
      %617 = vmatpush1.msra.mxu0 0.0
      %618 = vmatprep.subr.mxu0 0.0
      %619 = vmatpush1.msra.mxu0 0.0
      %620 = vmatprep.subr.mxu0 0.0
      %621 = vmatpush1.msra.mxu0 0.0
      %622 = vmatprep.mubr.f32.mxu0 0.0
      %623 = vmatmul.mubr.f32.gmra.mrb[0].mxu0 %v556
      %v624 = vpop.f32.mrb[0].mxu0
      %v625 = vadd.f32 0.0, %v624
      %v626 = vpop.f32.mrb[0].mxu0
      %627 = vdwg.mxu0
      %v628 = vrcp.pop 64.0
      %v629 = vmul.f32 %v625, %v628
      %v631 = vsel %vm533, %v629, 0
      %633 = vmatprep.subr.mxu0 0.0
      %634 = vmatpush1.msra.mxu0 %v511
      %635 = vmatprep.subr.mxu0 0.0
      %636 = vmatpush1.msra.mxu0 %v512
      %637 = vmatprep.subr.mxu0 0.0
      %638 = vmatpush1.msra.mxu0 %v513
      %639 = vmatprep.subr.mxu0 0.0
      %640 = vmatpush1.msra.mxu0 %v514
      %641 = vmatprep.subr.mxu0 0.0
      %642 = vmatpush1.msra.mxu0 0.0
      %643 = vmatprep.subr.mxu0 0.0
      %644 = vmatpush1.msra.mxu0 0.0
      %645 = vmatprep.subr.mxu0 0.0
      %646 = vmatpush1.msra.mxu0 0.0
      %647 = vmatprep.subr.mxu0 0.0
      %648 = vmatpush1.msra.mxu0 0.0
      %649 = vmatprep.subr.mxu0 0.0
      %650 = vmatpush1.msra.mxu0 0.0
      %651 = vmatprep.subr.mxu0 0.0
      %652 = vmatpush1.msra.mxu0 0.0
      %653 = vmatprep.subr.mxu0 0.0
      %654 = vmatpush1.msra.mxu0 0.0
      %655 = vmatprep.subr.mxu0 0.0
      %656 = vmatpush1.msra.mxu0 0.0
      %657 = vmatprep.subr.mxu0 0.0
      %658 = vmatpush1.msra.mxu0 0.0
      %659 = vmatprep.subr.mxu0 0.0
      %660 = vmatpush1.msra.mxu0 0.0
      %661 = vmatprep.subr.mxu0 0.0
      %662 = vmatpush1.msra.mxu0 0.0
      %663 = vmatprep.subr.mxu0 0.0
      %664 = vmatpush1.msra.mxu0 0.0
      %665 = vmatprep.subr.mxu0 0.0
      %666 = vmatpush1.msra.mxu0 0.0
      %667 = vmatprep.subr.mxu0 0.0
      %668 = vmatpush1.msra.mxu0 0.0
      %669 = vmatprep.subr.mxu0 0.0
      %670 = vmatpush1.msra.mxu0 0.0
      %671 = vmatprep.subr.mxu0 0.0
      %672 = vmatpush1.msra.mxu0 0.0
      %673 = vmatprep.subr.mxu0 0.0
      %674 = vmatpush1.msra.mxu0 0.0
      %675 = vmatprep.subr.mxu0 0.0
      %676 = vmatpush1.msra.mxu0 0.0
      %677 = vmatprep.subr.mxu0 0.0
      %678 = vmatpush1.msra.mxu0 0.0
      %679 = vmatprep.subr.mxu0 0.0
      %680 = vmatpush1.msra.mxu0 0.0
      %681 = vmatprep.subr.mxu0 0.0
      %682 = vmatpush1.msra.mxu0 0.0
      %683 = vmatprep.subr.mxu0 0.0
      %684 = vmatpush1.msra.mxu0 0.0
      %685 = vmatprep.subr.mxu0 0.0
      %686 = vmatpush1.msra.mxu0 0.0
      %687 = vmatprep.subr.mxu0 0.0
      %688 = vmatpush1.msra.mxu0 0.0
      %689 = vmatprep.subr.mxu0 0.0
      %690 = vmatpush1.msra.mxu0 0.0
      %691 = vmatprep.subr.mxu0 0.0
      %692 = vmatpush1.msra.mxu0 0.0
      %693 = vmatprep.subr.mxu0 0.0
      %694 = vmatpush1.msra.mxu0 0.0
      %695 = vmatprep.subr.mxu0 0.0
      %696 = vmatpush1.msra.mxu0 0.0
      %697 = vmatprep.mubr.f32.mxu0 0.0
      %698 = vmatmul.mubr.f32.gmra.mrb[0].mxu0 %v631
      %v699 = vpop.f32.mrb[0].mxu0
      %v700 = vadd.f32 0.0, %v699
      %v701 = vpop.f32.mrb[0].mxu0
      %702 = vdwg.mxu0
      %v703 = vlaneseq
      %v704 = vshrl.u32 %v703, 7
      %v705 = vsub.s32 0, %v704
      %v706 = vrot.slane %v700, %v705
      %v707 = vsub.f32 %v483, %v706
      %v708 = vsub.f32 %v484, %v706
      %v709 = vsub.f32 %v485, %v706
      %v710 = vsub.f32 %v486, %v706
      %v711 = vsub.f32 %v487, %v706
      %v712 = vsub.f32 %v488, %v706
      %v713 = vsub.f32 %v489, %v706
      %v714 = vsub.f32 %v490, %v706
      %v715 = vmul.f32 %v707, %v707
      %v716 = vmul.f32 %v708, %v708
      %v717 = vmul.f32 %v709, %v709
      %v718 = vmul.f32 %v710, %v710
      %v719 = vmul.f32 %v711, %v711
      %v720 = vmul.f32 %v712, %v712
      %v721 = vmul.f32 %v713, %v713
      %v722 = vmul.f32 %v714, %v714
      %v723 = vsel %vm533, %v715, 0.0
      %v724 = vsel %vm533, %v716, 0.0
      %v725 = vadd.f32 %v723, %v724
      %v726 = vsel %vm533, %v717, 0.0
      %v727 = vadd.f32 %v725, %v726
      %v728 = vsel %vm533, %v718, 0.0
      %v729 = vadd.f32 %v727, %v728
      %v730 = vsel %vm533, %v719, 0.0
      %v731 = vadd.f32 %v729, %v730
      %v732 = vsel %vm533, %v720, 0.0
      %v733 = vadd.f32 %v731, %v732
      %v734 = vsel %vm533, %v721, 0.0
      %v735 = vadd.f32 %v733, %v734
      %v736 = vsel %vm533, %v722, 0.0
      %v737 = vadd.f32 %v735, %v736
      %v738 = vrot.slane %v737, 4
      %v739 = vadd.f32 %v737, %v738
      %v740 = vrot.slane %v739, 2
      %v741 = vadd.f32 %v739, %v740
      %v742 = vrot.slane %v741, 1
      %v743 = vadd.f32 %v741, %v742
      %v745 = vsel %vm533, %v743, 0
      %747 = vmatprep.subr.mxu0 0.0
      %748 = vmatpush1.msra.mxu0 %v507
      %749 = vmatprep.subr.mxu0 0.0
      %750 = vmatpush1.msra.mxu0 %v508
      %751 = vmatprep.subr.mxu0 0.0
      %752 = vmatpush1.msra.mxu0 %v509
      %753 = vmatprep.subr.mxu0 0.0
      %754 = vmatpush1.msra.mxu0 %v510
      %755 = vmatprep.subr.mxu0 0.0
      %756 = vmatpush1.msra.mxu0 0.0
      %757 = vmatprep.subr.mxu0 0.0
      %758 = vmatpush1.msra.mxu0 0.0
      %759 = vmatprep.subr.mxu0 0.0
      %760 = vmatpush1.msra.mxu0 0.0
      %761 = vmatprep.subr.mxu0 0.0
      %762 = vmatpush1.msra.mxu0 0.0
      %763 = vmatprep.subr.mxu0 0.0
      %764 = vmatpush1.msra.mxu0 0.0
      %765 = vmatprep.subr.mxu0 0.0
      %766 = vmatpush1.msra.mxu0 0.0
      %767 = vmatprep.subr.mxu0 0.0
      %768 = vmatpush1.msra.mxu0 0.0
      %769 = vmatprep.subr.mxu0 0.0
      %770 = vmatpush1.msra.mxu0 0.0
      %771 = vmatprep.subr.mxu0 0.0
      %772 = vmatpush1.msra.mxu0 0.0
      %773 = vmatprep.subr.mxu0 0.0
      %774 = vmatpush1.msra.mxu0 0.0
      %775 = vmatprep.subr.mxu0 0.0
      %776 = vmatpush1.msra.mxu0 0.0
      %777 = vmatprep.subr.mxu0 0.0
      %778 = vmatpush1.msra.mxu0 0.0
      %779 = vmatprep.subr.mxu0 0.0
      %780 = vmatpush1.msra.mxu0 0.0
      %781 = vmatprep.subr.mxu0 0.0
      %782 = vmatpush1.msra.mxu0 0.0
      %783 = vmatprep.subr.mxu0 0.0
      %784 = vmatpush1.msra.mxu0 0.0
      %785 = vmatprep.subr.mxu0 0.0
      %786 = vmatpush1.msra.mxu0 0.0
      %787 = vmatprep.subr.mxu0 0.0
      %788 = vmatpush1.msra.mxu0 0.0
      %789 = vmatprep.subr.mxu0 0.0
      %790 = vmatpush1.msra.mxu0 0.0
      %791 = vmatprep.subr.mxu0 0.0
      %792 = vmatpush1.msra.mxu0 0.0
      %793 = vmatprep.subr.mxu0 0.0
      %794 = vmatpush1.msra.mxu0 0.0
      %795 = vmatprep.subr.mxu0 0.0
      %796 = vmatpush1.msra.mxu0 0.0
      %797 = vmatprep.subr.mxu0 0.0
      %798 = vmatpush1.msra.mxu0 0.0
      %799 = vmatprep.subr.mxu0 0.0
      %800 = vmatpush1.msra.mxu0 0.0
      %801 = vmatprep.subr.mxu0 0.0
      %802 = vmatpush1.msra.mxu0 0.0
      %803 = vmatprep.subr.mxu0 0.0
      %804 = vmatpush1.msra.mxu0 0.0
      %805 = vmatprep.subr.mxu0 0.0
      %806 = vmatpush1.msra.mxu0 0.0
      %807 = vmatprep.subr.mxu0 0.0
      %808 = vmatpush1.msra.mxu0 0.0
      %809 = vmatprep.subr.mxu0 0.0
      %810 = vmatpush1.msra.mxu0 0.0
      %811 = vmatprep.mubr.f32.mxu0 0.0
      %812 = vmatmul.mubr.f32.gmra.mrb[0].mxu0 %v745
      %v813 = vpop.f32.mrb[0].mxu0
      %v814 = vadd.f32 0.0, %v813
      %v815 = vpop.f32.mrb[0].mxu0
      %816 = vdwg.mxu0
      %v817 = vmul.f32 %v814, %v628
      %v819 = vsel %vm533, %v817, 0
      %821 = vmatprep.subr.mxu0 0.0
      %822 = vmatpush1.msra.mxu0 %v511
      %823 = vmatprep.subr.mxu0 0.0
      %824 = vmatpush1.msra.mxu0 %v512
      %825 = vmatprep.subr.mxu0 0.0
      %826 = vmatpush1.msra.mxu0 %v513
      %827 = vmatprep.subr.mxu0 0.0
      %828 = vmatpush1.msra.mxu0 %v514
      %829 = vmatprep.subr.mxu0 0.0
      %830 = vmatpush1.msra.mxu0 0.0
      %831 = vmatprep.subr.mxu0 0.0
      %832 = vmatpush1.msra.mxu0 0.0
      %833 = vmatprep.subr.mxu0 0.0
      %834 = vmatpush1.msra.mxu0 0.0
      %835 = vmatprep.subr.mxu0 0.0
      %836 = vmatpush1.msra.mxu0 0.0
      %837 = vmatprep.subr.mxu0 0.0
      %838 = vmatpush1.msra.mxu0 0.0
      %839 = vmatprep.subr.mxu0 0.0
      %840 = vmatpush1.msra.mxu0 0.0
      %841 = vmatprep.subr.mxu0 0.0
      %842 = vmatpush1.msra.mxu0 0.0
      %843 = vmatprep.subr.mxu0 0.0
      %844 = vmatpush1.msra.mxu0 0.0
      %845 = vmatprep.subr.mxu0 0.0
      %846 = vmatpush1.msra.mxu0 0.0
      %847 = vmatprep.subr.mxu0 0.0
      %848 = vmatpush1.msra.mxu0 0.0
      %849 = vmatprep.subr.mxu0 0.0
      %850 = vmatpush1.msra.mxu0 0.0
      %851 = vmatprep.subr.mxu0 0.0
      %852 = vmatpush1.msra.mxu0 0.0
      %853 = vmatprep.subr.mxu0 0.0
      %854 = vmatpush1.msra.mxu0 0.0
      %855 = vmatprep.subr.mxu0 0.0
      %856 = vmatpush1.msra.mxu0 0.0
      %857 = vmatprep.subr.mxu0 0.0
      %858 = vmatpush1.msra.mxu0 0.0
      %859 = vmatprep.subr.mxu0 0.0
      %860 = vmatpush1.msra.mxu0 0.0
      %861 = vmatprep.subr.mxu0 0.0
      %862 = vmatpush1.msra.mxu0 0.0
      %863 = vmatprep.subr.mxu0 0.0
      %864 = vmatpush1.msra.mxu0 0.0
      %865 = vmatprep.subr.mxu0 0.0
      %866 = vmatpush1.msra.mxu0 0.0
      %867 = vmatprep.subr.mxu0 0.0
      %868 = vmatpush1.msra.mxu0 0.0
      %869 = vmatprep.subr.mxu0 0.0
      %870 = vmatpush1.msra.mxu0 0.0
      %871 = vmatprep.subr.mxu0 0.0
      %872 = vmatpush1.msra.mxu0 0.0
      %873 = vmatprep.subr.mxu0 0.0
      %874 = vmatpush1.msra.mxu0 0.0
      %875 = vmatprep.subr.mxu0 0.0
      %876 = vmatpush1.msra.mxu0 0.0
      %877 = vmatprep.subr.mxu0 0.0
      %878 = vmatpush1.msra.mxu0 0.0
      %879 = vmatprep.subr.mxu0 0.0
      %880 = vmatpush1.msra.mxu0 0.0
      %881 = vmatprep.subr.mxu0 0.0
      %882 = vmatpush1.msra.mxu0 0.0
      %883 = vmatprep.subr.mxu0 0.0
      %884 = vmatpush1.msra.mxu0 0.0
      %885 = vmatprep.mubr.f32.mxu0 0.0
      %886 = vmatmul.mubr.f32.gmra.mrb[0].mxu0 %v819
      %v887 = vpop.f32.mrb[0].mxu0
      %v888 = vadd.f32 0.0, %v887
      %v889 = vpop.f32.mrb[0].mxu0
      %890 = vdwg.mxu0
      %v891 = vmax.f32 %v888, 0.0
      %v892 = vadd.f32 %v891, 1e-05
      %v893 = vrsqrt.pop %v892
      %v894 = vmul.f32 %v893, %v531
      %v895 = vlaneseq
      %v896 = vshrl.u32 %v895, 7
      %v897 = vsub.s32 0, %v896
      %v898 = vrot.slane %v894, %v897
      %v899 = vmul.f32 %v707, %v898
      %v900 = vmul.f32 %v708, %v898
      %v901 = vmul.f32 %v709, %v898
      %v902 = vmul.f32 %v710, %v898
      %v903 = vmul.f32 %v711, %v898
      %v904 = vmul.f32 %v712, %v898
      %v905 = vmul.f32 %v713, %v898
      %v906 = vmul.f32 %v714, %v898
      %v908 = vlaneseq
      %v909 = vshrl.u32 %v908, 7
      %v910 = vsub.s32 0, %v909
      %v911 = vrot.slane %v532, %v910
      %v913 = vadd.f32 %v899, %v911
      %v914 = vadd.f32 %v900, %v911
      %v915 = vadd.f32 %v901, %v911
      %v916 = vadd.f32 %v902, %v911
      %v917 = vadd.f32 %v903, %v911
      %v918 = vadd.f32 %v904, %v911
      %v919 = vadd.f32 %v905, %v911
      %v920 = vadd.f32 %v906, %v911
      %v921 = vxor.u32 %v913, 2147483648
      %v922 = vxor.u32 %v914, 2147483648
      %v923 = vxor.u32 %v915, 2147483648
      %v924 = vxor.u32 %v916, 2147483648
      %v925 = vxor.u32 %v917, 2147483648
      %v926 = vxor.u32 %v918, 2147483648
      %v927 = vxor.u32 %v919, 2147483648
      %v928 = vxor.u32 %v920, 2147483648
      %v929 = vmul.f32 %v921, 1.442695
      %v930 = vpow.pop %v929
      %v931 = vmul.f32 %v922, 1.442695
      %v932 = vpow.pop %v931
      %v933 = vmul.f32 %v923, 1.442695
      %v934 = vpow.pop %v933
      %v935 = vmul.f32 %v924, 1.442695
      %v936 = vpow.pop %v935
      %v937 = vmul.f32 %v925, 1.442695
      %v938 = vpow.pop %v937
      %v939 = vmul.f32 %v926, 1.442695
      %v940 = vpow.pop %v939
      %v941 = vmul.f32 %v927, 1.442695
      %v942 = vpow.pop %v941
      %v943 = vmul.f32 %v928, 1.442695
      %v944 = vpow.pop %v943
      %v945 = vadd.f32 %v930, 1.0
      %v946 = vadd.f32 %v932, 1.0
      %v947 = vadd.f32 %v934, 1.0
      %v948 = vadd.f32 %v936, 1.0
      %v949 = vadd.f32 %v938, 1.0
      %v950 = vadd.f32 %v940, 1.0
      %v951 = vadd.f32 %v942, 1.0
      %v952 = vadd.f32 %v944, 1.0
      %v953 = vrcp.pop %v945
      %v954 = vmul.f32 1.0, %v953
      %v955 = vrcp.pop %v946
      %v956 = vmul.f32 1.0, %v955
      %v957 = vrcp.pop %v947
      %v958 = vmul.f32 1.0, %v957
      %v959 = vrcp.pop %v948
      %v960 = vmul.f32 1.0, %v959
      %v961 = vrcp.pop %v949
      %v962 = vmul.f32 1.0, %v961
      %v963 = vrcp.pop %v950
      %v964 = vmul.f32 1.0, %v963
      %v965 = vrcp.pop %v951
      %v966 = vmul.f32 1.0, %v965
      %v967 = vrcp.pop %v952
      %v968 = vmul.f32 1.0, %v967
      %v969 = vmul.f32 %v913, %v954
      %v970 = vmul.f32 %v914, %v956
      %v971 = vmul.f32 %v915, %v958
      %v972 = vmul.f32 %v916, %v960
      %v973 = vmul.f32 %v917, %v962
      %v974 = vmul.f32 %v918, %v964
      %v975 = vmul.f32 %v919, %v966
      %v976 = vmul.f32 %v920, %v968
      %v977 = vld [vmem:[%s9] sm:$0x1]
      %v978 = vpack.c.bf16 %v970, %v969
      %v979 = vpack.c.bf16 %v972, %v971
      %v980 = vpack.c.bf16 %v974, %v973
      %v981 = vpack.c.bf16 %v976, %v975
      %v986 = vunpack.c.l.b16 %v978
      %v987 = vunpack.c.h.b16 %v978
      %v988 = vunpack.c.l.b16 %v979
      %v989 = vunpack.c.h.b16 %v979
      %v990 = vunpack.c.l.b16 %v980
      %v991 = vunpack.c.h.b16 %v980
      %v992 = vunpack.c.l.b16 %v981
      %v993 = vunpack.c.h.b16 %v981
      %v994 = vpack.c.b16 %v986, %v986
      %v995 = vpack.c.b16 %v987, %v987
      %v996 = vpack.c.b16 %v988, %v988
      %v997 = vpack.c.b16 %v989, %v989
      %v998 = vpack.c.b16 %v990, %v990
      %v999 = vpack.c.b16 %v991, %v991
      %v1000 = vpack.c.b16 %v992, %v992
      %v1001 = vpack.c.b16 %v993, %v993
      %vm1002 = vsmask.f32 4368
      %vm1003 = vmor %vm518, %vm1002
      %v1005 = vshrl.u32 %v994, 16
      %v1007 = vrot.slane %v1005, 7
      %v1008 = vshll.u32 %v994, 16
      %v1010 = vor.u32 %v1007, %v1008
      %v1011 = vrot.slane %v1007, 4
      %v1013 = vshrl.u32 %v995, 16
      %v1015 = vrot.slane %v1013, 7
      %v1016 = vshll.u32 %v995, 16
      %v1018 = vor.u32 %v1015, %v1016
      %v1019 = vsel %vm1003, %v1011, %v1018
      %v1020 = vrot.slane %v1015, 4
      %v1022 = vshrl.u32 %v996, 16
      %v1024 = vrot.slane %v1022, 7
      %v1025 = vshll.u32 %v996, 16
      %v1027 = vor.u32 %v1024, %v1025
      %v1028 = vsel %vm1003, %v1020, %v1027
      %v1029 = vrot.slane %v1024, 4
      %v1031 = vshrl.u32 %v997, 16
      %v1033 = vrot.slane %v1031, 7
      %v1034 = vshll.u32 %v997, 16
      %v1036 = vor.u32 %v1033, %v1034
      %v1037 = vsel %vm1003, %v1029, %v1036
      %v1038 = vrot.slane %v1033, 4
      %v1040 = vshrl.u32 %v998, 16
      %v1042 = vrot.slane %v1040, 7
      %v1043 = vshll.u32 %v998, 16
      %v1045 = vor.u32 %v1042, %v1043
      %v1046 = vsel %vm1003, %v1038, %v1045
      %v1047 = vrot.slane %v1042, 4
      %v1049 = vshrl.u32 %v999, 16
      %v1051 = vrot.slane %v1049, 7
      %v1052 = vshll.u32 %v999, 16
      %v1054 = vor.u32 %v1051, %v1052
      %v1055 = vsel %vm1003, %v1047, %v1054
      %v1056 = vrot.slane %v1051, 4
      %v1058 = vshrl.u32 %v1000, 16
      %v1060 = vrot.slane %v1058, 7
      %v1061 = vshll.u32 %v1000, 16
      %v1063 = vor.u32 %v1060, %v1061
      %v1064 = vsel %vm1003, %v1056, %v1063
      %v1065 = vrot.slane %v1060, 4
      %v1067 = vshrl.u32 %v1001, 16
      %v1069 = vrot.slane %v1067, 7
      %v1070 = vshll.u32 %v1001, 16
      %v1072 = vor.u32 %v1069, %v1070
      %v1073 = vsel %vm1003, %v1065, %v1072
      %v1074 = vrot.slane %v1069, 4
      %v1084 = vld [vmem:[#allocation2 + $0x4] sm:$0xf]
      %v1085 = vsel %vm525, %v1010, %v1084
      %1086 = vst [vmem:[#allocation2 + $0x4] sm:$0xf] %v1085
      %1087 = vst.msk [vmem:[#allocation2 + $0x8] sm:$0xf] %vm515, %v1019
      %1088 = vst.msk [vmem:[#allocation2 + $0xc] sm:$0xf] %vm515, %v1028
      %1089 = vst.msk [vmem:[#allocation2 + $0x10] sm:$0xf] %vm515, %v1037
      %1090 = vst.msk [vmem:[#allocation2 + $0x14] sm:$0xf] %vm515, %v1046
      %1091 = vst.msk [vmem:[#allocation2 + $0x18] sm:$0xf] %vm515, %v1055
      %1092 = vst.msk [vmem:[#allocation2 + $0x1c] sm:$0xf] %vm515, %v1064
      %1093 = vst.msk [vmem:[#allocation2 + $0x20] sm:$0xf] %vm515, %v1073
      %v1094 = vld [vmem:[#allocation2 + $0x24] sm:$0x1]
      %v1095 = vsel %vm519, %v1074, %v1094
      %1096 = vst [vmem:[#allocation2 + $0x24] sm:$0x1] %v1095
      %v1097 = vld [vmem:[#allocation2] sm:$0xf]
      %v1098 = vld [vmem:[#allocation2 + $0x4] sm:$0xf]
      %v1099 = vld [vmem:[#allocation2 + $0x8] sm:$0xf]
      %v1100 = vld [vmem:[#allocation2 + $0xc] sm:$0xf]
      %v1101 = vld [vmem:[#allocation2 + $0x10] sm:$0xf]
      %v1102 = vld [vmem:[#allocation2 + $0x14] sm:$0xf]
      %v1103 = vld [vmem:[#allocation2 + $0x18] sm:$0xf]
      %v1104 = vld [vmem:[#allocation2 + $0x1c] sm:$0xf]
      %1106 = vset.pattern.permute.xlu0 0
      %1107 = vperm.xlu0 %1106, %v491
      %v1108 = vpop.permute.xlu0 %1107
      %v1111 = vunpack.c.l.s4 839922192
      %v1112 = vunpack.c.0.s8 %v1111
      %v1113 = vlaneseq
      %v1114 = vshrl.u32 %v1113, 7
      %v1115 = vsub.s32 %v1112, %v1114
      %v1116 = vrot.slane %v1108, %v1115
      %1118 = vset.pattern.permute.xlu0 0
      %1119 = vperm.xlu0 %1118, %v492
      %v1120 = vpop.permute.xlu0 %1119
      %v1123 = vunpack.c.l.s4 839922192
      %v1124 = vunpack.c.0.s8 %v1123
      %v1125 = vlaneseq
      %v1126 = vshrl.u32 %v1125, 7
      %v1127 = vsub.s32 %v1124, %v1126
      %v1128 = vrot.slane %v1120, %v1127
      %1130 = vset.pattern.permute.xlu0 0
      %1131 = vperm.xlu0 %1130, %v493
      %v1132 = vpop.permute.xlu0 %1131
      %v1135 = vunpack.c.l.s4 839922192
      %v1136 = vunpack.c.0.s8 %v1135
      %v1137 = vlaneseq
      %v1138 = vshrl.u32 %v1137, 7
      %v1139 = vsub.s32 %v1136, %v1138
      %v1140 = vrot.slane %v1132, %v1139
      %1142 = vset.pattern.permute.xlu0 0
      %1143 = vperm.xlu0 %1142, %v494
      %v1144 = vpop.permute.xlu0 %1143
      %v1147 = vunpack.c.l.s4 839922192
      %v1148 = vunpack.c.0.s8 %v1147
      %v1149 = vlaneseq
      %v1150 = vshrl.u32 %v1149, 7
      %v1151 = vsub.s32 %v1148, %v1150
      %v1152 = vrot.slane %v1144, %v1151
      %1154 = vset.pattern.permute.xlu0 0
      %1155 = vperm.xlu0 %1154, %v495
      %v1156 = vpop.permute.xlu0 %1155
      %v1159 = vunpack.c.l.s4 839922192
      %v1160 = vunpack.c.0.s8 %v1159
      %v1161 = vlaneseq
      %v1162 = vshrl.u32 %v1161, 7
      %v1163 = vsub.s32 %v1160, %v1162
      %v1164 = vrot.slane %v1156, %v1163
      %1166 = vset.pattern.permute.xlu0 0
      %1167 = vperm.xlu0 %1166, %v496
      %v1168 = vpop.permute.xlu0 %1167
      %v1171 = vunpack.c.l.s4 839922192
      %v1172 = vunpack.c.0.s8 %v1171
      %v1173 = vlaneseq
      %v1174 = vshrl.u32 %v1173, 7
      %v1175 = vsub.s32 %v1172, %v1174
      %v1176 = vrot.slane %v1168, %v1175
      %1178 = vset.pattern.permute.xlu0 0
      %1179 = vperm.xlu0 %1178, %v497
      %v1180 = vpop.permute.xlu0 %1179
      %v1183 = vunpack.c.l.s4 839922192
      %v1184 = vunpack.c.0.s8 %v1183
      %v1185 = vlaneseq
      %v1186 = vshrl.u32 %v1185, 7
      %v1187 = vsub.s32 %v1184, %v1186
      %v1188 = vrot.slane %v1180, %v1187
      %1190 = vset.pattern.permute.xlu0 0
      %1191 = vperm.xlu0 %1190, %v498
      %v1192 = vpop.permute.xlu0 %1191
      %v1195 = vunpack.c.l.s4 839922192
      %v1196 = vunpack.c.0.s8 %v1195
      %v1197 = vlaneseq
      %v1198 = vshrl.u32 %v1197, 7
      %v1199 = vsub.s32 %v1196, %v1198
      %v1200 = vrot.slane %v1192, %v1199
      %v1201 = vmul.bf16 %v1097, %v1116
      %v1202 = vmul.bf16 %v1098, %v1128
      %v1203 = vmul.bf16 %v1099, %v1140
      %v1204 = vmul.bf16 %v1100, %v1152
      %v1205 = vmul.bf16 %v1101, %v1164
      %v1206 = vmul.bf16 %v1102, %v1176
      %v1207 = vmul.bf16 %v1103, %v1188
      %v1208 = vmul.bf16 %v1104, %v1200
      %v1209 = vld [vmem:[%s8] sm:$0xf]
      %v1210 = vld [vmem:[%s8 + $0x4] sm:$0xf]
      %v1211 = vld [vmem:[%s8 + $0x8] sm:$0xf]
      %v1212 = vld [vmem:[%s8 + $0xc] sm:$0xf]
      %v1213 = vld [vmem:[#allocation2] sm:$0xf]
      %v1214 = vld [vmem:[#allocation2 + $0x4] sm:$0xf]
      %v1215 = vld [vmem:[#allocation2 + $0x8] sm:$0xf]
      %v1216 = vld [vmem:[#allocation2 + $0xc] sm:$0xf]
      %v1217 = vld [vmem:[#allocation2 + $0x10] sm:$0xf]
      %v1218 = vld [vmem:[#allocation2 + $0x14] sm:$0xf]
      %v1219 = vld [vmem:[#allocation2 + $0x18] sm:$0xf]
      %v1220 = vld [vmem:[#allocation2 + $0x1c] sm:$0xf]
      %v1221 = vld [vmem:[#allocation2 + $0x20] sm:$0x1]
      %v1222 = vld [vmem:[%s8 + $0x10] sm:$0xf]
      %v1223 = vld [vmem:[%s8 + $0x14] sm:$0xf]
      %v1224 = vld [vmem:[%s8 + $0x18] sm:$0xf]
      %v1225 = vld [vmem:[%s8 + $0x1c] sm:$0xf]
      %v1235 = vunpack.c.l.b16 %v1213
      %v1236 = vunpack.c.l.b16 %v1214
      %v1237 = vunpack.c.l.b16 %v1215
      %v1238 = vunpack.c.l.b16 %v1216
      %v1239 = vunpack.c.l.b16 %v1217
      %v1240 = vunpack.c.l.b16 %v1218
      %v1241 = vunpack.c.l.b16 %v1219
      %v1242 = vunpack.c.l.b16 %v1220
      %v1243 = vunpack.c.l.b16 %v1221
      %v1244 = vpack.c.b16 %v1236, %v1235
      %v1245 = vpack.c.b16 %v1238, %v1237
      %v1246 = vpack.c.b16 %v1240, %v1239
      %v1247 = vpack.c.b16 %v1242, %v1241
      %v1248 = vpack.c.b16 %v1243, %v1243
      %vm1249 = vsmask.f32 7424
      %v1251 = vshrl.u32 %v1244, 16
      %v1253 = vshll.u32 %v1244, 16
      %v1255 = vrot.slane %v1253, 1
      %v1256 = vor.u32 %v1251, %v1255
      %v1258 = vshll.u32 %v1245, 16
      %v1260 = vrot.slane %v1258, 1
      %v1261 = vsel %vm1249, %v1256, %v1260
      %v1262 = vshrl.u32 %v1245, 16
      %v1264 = vor.u32 %v1262, %v1260
      %v1266 = vshll.u32 %v1246, 16
      %v1268 = vrot.slane %v1266, 1
      %v1269 = vsel %vm1249, %v1264, %v1268
      %v1270 = vshrl.u32 %v1246, 16
      %v1272 = vor.u32 %v1270, %v1268
      %v1274 = vshll.u32 %v1247, 16
      %v1276 = vrot.slane %v1274, 1
      %v1277 = vsel %vm1249, %v1272, %v1276
      %v1278 = vshrl.u32 %v1247, 16
      %v1280 = vor.u32 %v1278, %v1276
      %v1282 = vshll.u32 %v1248, 16
      %v1284 = vrot.slane %v1282, 1
      %v1285 = vsel %vm1249, %v1280, %v1284
      %v1290 = vunpack.c.l.b16 %v1222
      %v1291 = vunpack.c.l.b16 %v1223
      %v1292 = vunpack.c.l.b16 %v1224
      %v1293 = vunpack.c.l.b16 %v1225
      %v1294 = vpack.c.b16 %v1291, %v1290
      %v1295 = vpack.c.b16 %v1293, %v1292
      %v1299 = vsel %vm533, %v1261, 0
      %v1302 = vsel %vm533, %v1269, 0
      %v1305 = vsel %vm533, %v1277, 0
      %v1308 = vsel %vm533, %v1285, 0
      %1310 = vmatprep.subr.bf16.mxu0 0
      %1311 = vmatpush1.bf16.msra.mxu0 %v1294
      %1312 = vmatprep.subr.bf16.mxu0 0
      %1313 = vmatpush1.bf16.msra.mxu0 %v1295
      %1314 = vmatprep.subr.bf16.mxu0 0
      %1315 = vmatpush1.bf16.msra.mxu0 0
      %1316 = vmatprep.subr.bf16.mxu0 0
      %1317 = vmatpush1.bf16.msra.mxu0 0
      %1318 = vmatprep.subr.bf16.mxu0 0
      %1319 = vmatpush1.bf16.msra.mxu0 0
      %1320 = vmatprep.subr.bf16.mxu0 0
      %1321 = vmatpush1.bf16.msra.mxu0 0
      %1322 = vmatprep.subr.bf16.mxu0 0
      %1323 = vmatpush1.bf16.msra.mxu0 0
      %1324 = vmatprep.subr.bf16.mxu0 0
      %1325 = vmatpush1.bf16.msra.mxu0 0
      %1326 = vmatprep.subr.bf16.mxu0 0
      %1327 = vmatpush1.bf16.msra.mxu0 0
      %1328 = vmatprep.subr.bf16.mxu0 0
      %1329 = vmatpush1.bf16.msra.mxu0 0
      %1330 = vmatprep.subr.bf16.mxu0 0
      %1331 = vmatpush1.bf16.msra.mxu0 0
      %1332 = vmatprep.subr.bf16.mxu0 0
      %1333 = vmatpush1.bf16.msra.mxu0 0
      %1334 = vmatprep.subr.bf16.mxu0 0
      %1335 = vmatpush1.bf16.msra.mxu0 0
      %1336 = vmatprep.subr.bf16.mxu0 0
      %1337 = vmatpush1.bf16.msra.mxu0 0
      %1338 = vmatprep.subr.bf16.mxu0 0
      %1339 = vmatpush1.bf16.msra.mxu0 0
      %1340 = vmatprep.subr.bf16.mxu0 0
      %1341 = vmatpush1.bf16.msra.mxu0 0
      %1342 = vmatprep.mubr.bf16.mxu0 0
      %1343 = vmatmul.mubr.bf16.gmra.mrb[0].mxu0 %v1299
      %v1344 = vpop.f32.mrb[0].mxu0
      %v1345 = vadd.f32 0.0, %v1344
      %v1346 = vpop.f32.mrb[0].mxu0
      %v1347 = vpop.f32.mrb[0].mxu0
      %v1348 = vadd.f32 0.0, %v1347
      %v1349 = vpop.f32.mrb[0].mxu0
      %1350 = vmatprep.mubr.bf16.mxu0 0
      %1351 = vmatmul.mubr.bf16.gmra.mrb[0].mxu0 %v1302
      %v1352 = vpop.f32.mrb[0].mxu0
      %v1353 = vadd.f32 0.0, %v1352
      %v1354 = vpop.f32.mrb[0].mxu0
      %v1355 = vpop.f32.mrb[0].mxu0
      %v1356 = vadd.f32 0.0, %v1355
      %v1357 = vpop.f32.mrb[0].mxu0
      %1358 = vmatprep.mubr.bf16.mxu0 0
      %1359 = vmatmul.mubr.bf16.gmra.mrb[0].mxu0 %v1305
      %v1360 = vpop.f32.mrb[0].mxu0
      %v1361 = vadd.f32 0.0, %v1360
      %v1362 = vpop.f32.mrb[0].mxu0
      %v1363 = vpop.f32.mrb[0].mxu0
      %v1364 = vadd.f32 0.0, %v1363
      %v1365 = vpop.f32.mrb[0].mxu0
      %1366 = vmatprep.mubr.bf16.mxu0 0
      %1367 = vmatmul.mubr.bf16.gmra.mrb[0].mxu0 %v1308
      %v1368 = vpop.f32.mrb[0].mxu0
      %v1369 = vadd.f32 0.0, %v1368
      %v1370 = vpop.f32.mrb[0].mxu0
      %v1371 = vpop.f32.mrb[0].mxu0
      %v1372 = vadd.f32 0.0, %v1371
      %v1373 = vpop.f32.mrb[0].mxu0
      %1374 = vdwg.mxu0
      %v1383 = vunpack.c.l.b16 %v1201
      %v1384 = vunpack.c.l.b16 %v1202
      %v1385 = vunpack.c.l.b16 %v1203
      %v1386 = vunpack.c.l.b16 %v1204
      %v1387 = vunpack.c.l.b16 %v1205
      %v1388 = vunpack.c.l.b16 %v1206
      %v1389 = vunpack.c.l.b16 %v1207
      %v1390 = vunpack.c.l.b16 %v1208
      %v1391 = vpack.c.b16 %v1384, %v1383
      %v1392 = vpack.c.b16 %v1386, %v1385
      %v1393 = vpack.c.b16 %v1388, %v1387
      %v1394 = vpack.c.b16 %v1390, %v1389
      %v1399 = vunpack.c.l.b16 %v1209
      %v1400 = vunpack.c.l.b16 %v1210
      %v1401 = vunpack.c.l.b16 %v1211
      %v1402 = vunpack.c.l.b16 %v1212
      %v1403 = vpack.c.b16 %v1400, %v1399
      %v1404 = vpack.c.b16 %v1402, %v1401
      %v1408 = vsel %vm533, %v1391, 0
      %v1411 = vsel %vm533, %v1392, 0
      %v1414 = vsel %vm533, %v1393, 0
      %v1417 = vsel %vm533, %v1394, 0
      %1419 = vmatprep.subr.bf16.mxu0 0
      %1420 = vmatpush1.bf16.msra.mxu0 %v1403
      %1421 = vmatprep.subr.bf16.mxu0 0
      %1422 = vmatpush1.bf16.msra.mxu0 %v1404
      %1423 = vmatprep.subr.bf16.mxu0 0
      %1424 = vmatpush1.bf16.msra.mxu0 0
      %1425 = vmatprep.subr.bf16.mxu0 0
      %1426 = vmatpush1.bf16.msra.mxu0 0
      %1427 = vmatprep.subr.bf16.mxu0 0
      %1428 = vmatpush1.bf16.msra.mxu0 0
      %1429 = vmatprep.subr.bf16.mxu0 0
      %1430 = vmatpush1.bf16.msra.mxu0 0
      %1431 = vmatprep.subr.bf16.mxu0 0
      %1432 = vmatpush1.bf16.msra.mxu0 0
      %1433 = vmatprep.subr.bf16.mxu0 0
      %1434 = vmatpush1.bf16.msra.mxu0 0
      %1435 = vmatprep.subr.bf16.mxu0 0
      %1436 = vmatpush1.bf16.msra.mxu0 0
      %1437 = vmatprep.subr.bf16.mxu0 0
      %1438 = vmatpush1.bf16.msra.mxu0 0
      %1439 = vmatprep.subr.bf16.mxu0 0
      %1440 = vmatpush1.bf16.msra.mxu0 0
      %1441 = vmatprep.subr.bf16.mxu0 0
      %1442 = vmatpush1.bf16.msra.mxu0 0
      %1443 = vmatprep.subr.bf16.mxu0 0
      %1444 = vmatpush1.bf16.msra.mxu0 0
      %1445 = vmatprep.subr.bf16.mxu0 0
      %1446 = vmatpush1.bf16.msra.mxu0 0
      %1447 = vmatprep.subr.bf16.mxu0 0
      %1448 = vmatpush1.bf16.msra.mxu0 0
      %1449 = vmatprep.subr.bf16.mxu0 0
      %1450 = vmatpush1.bf16.msra.mxu0 0
      %1451 = vmatprep.mubr.bf16.mxu0 0
      %1452 = vmatmul.mubr.bf16.gmra.mrb[0].mxu0 %v1408
      %v1453 = vpop.f32.mrb[0].mxu0
      %v1454 = vadd.f32 %v1345, %v1453
      %v1455 = vpop.f32.mrb[0].mxu0
      %v1456 = vpop.f32.mrb[0].mxu0
      %v1457 = vadd.f32 %v1348, %v1456
      %v1458 = vpop.f32.mrb[0].mxu0
      %1459 = vmatprep.mubr.bf16.mxu0 0
      %1460 = vmatmul.mubr.bf16.gmra.mrb[0].mxu0 %v1411
      %v1461 = vpop.f32.mrb[0].mxu0
      %v1462 = vadd.f32 %v1353, %v1461
      %v1463 = vpop.f32.mrb[0].mxu0
      %v1464 = vpop.f32.mrb[0].mxu0
      %v1465 = vadd.f32 %v1356, %v1464
      %v1466 = vpop.f32.mrb[0].mxu0
      %1467 = vmatprep.mubr.bf16.mxu0 0
      %1468 = vmatmul.mubr.bf16.gmra.mrb[0].mxu0 %v1414
      %v1469 = vpop.f32.mrb[0].mxu0
      %v1470 = vadd.f32 %v1361, %v1469
      %v1471 = vpop.f32.mrb[0].mxu0
      %v1472 = vpop.f32.mrb[0].mxu0
      %v1473 = vadd.f32 %v1364, %v1472
      %v1474 = vpop.f32.mrb[0].mxu0
      %1475 = vmatprep.mubr.bf16.mxu0 0
      %1476 = vmatmul.mubr.bf16.gmra.mrb[0].mxu0 %v1417
      %v1477 = vpop.f32.mrb[0].mxu0
      %v1478 = vadd.f32 %v1369, %v1477
      %v1479 = vpop.f32.mrb[0].mxu0
      %v1480 = vpop.f32.mrb[0].mxu0
      %v1481 = vadd.f32 %v1372, %v1480
      %v1482 = vpop.f32.mrb[0].mxu0
      %1483 = vdwg.mxu0
      %v1484 = vld [vmem:[#allocation2] sm:$0xe]
      %1486 = vset.pattern.permute.xlu0 0
      %1487 = vperm.xlu0 %1486, %v499
      %v1488 = vpop.permute.xlu0 %1487
      %v1491 = vunpack.c.l.s4 839922192
      %v1492 = vunpack.c.0.s8 %v1491
      %v1493 = vlaneseq
      %v1494 = vshrl.u32 %v1493, 7
      %v1495 = vsub.s32 %v1492, %v1494
      %v1496 = vrot.slane %v1488, %v1495
      %1498 = vset.pattern.permute.xlu0 0
      %1499 = vperm.xlu0 %1498, %v500
      %v1500 = vpop.permute.xlu0 %1499
      %v1503 = vunpack.c.l.s4 839922192
      %v1504 = vunpack.c.0.s8 %v1503
      %v1505 = vlaneseq
      %v1506 = vshrl.u32 %v1505, 7
      %v1507 = vsub.s32 %v1504, %v1506
      %v1508 = vrot.slane %v1500, %v1507
      %1510 = vset.pattern.permute.xlu0 0
      %1511 = vperm.xlu0 %1510, %v501
      %v1512 = vpop.permute.xlu0 %1511
      %v1515 = vunpack.c.l.s4 839922192
      %v1516 = vunpack.c.0.s8 %v1515
      %v1517 = vlaneseq
      %v1518 = vshrl.u32 %v1517, 7
      %v1519 = vsub.s32 %v1516, %v1518
      %v1520 = vrot.slane %v1512, %v1519
      %1522 = vset.pattern.permute.xlu0 0
      %1523 = vperm.xlu0 %1522, %v502
      %v1524 = vpop.permute.xlu0 %1523
      %v1527 = vunpack.c.l.s4 839922192
      %v1528 = vunpack.c.0.s8 %v1527
      %v1529 = vlaneseq
      %v1530 = vshrl.u32 %v1529, 7
      %v1531 = vsub.s32 %v1528, %v1530
      %v1532 = vrot.slane %v1524, %v1531
      %1534 = vset.pattern.permute.xlu0 0
      %1535 = vperm.xlu0 %1534, %v503
      %v1536 = vpop.permute.xlu0 %1535
      %v1539 = vunpack.c.l.s4 839922192
      %v1540 = vunpack.c.0.s8 %v1539
      %v1541 = vlaneseq
      %v1542 = vshrl.u32 %v1541, 7
      %v1543 = vsub.s32 %v1540, %v1542
      %v1544 = vrot.slane %v1536, %v1543
      %1546 = vset.pattern.permute.xlu0 0
      %1547 = vperm.xlu0 %1546, %v504
      %v1548 = vpop.permute.xlu0 %1547
      %v1551 = vunpack.c.l.s4 839922192
      %v1552 = vunpack.c.0.s8 %v1551
      %v1553 = vlaneseq
      %v1554 = vshrl.u32 %v1553, 7
      %v1555 = vsub.s32 %v1552, %v1554
      %v1556 = vrot.slane %v1548, %v1555
      %1558 = vset.pattern.permute.xlu0 0
      %1559 = vperm.xlu0 %1558, %v505
      %v1560 = vpop.permute.xlu0 %1559
      %v1563 = vunpack.c.l.s4 839922192
      %v1564 = vunpack.c.0.s8 %v1563
      %v1565 = vlaneseq
      %v1566 = vshrl.u32 %v1565, 7
      %v1567 = vsub.s32 %v1564, %v1566
      %v1568 = vrot.slane %v1560, %v1567
      %1570 = vset.pattern.permute.xlu0 0
      %1571 = vperm.xlu0 %1570, %v506
      %v1572 = vpop.permute.xlu0 %1571
      %v1575 = vunpack.c.l.s4 839922192
      %v1576 = vunpack.c.0.s8 %v1575
      %v1577 = vlaneseq
      %v1578 = vshrl.u32 %v1577, 7
      %v1579 = vsub.s32 %v1576, %v1578
      %v1580 = vrot.slane %v1572, %v1579
      %vm1589 = vcmask 1040384
      %vm1590 = vcmask 1044484
      %vm1591 = vmor %vm1589, %vm1590
      %v1592 = vrot.slane %v1496, 7
      %v1593 = vrot.slane %v1592, 4
      %v1594 = vrot.slane %v1508, 7
      %v1595 = vsel %vm1591, %v1593, %v1594
      %v1596 = vrot.slane %v1594, 4
      %v1597 = vrot.slane %v1520, 7
      %v1598 = vsel %vm1591, %v1596, %v1597
      %v1599 = vrot.slane %v1597, 4
      %v1600 = vrot.slane %v1532, 7
      %v1601 = vsel %vm1591, %v1599, %v1600
      %v1602 = vrot.slane %v1600, 4
      %v1603 = vrot.slane %v1544, 7
      %v1604 = vsel %vm1591, %v1602, %v1603
      %v1605 = vrot.slane %v1603, 4
      %v1606 = vrot.slane %v1556, 7
      %v1607 = vsel %vm1591, %v1605, %v1606
      %v1608 = vrot.slane %v1606, 4
      %v1609 = vrot.slane %v1568, 7
      %v1610 = vsel %vm1591, %v1608, %v1609
      %v1611 = vrot.slane %v1609, 4
      %v1612 = vrot.slane %v1580, 7
      %v1613 = vsel %vm1591, %v1611, %v1612
      %v1614 = vrot.slane %v1612, 4
      %v1624 = vmul.bf16 %v1484, %v1592
      %v1625 = vmul.bf16 %v1214, %v1595
      %v1626 = vmul.bf16 %v1215, %v1598
      %v1627 = vmul.bf16 %v1216, %v1601
      %v1628 = vmul.bf16 %v1217, %v1604
      %v1629 = vmul.bf16 %v1218, %v1607
      %v1630 = vmul.bf16 %v1219, %v1610
      %v1631 = vmul.bf16 %v1220, %v1613
      %v1632 = vmul.bf16 %v1221, %v1614
      %v1633 = vld [vmem:[%s8 + $0x20] sm:$0xf]
      %v1634 = vld [vmem:[%s8 + $0x24] sm:$0xf]
      %v1635 = vld [vmem:[%s8 + $0x28] sm:$0xf]
      %v1636 = vld [vmem:[%s8 + $0x2c] sm:$0xf]
      %v1646 = vunpack.c.l.b16 %v1624
      %v1647 = vunpack.c.l.b16 %v1625
      %v1648 = vunpack.c.l.b16 %v1626
      %v1649 = vunpack.c.l.b16 %v1627
      %v1650 = vunpack.c.l.b16 %v1628
      %v1651 = vunpack.c.l.b16 %v1629
      %v1652 = vunpack.c.l.b16 %v1630
      %v1653 = vunpack.c.l.b16 %v1631
      %v1654 = vunpack.c.l.b16 %v1632
      %v1655 = vpack.c.b16 %v1647, %v1646
      %v1656 = vpack.c.b16 %v1649, %v1648
      %v1657 = vpack.c.b16 %v1651, %v1650
      %v1658 = vpack.c.b16 %v1653, %v1652
      %v1659 = vpack.c.b16 %v1654, %v1654
      %vm1660 = vcmask 1046528
      %v1661 = vrot.slane %v1655, 1
      %v1662 = vrot.slane %v1656, 1
      %v1663 = vsel %vm1660, %v1661, %v1662
      %v1664 = vrot.slane %v1657, 1
      %v1665 = vsel %vm1660, %v1662, %v1664
      %v1666 = vrot.slane %v1658, 1
      %v1667 = vsel %vm1660, %v1664, %v1666
      %v1668 = vrot.slane %v1659, 1
      %v1669 = vsel %vm1660, %v1666, %v1668
      %v1674 = vunpack.c.l.b16 %v1633
      %v1675 = vunpack.c.l.b16 %v1634
      %v1676 = vunpack.c.l.b16 %v1635
      %v1677 = vunpack.c.l.b16 %v1636
      %v1678 = vpack.c.b16 %v1675, %v1674
      %v1679 = vpack.c.b16 %v1677, %v1676
      %v1683 = vsel %vm533, %v1663, 0
      %v1686 = vsel %vm533, %v1665, 0
      %v1689 = vsel %vm533, %v1667, 0
      %v1692 = vsel %vm533, %v1669, 0
      %1694 = vmatprep.subr.bf16.mxu0 0
      %1695 = vmatpush1.bf16.msra.mxu0 %v1678
      %1696 = vmatprep.subr.bf16.mxu0 0
      %1697 = vmatpush1.bf16.msra.mxu0 %v1679
      %1698 = vmatprep.subr.bf16.mxu0 0
      %1699 = vmatpush1.bf16.msra.mxu0 0
      %1700 = vmatprep.subr.bf16.mxu0 0
      %1701 = vmatpush1.bf16.msra.mxu0 0
      %1702 = vmatprep.subr.bf16.mxu0 0
      %1703 = vmatpush1.bf16.msra.mxu0 0
      %1704 = vmatprep.subr.bf16.mxu0 0
      %1705 = vmatpush1.bf16.msra.mxu0 0
      %1706 = vmatprep.subr.bf16.mxu0 0
      %1707 = vmatpush1.bf16.msra.mxu0 0
      %1708 = vmatprep.subr.bf16.mxu0 0
      %1709 = vmatpush1.bf16.msra.mxu0 0
      %1710 = vmatprep.subr.bf16.mxu0 0
      %1711 = vmatpush1.bf16.msra.mxu0 0
      %1712 = vmatprep.subr.bf16.mxu0 0
      %1713 = vmatpush1.bf16.msra.mxu0 0
      %1714 = vmatprep.subr.bf16.mxu0 0
      %1715 = vmatpush1.bf16.msra.mxu0 0
      %1716 = vmatprep.subr.bf16.mxu0 0
      %1717 = vmatpush1.bf16.msra.mxu0 0
      %1718 = vmatprep.subr.bf16.mxu0 0
      %1719 = vmatpush1.bf16.msra.mxu0 0
      %1720 = vmatprep.subr.bf16.mxu0 0
      %1721 = vmatpush1.bf16.msra.mxu0 0
      %1722 = vmatprep.subr.bf16.mxu0 0
      %1723 = vmatpush1.bf16.msra.mxu0 0
      %1724 = vmatprep.subr.bf16.mxu0 0
      %1725 = vmatpush1.bf16.msra.mxu0 0
      %1726 = vmatprep.mubr.bf16.mxu0 0
      %1727 = vmatmul.mubr.bf16.gmra.mrb[0].mxu0 %v1683
      %v1728 = vpop.f32.mrb[0].mxu0
      %v1729 = vadd.f32 0.0, %v1728
      %v1730 = vpop.f32.mrb[0].mxu0
      %v1731 = vpop.f32.mrb[0].mxu0
      %v1732 = vadd.f32 0.0, %v1731
      %v1733 = vpop.f32.mrb[0].mxu0
      %1734 = vmatprep.mubr.bf16.mxu0 0
      %1735 = vmatmul.mubr.bf16.gmra.mrb[0].mxu0 %v1686
      %v1736 = vpop.f32.mrb[0].mxu0
      %v1737 = vadd.f32 0.0, %v1736
      %v1738 = vpop.f32.mrb[0].mxu0
      %v1739 = vpop.f32.mrb[0].mxu0
      %v1740 = vadd.f32 0.0, %v1739
      %v1741 = vpop.f32.mrb[0].mxu0
      %1742 = vmatprep.mubr.bf16.mxu0 0
      %1743 = vmatmul.mubr.bf16.gmra.mrb[0].mxu0 %v1689
      %v1744 = vpop.f32.mrb[0].mxu0
      %v1745 = vadd.f32 0.0, %v1744
      %v1746 = vpop.f32.mrb[0].mxu0
      %v1747 = vpop.f32.mrb[0].mxu0
      %v1748 = vadd.f32 0.0, %v1747
      %v1749 = vpop.f32.mrb[0].mxu0
      %1750 = vmatprep.mubr.bf16.mxu0 0
      %1751 = vmatmul.mubr.bf16.gmra.mrb[0].mxu0 %v1692
      %v1752 = vpop.f32.mrb[0].mxu0
      %v1753 = vadd.f32 0.0, %v1752
      %v1754 = vpop.f32.mrb[0].mxu0
      %v1755 = vpop.f32.mrb[0].mxu0
      %v1756 = vadd.f32 0.0, %v1755
      %v1757 = vpop.f32.mrb[0].mxu0
      %1758 = vdwg.mxu0
      %v1759 = vadd.f32 %v1454, %v1729
      %v1760 = vadd.f32 %v1457, %v1732
      %v1761 = vadd.f32 %v1462, %v1737
      %v1762 = vadd.f32 %v1465, %v1740
      %v1763 = vadd.f32 %v1470, %v1745
      %v1764 = vadd.f32 %v1473, %v1748
      %v1765 = vadd.f32 %v1478, %v1753
      %v1766 = vadd.f32 %v1481, %v1756
      %v1767 = vld [vmem:[#allocation2 + $0x20] sm:$0xf]
      %v1768 = vmul.bf16 %v1214, %v1116
      %v1769 = vmul.bf16 %v1215, %v1128
      %v1770 = vmul.bf16 %v1216, %v1140
      %v1771 = vmul.bf16 %v1217, %v1152
      %v1772 = vmul.bf16 %v1218, %v1164
      %v1773 = vmul.bf16 %v1219, %v1176
      %v1774 = vmul.bf16 %v1220, %v1188
      %v1775 = vmul.bf16 %v1767, %v1200
      %v1776 = vld [vmem:[%s8 + $0x30] sm:$0xf]
      %v1777 = vld [vmem:[%s8 + $0x34] sm:$0xf]
      %v1778 = vld [vmem:[%s8 + $0x38] sm:$0xf]
      %v1779 = vld [vmem:[%s8 + $0x3c] sm:$0xf]
      %v1788 = vunpack.c.l.b16 %v1768
      %v1789 = vunpack.c.l.b16 %v1769
      %v1790 = vunpack.c.l.b16 %v1770
      %v1791 = vunpack.c.l.b16 %v1771
      %v1792 = vunpack.c.l.b16 %v1772
      %v1793 = vunpack.c.l.b16 %v1773
      %v1794 = vunpack.c.l.b16 %v1774
      %v1795 = vunpack.c.l.b16 %v1775
      %v1796 = vpack.c.b16 %v1789, %v1788
      %v1797 = vpack.c.b16 %v1791, %v1790
      %v1798 = vpack.c.b16 %v1793, %v1792
      %v1799 = vpack.c.b16 %v1795, %v1794
      %v1804 = vunpack.c.l.b16 %v1776
      %v1805 = vunpack.c.l.b16 %v1777
      %v1806 = vunpack.c.l.b16 %v1778
      %v1807 = vunpack.c.l.b16 %v1779
      %v1808 = vpack.c.b16 %v1805, %v1804
      %v1809 = vpack.c.b16 %v1807, %v1806
      %v1813 = vsel %vm533, %v1796, 0
      %v1816 = vsel %vm533, %v1797, 0
      %v1819 = vsel %vm533, %v1798, 0
      %v1822 = vsel %vm533, %v1799, 0
      %1824 = vmatprep.subr.bf16.mxu0 0
      %1825 = vmatpush1.bf16.msra.mxu0 %v1808
      %1826 = vmatprep.subr.bf16.mxu0 0
      %1827 = vmatpush1.bf16.msra.mxu0 %v1809
      %1828 = vmatprep.subr.bf16.mxu0 0
      %1829 = vmatpush1.bf16.msra.mxu0 0
      %1830 = vmatprep.subr.bf16.mxu0 0
      %1831 = vmatpush1.bf16.msra.mxu0 0
      %1832 = vmatprep.subr.bf16.mxu0 0
      %1833 = vmatpush1.bf16.msra.mxu0 0
      %1834 = vmatprep.subr.bf16.mxu0 0
      %1835 = vmatpush1.bf16.msra.mxu0 0
      %1836 = vmatprep.subr.bf16.mxu0 0
      %1837 = vmatpush1.bf16.msra.mxu0 0
      %1838 = vmatprep.subr.bf16.mxu0 0
      %1839 = vmatpush1.bf16.msra.mxu0 0
      %1840 = vmatprep.subr.bf16.mxu0 0
      %1841 = vmatpush1.bf16.msra.mxu0 0
      %1842 = vmatprep.subr.bf16.mxu0 0
      %1843 = vmatpush1.bf16.msra.mxu0 0
      %1844 = vmatprep.subr.bf16.mxu0 0
      %1845 = vmatpush1.bf16.msra.mxu0 0
      %1846 = vmatprep.subr.bf16.mxu0 0
      %1847 = vmatpush1.bf16.msra.mxu0 0
      %1848 = vmatprep.subr.bf16.mxu0 0
      %1849 = vmatpush1.bf16.msra.mxu0 0
      %1850 = vmatprep.subr.bf16.mxu0 0
      %1851 = vmatpush1.bf16.msra.mxu0 0
      %1852 = vmatprep.subr.bf16.mxu0 0
      %1853 = vmatpush1.bf16.msra.mxu0 0
      %1854 = vmatprep.subr.bf16.mxu0 0
      %1855 = vmatpush1.bf16.msra.mxu0 0
      %1856 = vmatprep.mubr.bf16.mxu0 0
      %1857 = vmatmul.mubr.bf16.gmra.mrb[0].mxu0 %v1813
      %v1858 = vpop.f32.mrb[0].mxu0
      %v1859 = vadd.f32 0.0, %v1858
      %v1860 = vpop.f32.mrb[0].mxu0
      %v1861 = vpop.f32.mrb[0].mxu0
      %v1862 = vadd.f32 0.0, %v1861
      %v1863 = vpop.f32.mrb[0].mxu0
      %1864 = vmatprep.mubr.bf16.mxu0 0
      %1865 = vmatmul.mubr.bf16.gmra.mrb[0].mxu0 %v1816
      %v1866 = vpop.f32.mrb[0].mxu0
      %v1867 = vadd.f32 0.0, %v1866
      %v1868 = vpop.f32.mrb[0].mxu0
      %v1869 = vpop.f32.mrb[0].mxu0
      %v1870 = vadd.f32 0.0, %v1869
      %v1871 = vpop.f32.mrb[0].mxu0
      %1872 = vmatprep.mubr.bf16.mxu0 0
      %1873 = vmatmul.mubr.bf16.gmra.mrb[0].mxu0 %v1819
      %v1874 = vpop.f32.mrb[0].mxu0
      %v1875 = vadd.f32 0.0, %v1874
      %v1876 = vpop.f32.mrb[0].mxu0
      %v1877 = vpop.f32.mrb[0].mxu0
      %v1878 = vadd.f32 0.0, %v1877
      %v1879 = vpop.f32.mrb[0].mxu0
      %1880 = vmatprep.mubr.bf16.mxu0 0
      %1881 = vmatmul.mubr.bf16.gmra.mrb[0].mxu0 %v1822
      %v1882 = vpop.f32.mrb[0].mxu0
      %v1883 = vadd.f32 0.0, %v1882
      %v1884 = vpop.f32.mrb[0].mxu0
      %v1885 = vpop.f32.mrb[0].mxu0
      %v1886 = vadd.f32 0.0, %v1885
      %v1887 = vpop.f32.mrb[0].mxu0
      %1888 = vdwg.mxu0
      %v1889 = vadd.f32 %v1759, %v1859
      %v1890 = vadd.f32 %v1760, %v1862
      %v1891 = vadd.f32 %v1761, %v1867
      %v1892 = vadd.f32 %v1762, %v1870
      %v1893 = vadd.f32 %v1763, %v1875
      %v1894 = vadd.f32 %v1764, %v1878
      %v1895 = vadd.f32 %v1765, %v1883
      %v1896 = vadd.f32 %v1766, %v1886
      %v1897 = vld [vmem:[#allocation2 + $0x4] sm:$0xf]
      %v1898 = vld [vmem:[#allocation2 + $0x8] sm:$0xf]
      %v1899 = vld [vmem:[#allocation2 + $0xc] sm:$0xf]
      %v1900 = vld [vmem:[#allocation2 + $0x10] sm:$0xf]
      %v1901 = vld [vmem:[#allocation2 + $0x14] sm:$0xf]
      %v1902 = vld [vmem:[#allocation2 + $0x18] sm:$0xf]
      %v1903 = vld [vmem:[#allocation2 + $0x1c] sm:$0xf]
      %v1904 = vld [vmem:[#allocation2 + $0x20] sm:$0xf]
      %v1905 = vld [vmem:[#allocation2 + $0x24] sm:$0x1]
      %v1906 = vld [vmem:[%s8 + $0x40] sm:$0xf]
      %v1907 = vld [vmem:[%s8 + $0x44] sm:$0xf]
      %v1908 = vld [vmem:[%s8 + $0x48] sm:$0xf]
      %v1909 = vld [vmem:[%s8 + $0x4c] sm:$0xf]
      %v1919 = vunpack.c.l.b16 %v1897
      %v1920 = vunpack.c.l.b16 %v1898
      %v1921 = vunpack.c.l.b16 %v1899
      %v1922 = vunpack.c.l.b16 %v1900
      %v1923 = vunpack.c.l.b16 %v1901
      %v1924 = vunpack.c.l.b16 %v1902
      %v1925 = vunpack.c.l.b16 %v1903
      %v1926 = vunpack.c.l.b16 %v1904
      %v1927 = vunpack.c.l.b16 %v1905
      %v1928 = vpack.c.b16 %v1920, %v1919
      %v1929 = vpack.c.b16 %v1922, %v1921
      %v1930 = vpack.c.b16 %v1924, %v1923
      %v1931 = vpack.c.b16 %v1926, %v1925
      %v1932 = vpack.c.b16 %v1927, %v1927
      %v1934 = vshrl.u32 %v1928, 16
      %v1936 = vshll.u32 %v1928, 16
      %v1938 = vrot.slane %v1936, 1
      %v1939 = vor.u32 %v1934, %v1938
      %v1941 = vshll.u32 %v1929, 16
      %v1943 = vrot.slane %v1941, 1
      %v1944 = vsel %vm1249, %v1939, %v1943
      %v1945 = vshrl.u32 %v1929, 16
      %v1947 = vor.u32 %v1945, %v1943
      %v1949 = vshll.u32 %v1930, 16
      %v1951 = vrot.slane %v1949, 1
      %v1952 = vsel %vm1249, %v1947, %v1951
      %v1953 = vshrl.u32 %v1930, 16
      %v1955 = vor.u32 %v1953, %v1951
      %v1957 = vshll.u32 %v1931, 16
      %v1959 = vrot.slane %v1957, 1
      %v1960 = vsel %vm1249, %v1955, %v1959
      %v1961 = vshrl.u32 %v1931, 16
      %v1963 = vor.u32 %v1961, %v1959
      %v1965 = vshll.u32 %v1932, 16
      %v1967 = vrot.slane %v1965, 1
      %v1968 = vsel %vm1249, %v1963, %v1967
      %v1973 = vunpack.c.l.b16 %v1906
      %v1974 = vunpack.c.l.b16 %v1907
      %v1975 = vunpack.c.l.b16 %v1908
      %v1976 = vunpack.c.l.b16 %v1909
      %v1977 = vpack.c.b16 %v1974, %v1973
      %v1978 = vpack.c.b16 %v1976, %v1975
      %v1982 = vsel %vm533, %v1944, 0
      %v1985 = vsel %vm533, %v1952, 0
      %v1988 = vsel %vm533, %v1960, 0
      %v1991 = vsel %vm533, %v1968, 0
      %1993 = vmatprep.subr.bf16.mxu0 0
      %1994 = vmatpush1.bf16.msra.mxu0 %v1977
      %1995 = vmatprep.subr.bf16.mxu0 0
      %1996 = vmatpush1.bf16.msra.mxu0 %v1978
      %1997 = vmatprep.subr.bf16.mxu0 0
      %1998 = vmatpush1.bf16.msra.mxu0 0
      %1999 = vmatprep.subr.bf16.mxu0 0
      %2000 = vmatpush1.bf16.msra.mxu0 0
      %2001 = vmatprep.subr.bf16.mxu0 0
      %2002 = vmatpush1.bf16.msra.mxu0 0
      %2003 = vmatprep.subr.bf16.mxu0 0
      %2004 = vmatpush1.bf16.msra.mxu0 0
      %2005 = vmatprep.subr.bf16.mxu0 0
      %2006 = vmatpush1.bf16.msra.mxu0 0
      %2007 = vmatprep.subr.bf16.mxu0 0
      %2008 = vmatpush1.bf16.msra.mxu0 0
      %2009 = vmatprep.subr.bf16.mxu0 0
      %2010 = vmatpush1.bf16.msra.mxu0 0
      %2011 = vmatprep.subr.bf16.mxu0 0
      %2012 = vmatpush1.bf16.msra.mxu0 0
      %2013 = vmatprep.subr.bf16.mxu0 0
      %2014 = vmatpush1.bf16.msra.mxu0 0
      %2015 = vmatprep.subr.bf16.mxu0 0
      %2016 = vmatpush1.bf16.msra.mxu0 0
      %2017 = vmatprep.subr.bf16.mxu0 0
      %2018 = vmatpush1.bf16.msra.mxu0 0
      %2019 = vmatprep.subr.bf16.mxu0 0
      %2020 = vmatpush1.bf16.msra.mxu0 0
      %2021 = vmatprep.subr.bf16.mxu0 0
      %2022 = vmatpush1.bf16.msra.mxu0 0
      %2023 = vmatprep.subr.bf16.mxu0 0
      %2024 = vmatpush1.bf16.msra.mxu0 0
      %2025 = vmatprep.mubr.bf16.mxu0 0
      %2026 = vmatmul.mubr.bf16.gmra.mrb[0].mxu0 %v1982
      %v2027 = vpop.f32.mrb[0].mxu0
      %v2028 = vadd.f32 0.0, %v2027
      %v2029 = vpop.f32.mrb[0].mxu0
      %v2030 = vpop.f32.mrb[0].mxu0
      %v2031 = vadd.f32 0.0, %v2030
      %v2032 = vpop.f32.mrb[0].mxu0
      %2033 = vmatprep.mubr.bf16.mxu0 0
      %2034 = vmatmul.mubr.bf16.gmra.mrb[0].mxu0 %v1985
      %v2035 = vpop.f32.mrb[0].mxu0
      %v2036 = vadd.f32 0.0, %v2035
      %v2037 = vpop.f32.mrb[0].mxu0
      %v2038 = vpop.f32.mrb[0].mxu0
      %v2039 = vadd.f32 0.0, %v2038
      %v2040 = vpop.f32.mrb[0].mxu0
      %2041 = vmatprep.mubr.bf16.mxu0 0
      %2042 = vmatmul.mubr.bf16.gmra.mrb[0].mxu0 %v1988
      %v2043 = vpop.f32.mrb[0].mxu0
      %v2044 = vadd.f32 0.0, %v2043
      %v2045 = vpop.f32.mrb[0].mxu0
      %v2046 = vpop.f32.mrb[0].mxu0
      %v2047 = vadd.f32 0.0, %v2046
      %v2048 = vpop.f32.mrb[0].mxu0
      %2049 = vmatprep.mubr.bf16.mxu0 0
      %2050 = vmatmul.mubr.bf16.gmra.mrb[0].mxu0 %v1991
      %v2051 = vpop.f32.mrb[0].mxu0
      %v2052 = vadd.f32 0.0, %v2051
      %v2053 = vpop.f32.mrb[0].mxu0
      %v2054 = vpop.f32.mrb[0].mxu0
      %v2055 = vadd.f32 0.0, %v2054
      %v2056 = vpop.f32.mrb[0].mxu0
      %2057 = vdwg.mxu0
      %v2058 = vadd.f32 %v1889, %v2028
      %v2059 = vadd.f32 %v1890, %v2031
      %v2060 = vadd.f32 %v1891, %v2036
      %v2061 = vadd.f32 %v1892, %v2039
      %v2062 = vadd.f32 %v1893, %v2044
      %v2063 = vadd.f32 %v1894, %v2047
      %v2064 = vadd.f32 %v1895, %v2052
      %v2065 = vadd.f32 %v1896, %v2055
      %v2066 = vld [vmem:[#allocation2 + $0x4] sm:$0xe]
      %v2067 = vmul.bf16 %v2066, %v1592
      %v2068 = vmul.bf16 %v1898, %v1595
      %v2069 = vmul.bf16 %v1899, %v1598
      %v2070 = vmul.bf16 %v1900, %v1601
      %v2071 = vmul.bf16 %v1901, %v1604
      %v2072 = vmul.bf16 %v1902, %v1607
      %v2073 = vmul.bf16 %v1903, %v1610
      %v2074 = vmul.bf16 %v1904, %v1613
      %v2075 = vmul.bf16 %v1905, %v1614
      %v2076 = vld [vmem:[%s8 + $0x50] sm:$0xf]
      %v2077 = vld [vmem:[%s8 + $0x54] sm:$0xf]
      %v2078 = vld [vmem:[%s8 + $0x58] sm:$0xf]
      %v2079 = vld [vmem:[%s8 + $0x5c] sm:$0xf]
      %v2089 = vunpack.c.l.b16 %v2067
      %v2090 = vunpack.c.l.b16 %v2068
      %v2091 = vunpack.c.l.b16 %v2069
      %v2092 = vunpack.c.l.b16 %v2070
      %v2093 = vunpack.c.l.b16 %v2071
      %v2094 = vunpack.c.l.b16 %v2072
      %v2095 = vunpack.c.l.b16 %v2073
      %v2096 = vunpack.c.l.b16 %v2074
      %v2097 = vunpack.c.l.b16 %v2075
      %v2098 = vpack.c.b16 %v2090, %v2089
      %v2099 = vpack.c.b16 %v2092, %v2091
      %v2100 = vpack.c.b16 %v2094, %v2093
      %v2101 = vpack.c.b16 %v2096, %v2095
      %v2102 = vpack.c.b16 %v2097, %v2097
      %v2103 = vrot.slane %v2098, 1
      %v2104 = vrot.slane %v2099, 1
      %v2105 = vsel %vm1660, %v2103, %v2104
      %v2106 = vrot.slane %v2100, 1
      %v2107 = vsel %vm1660, %v2104, %v2106
      %v2108 = vrot.slane %v2101, 1
      %v2109 = vsel %vm1660, %v2106, %v2108
      %v2110 = vrot.slane %v2102, 1
      %v2111 = vsel %vm1660, %v2108, %v2110
      %v2116 = vunpack.c.l.b16 %v2076
      %v2117 = vunpack.c.l.b16 %v2077
      %v2118 = vunpack.c.l.b16 %v2078
      %v2119 = vunpack.c.l.b16 %v2079
      %v2120 = vpack.c.b16 %v2117, %v2116
      %v2121 = vpack.c.b16 %v2119, %v2118
      %v2125 = vsel %vm533, %v2105, 0
      %v2128 = vsel %vm533, %v2107, 0
      %v2131 = vsel %vm533, %v2109, 0
      %v2134 = vsel %vm533, %v2111, 0
      %2136 = vmatprep.subr.bf16.mxu0 0
      %2137 = vmatpush1.bf16.msra.mxu0 %v2120
      %2138 = vmatprep.subr.bf16.mxu0 0
      %2139 = vmatpush1.bf16.msra.mxu0 %v2121
      %2140 = vmatprep.subr.bf16.mxu0 0
      %2141 = vmatpush1.bf16.msra.mxu0 0
      %2142 = vmatprep.subr.bf16.mxu0 0
      %2143 = vmatpush1.bf16.msra.mxu0 0
      %2144 = vmatprep.subr.bf16.mxu0 0
      %2145 = vmatpush1.bf16.msra.mxu0 0
      %2146 = vmatprep.subr.bf16.mxu0 0
      %2147 = vmatpush1.bf16.msra.mxu0 0
      %2148 = vmatprep.subr.bf16.mxu0 0
      %2149 = vmatpush1.bf16.msra.mxu0 0
      %2150 = vmatprep.subr.bf16.mxu0 0
      %2151 = vmatpush1.bf16.msra.mxu0 0
      %2152 = vmatprep.subr.bf16.mxu0 0
      %2153 = vmatpush1.bf16.msra.mxu0 0
      %2154 = vmatprep.subr.bf16.mxu0 0
      %2155 = vmatpush1.bf16.msra.mxu0 0
      %2156 = vmatprep.subr.bf16.mxu0 0
      %2157 = vmatpush1.bf16.msra.mxu0 0
      %2158 = vmatprep.subr.bf16.mxu0 0
      %2159 = vmatpush1.bf16.msra.mxu0 0
      %2160 = vmatprep.subr.bf16.mxu0 0
      %2161 = vmatpush1.bf16.msra.mxu0 0
      %2162 = vmatprep.subr.bf16.mxu0 0
      %2163 = vmatpush1.bf16.msra.mxu0 0
      %2164 = vmatprep.subr.bf16.mxu0 0
      %2165 = vmatpush1.bf16.msra.mxu0 0
      %2166 = vmatprep.subr.bf16.mxu0 0
      %2167 = vmatpush1.bf16.msra.mxu0 0
      %2168 = vmatprep.mubr.bf16.mxu0 0
      %2169 = vmatmul.mubr.bf16.gmra.mrb[0].mxu0 %v2125
      %v2170 = vpop.f32.mrb[0].mxu0
      %v2171 = vadd.f32 0.0, %v2170
      %v2172 = vpop.f32.mrb[0].mxu0
      %v2173 = vpop.f32.mrb[0].mxu0
      %v2174 = vadd.f32 0.0, %v2173
      %v2175 = vpop.f32.mrb[0].mxu0
      %2176 = vmatprep.mubr.bf16.mxu0 0
      %2177 = vmatmul.mubr.bf16.gmra.mrb[0].mxu0 %v2128
      %v2178 = vpop.f32.mrb[0].mxu0
      %v2179 = vadd.f32 0.0, %v2178
      %v2180 = vpop.f32.mrb[0].mxu0
      %v2181 = vpop.f32.mrb[0].mxu0
      %v2182 = vadd.f32 0.0, %v2181
      %v2183 = vpop.f32.mrb[0].mxu0
      %2184 = vmatprep.mubr.bf16.mxu0 0
      %2185 = vmatmul.mubr.bf16.gmra.mrb[0].mxu0 %v2131
      %v2186 = vpop.f32.mrb[0].mxu0
      %v2187 = vadd.f32 0.0, %v2186
      %v2188 = vpop.f32.mrb[0].mxu0
      %v2189 = vpop.f32.mrb[0].mxu0
      %v2190 = vadd.f32 0.0, %v2189
      %v2191 = vpop.f32.mrb[0].mxu0
      %2192 = vmatprep.mubr.bf16.mxu0 0
      %2193 = vmatmul.mubr.bf16.gmra.mrb[0].mxu0 %v2134
      %v2194 = vpop.f32.mrb[0].mxu0
      %v2195 = vadd.f32 0.0, %v2194
      %v2196 = vpop.f32.mrb[0].mxu0
      %v2197 = vpop.f32.mrb[0].mxu0
      %v2198 = vadd.f32 0.0, %v2197
      %v2199 = vpop.f32.mrb[0].mxu0
      %2200 = vdwg.mxu0
      %v2201 = vadd.f32 %v2058, %v2171
      %v2202 = vadd.f32 %v2059, %v2174
      %v2203 = vadd.f32 %v2060, %v2179
      %v2204 = vadd.f32 %v2061, %v2182
      %v2205 = vadd.f32 %v2062, %v2187
      %v2206 = vadd.f32 %v2063, %v2190
      %v2207 = vadd.f32 %v2064, %v2195
      %v2208 = vadd.f32 %v2065, %v2198
      %v2209 = vld [vmem:[#allocation2 + $0x24] sm:$0xf]
      %v2210 = vmul.bf16 %v1898, %v1116
      %v2211 = vmul.bf16 %v1899, %v1128
      %v2212 = vmul.bf16 %v1900, %v1140
      %v2213 = vmul.bf16 %v1901, %v1152
      %v2214 = vmul.bf16 %v1902, %v1164
      %v2215 = vmul.bf16 %v1903, %v1176
      %v2216 = vmul.bf16 %v1904, %v1188
      %v2217 = vmul.bf16 %v2209, %v1200
      %v2218 = vld [vmem:[%s8 + $0x60] sm:$0xf]
      %v2219 = vld [vmem:[%s8 + $0x64] sm:$0xf]
      %v2220 = vld [vmem:[%s8 + $0x68] sm:$0xf]
      %v2221 = vld [vmem:[%s8 + $0x6c] sm:$0xf]
      %v2230 = vunpack.c.l.b16 %v2210
      %v2231 = vunpack.c.l.b16 %v2211
      %v2232 = vunpack.c.l.b16 %v2212
      %v2233 = vunpack.c.l.b16 %v2213
      %v2234 = vunpack.c.l.b16 %v2214
      %v2235 = vunpack.c.l.b16 %v2215
      %v2236 = vunpack.c.l.b16 %v2216
      %v2237 = vunpack.c.l.b16 %v2217
      %v2238 = vpack.c.b16 %v2231, %v2230
      %v2239 = vpack.c.b16 %v2233, %v2232
      %v2240 = vpack.c.b16 %v2235, %v2234
      %v2241 = vpack.c.b16 %v2237, %v2236
      %v2246 = vunpack.c.l.b16 %v2218
      %v2247 = vunpack.c.l.b16 %v2219
      %v2248 = vunpack.c.l.b16 %v2220
      %v2249 = vunpack.c.l.b16 %v2221
      %v2250 = vpack.c.b16 %v2247, %v2246
      %v2251 = vpack.c.b16 %v2249, %v2248
      %v2255 = vsel %vm533, %v2238, 0
      %v2258 = vsel %vm533, %v2239, 0
      %v2261 = vsel %vm533, %v2240, 0
      %v2264 = vsel %vm533, %v2241, 0
      %2266 = vmatprep.subr.bf16.mxu0 0
      %2267 = vmatpush1.bf16.msra.mxu0 %v2250
      %2268 = vmatprep.subr.bf16.mxu0 0
      %2269 = vmatpush1.bf16.msra.mxu0 %v2251
      %2270 = vmatprep.subr.bf16.mxu0 0
      %2271 = vmatpush1.bf16.msra.mxu0 0
      %2272 = vmatprep.subr.bf16.mxu0 0
      %2273 = vmatpush1.bf16.msra.mxu0 0
      %2274 = vmatprep.subr.bf16.mxu0 0
      %2275 = vmatpush1.bf16.msra.mxu0 0
      %2276 = vmatprep.subr.bf16.mxu0 0
      %2277 = vmatpush1.bf16.msra.mxu0 0
      %2278 = vmatprep.subr.bf16.mxu0 0
      %2279 = vmatpush1.bf16.msra.mxu0 0
      %2280 = vmatprep.subr.bf16.mxu0 0
      %2281 = vmatpush1.bf16.msra.mxu0 0
      %2282 = vmatprep.subr.bf16.mxu0 0
      %2283 = vmatpush1.bf16.msra.mxu0 0
      %2284 = vmatprep.subr.bf16.mxu0 0
      %2285 = vmatpush1.bf16.msra.mxu0 0
      %2286 = vmatprep.subr.bf16.mxu0 0
      %2287 = vmatpush1.bf16.msra.mxu0 0
      %2288 = vmatprep.subr.bf16.mxu0 0
      %2289 = vmatpush1.bf16.msra.mxu0 0
      %2290 = vmatprep.subr.bf16.mxu0 0
      %2291 = vmatpush1.bf16.msra.mxu0 0
      %2292 = vmatprep.subr.bf16.mxu0 0
      %2293 = vmatpush1.bf16.msra.mxu0 0
      %2294 = vmatprep.subr.bf16.mxu0 0
      %2295 = vmatpush1.bf16.msra.mxu0 0
      %2296 = vmatprep.subr.bf16.mxu0 0
      %2297 = vmatpush1.bf16.msra.mxu0 0
      %2298 = vmatprep.mubr.bf16.mxu0 0
      %2299 = vmatmul.mubr.bf16.gmra.mrb[0].mxu0 %v2255
      %v2300 = vpop.f32.mrb[0].mxu0
      %v2301 = vadd.f32 0.0, %v2300
      %v2302 = vpop.f32.mrb[0].mxu0
      %v2303 = vpop.f32.mrb[0].mxu0
      %v2304 = vadd.f32 0.0, %v2303
      %v2305 = vpop.f32.mrb[0].mxu0
      %2306 = vmatprep.mubr.bf16.mxu0 0
      %2307 = vmatmul.mubr.bf16.gmra.mrb[0].mxu0 %v2258
      %v2308 = vpop.f32.mrb[0].mxu0
      %v2309 = vadd.f32 0.0, %v2308
      %v2310 = vpop.f32.mrb[0].mxu0
      %v2311 = vpop.f32.mrb[0].mxu0
      %v2312 = vadd.f32 0.0, %v2311
      %v2313 = vpop.f32.mrb[0].mxu0
      %2314 = vmatprep.mubr.bf16.mxu0 0
      %2315 = vmatmul.mubr.bf16.gmra.mrb[0].mxu0 %v2261
      %v2316 = vpop.f32.mrb[0].mxu0
      %v2317 = vadd.f32 0.0, %v2316
      %v2318 = vpop.f32.mrb[0].mxu0
      %v2319 = vpop.f32.mrb[0].mxu0
      %v2320 = vadd.f32 0.0, %v2319
      %v2321 = vpop.f32.mrb[0].mxu0
      %2322 = vmatprep.mubr.bf16.mxu0 0
      %2323 = vmatmul.mubr.bf16.gmra.mrb[0].mxu0 %v2264
      %v2324 = vpop.f32.mrb[0].mxu0
      %v2325 = vadd.f32 0.0, %v2324
      %v2326 = vpop.f32.mrb[0].mxu0
      %v2327 = vpop.f32.mrb[0].mxu0
      %v2328 = vadd.f32 0.0, %v2327
      %v2329 = vpop.f32.mrb[0].mxu0
      %2330 = vdwg.mxu0
      %v2331 = vadd.f32 %v2201, %v2301
      %v2332 = vadd.f32 %v2202, %v2304
      %v2333 = vadd.f32 %v2203, %v2309
      %v2334 = vadd.f32 %v2204, %v2312
      %v2335 = vadd.f32 %v2205, %v2317
      %v2336 = vadd.f32 %v2206, %v2320
      %v2337 = vadd.f32 %v2207, %v2325
      %v2338 = vadd.f32 %v2208, %v2328
      %v2339 = vld [vmem:[#allocation2 + $0x8] sm:$0xf]
      %v2340 = vld [vmem:[#allocation2 + $0xc] sm:$0xf]
      %v2341 = vld [vmem:[#allocation2 + $0x10] sm:$0xf]
      %v2342 = vld [vmem:[#allocation2 + $0x14] sm:$0xf]
      %v2343 = vld [vmem:[#allocation2 + $0x18] sm:$0xf]
      %v2344 = vld [vmem:[#allocation2 + $0x1c] sm:$0xf]
      %v2345 = vld [vmem:[#allocation2 + $0x20] sm:$0xf]
      %v2346 = vld [vmem:[#allocation2 + $0x24] sm:$0xf]
      %v2347 = vld [vmem:[#allocation2 + $0x28] sm:$0x1]
      %v2348 = vld [vmem:[%s8 + $0x70] sm:$0xf]
      %v2349 = vld [vmem:[%s8 + $0x74] sm:$0xf]
      %v2350 = vld [vmem:[%s8 + $0x78] sm:$0xf]
      %v2351 = vld [vmem:[%s8 + $0x7c] sm:$0xf]
      %v2361 = vunpack.c.l.b16 %v2339
      %v2362 = vunpack.c.l.b16 %v2340
      %v2363 = vunpack.c.l.b16 %v2341
      %v2364 = vunpack.c.l.b16 %v2342
      %v2365 = vunpack.c.l.b16 %v2343
      %v2366 = vunpack.c.l.b16 %v2344
      %v2367 = vunpack.c.l.b16 %v2345
      %v2368 = vunpack.c.l.b16 %v2346
      %v2369 = vunpack.c.l.b16 %v2347
      %v2370 = vpack.c.b16 %v2362, %v2361
      %v2371 = vpack.c.b16 %v2364, %v2363
      %v2372 = vpack.c.b16 %v2366, %v2365
      %v2373 = vpack.c.b16 %v2368, %v2367
      %v2374 = vpack.c.b16 %v2369, %v2369
      %v2376 = vshrl.u32 %v2370, 16
      %v2378 = vshll.u32 %v2370, 16
      %v2380 = vrot.slane %v2378, 1
      %v2381 = vor.u32 %v2376, %v2380
      %v2383 = vshll.u32 %v2371, 16
      %v2385 = vrot.slane %v2383, 1
      %v2386 = vsel %vm1249, %v2381, %v2385
      %v2387 = vshrl.u32 %v2371, 16
      %v2389 = vor.u32 %v2387, %v2385
      %v2391 = vshll.u32 %v2372, 16
      %v2393 = vrot.slane %v2391, 1
      %v2394 = vsel %vm1249, %v2389, %v2393
      %v2395 = vshrl.u32 %v2372, 16
      %v2397 = vor.u32 %v2395, %v2393
      %v2399 = vshll.u32 %v2373, 16
      %v2401 = vrot.slane %v2399, 1
      %v2402 = vsel %vm1249, %v2397, %v2401
      %v2403 = vshrl.u32 %v2373, 16
      %v2405 = vor.u32 %v2403, %v2401
      %v2407 = vshll.u32 %v2374, 16
      %v2409 = vrot.slane %v2407, 1
      %v2410 = vsel %vm1249, %v2405, %v2409
      %v2415 = vunpack.c.l.b16 %v2348
      %v2416 = vunpack.c.l.b16 %v2349
      %v2417 = vunpack.c.l.b16 %v2350
      %v2418 = vunpack.c.l.b16 %v2351
      %v2419 = vpack.c.b16 %v2416, %v2415
      %v2420 = vpack.c.b16 %v2418, %v2417
      %v2424 = vsel %vm533, %v2386, 0
      %v2427 = vsel %vm533, %v2394, 0
      %v2430 = vsel %vm533, %v2402, 0
      %v2433 = vsel %vm533, %v2410, 0
      %2435 = vmatprep.subr.bf16.mxu0 0
      %2436 = vmatpush1.bf16.msra.mxu0 %v2419
      %2437 = vmatprep.subr.bf16.mxu0 0
      %2438 = vmatpush1.bf16.msra.mxu0 %v2420
      %2439 = vmatprep.subr.bf16.mxu0 0
      %2440 = vmatpush1.bf16.msra.mxu0 0
      %2441 = vmatprep.subr.bf16.mxu0 0
      %2442 = vmatpush1.bf16.msra.mxu0 0
      %2443 = vmatprep.subr.bf16.mxu0 0
      %2444 = vmatpush1.bf16.msra.mxu0 0
      %2445 = vmatprep.subr.bf16.mxu0 0
      %2446 = vmatpush1.bf16.msra.mxu0 0
      %2447 = vmatprep.subr.bf16.mxu0 0
      %2448 = vmatpush1.bf16.msra.mxu0 0
      %2449 = vmatprep.subr.bf16.mxu0 0
      %2450 = vmatpush1.bf16.msra.mxu0 0
      %2451 = vmatprep.subr.bf16.mxu0 0
      %2452 = vmatpush1.bf16.msra.mxu0 0
      %2453 = vmatprep.subr.bf16.mxu0 0
      %2454 = vmatpush1.bf16.msra.mxu0 0
      %2455 = vmatprep.subr.bf16.mxu0 0
      %2456 = vmatpush1.bf16.msra.mxu0 0
      %2457 = vmatprep.subr.bf16.mxu0 0
      %2458 = vmatpush1.bf16.msra.mxu0 0
      %2459 = vmatprep.subr.bf16.mxu0 0
      %2460 = vmatpush1.bf16.msra.mxu0 0
      %2461 = vmatprep.subr.bf16.mxu0 0
      %2462 = vmatpush1.bf16.msra.mxu0 0
      %2463 = vmatprep.subr.bf16.mxu0 0
      %2464 = vmatpush1.bf16.msra.mxu0 0
      %2465 = vmatprep.subr.bf16.mxu0 0
      %2466 = vmatpush1.bf16.msra.mxu0 0
      %2467 = vmatprep.mubr.bf16.mxu0 0
      %2468 = vmatmul.mubr.bf16.gmra.mrb[0].mxu0 %v2424
      %v2469 = vpop.f32.mrb[0].mxu0
      %v2470 = vadd.f32 0.0, %v2469
      %v2471 = vpop.f32.mrb[0].mxu0
      %v2472 = vpop.f32.mrb[0].mxu0
      %v2473 = vadd.f32 0.0, %v2472
      %v2474 = vpop.f32.mrb[0].mxu0
      %2475 = vmatprep.mubr.bf16.mxu0 0
      %2476 = vmatmul.mubr.bf16.gmra.mrb[0].mxu0 %v2427
      %v2477 = vpop.f32.mrb[0].mxu0
      %v2478 = vadd.f32 0.0, %v2477
      %v2479 = vpop.f32.mrb[0].mxu0
      %v2480 = vpop.f32.mrb[0].mxu0
      %v2481 = vadd.f32 0.0, %v2480
      %v2482 = vpop.f32.mrb[0].mxu0
      %2483 = vmatprep.mubr.bf16.mxu0 0
      %2484 = vmatmul.mubr.bf16.gmra.mrb[0].mxu0 %v2430
      %v2485 = vpop.f32.mrb[0].mxu0
      %v2486 = vadd.f32 0.0, %v2485
      %v2487 = vpop.f32.mrb[0].mxu0
      %v2488 = vpop.f32.mrb[0].mxu0
      %v2489 = vadd.f32 0.0, %v2488
      %v2490 = vpop.f32.mrb[0].mxu0
      %2491 = vmatprep.mubr.bf16.mxu0 0
      %2492 = vmatmul.mubr.bf16.gmra.mrb[0].mxu0 %v2433
      %v2493 = vpop.f32.mrb[0].mxu0
      %v2494 = vadd.f32 0.0, %v2493
      %v2495 = vpop.f32.mrb[0].mxu0
      %v2496 = vpop.f32.mrb[0].mxu0
      %v2497 = vadd.f32 0.0, %v2496
      %v2498 = vpop.f32.mrb[0].mxu0
      %2499 = vdwg.mxu0
      %v2500 = vadd.f32 %v2331, %v2470
      %v2501 = vadd.f32 %v2332, %v2473
      %v2502 = vadd.f32 %v2333, %v2478
      %v2503 = vadd.f32 %v2334, %v2481
      %v2504 = vadd.f32 %v2335, %v2486
      %v2505 = vadd.f32 %v2336, %v2489
      %v2506 = vadd.f32 %v2337, %v2494
      %v2507 = vadd.f32 %v2338, %v2497
      %v2508 = vld [vmem:[#allocation2 + $0x8] sm:$0xe]
      %v2509 = vmul.bf16 %v2508, %v1592
      %v2510 = vmul.bf16 %v2340, %v1595
      %v2511 = vmul.bf16 %v2341, %v1598
      %v2512 = vmul.bf16 %v2342, %v1601
      %v2513 = vmul.bf16 %v2343, %v1604
      %v2514 = vmul.bf16 %v2344, %v1607
      %v2515 = vmul.bf16 %v2345, %v1610
      %v2516 = vmul.bf16 %v2346, %v1613
      %v2517 = vmul.bf16 %v2347, %v1614
      %v2518 = vld [vmem:[%s8 + $0x80] sm:$0xf]
      %v2519 = vld [vmem:[%s8 + $0x84] sm:$0xf]
      %v2520 = vld [vmem:[%s8 + $0x88] sm:$0xf]
      %v2521 = vld [vmem:[%s8 + $0x8c] sm:$0xf]
      %v2531 = vunpack.c.l.b16 %v2509
      %v2532 = vunpack.c.l.b16 %v2510
      %v2533 = vunpack.c.l.b16 %v2511
      %v2534 = vunpack.c.l.b16 %v2512
      %v2535 = vunpack.c.l.b16 %v2513
      %v2536 = vunpack.c.l.b16 %v2514
      %v2537 = vunpack.c.l.b16 %v2515
      %v2538 = vunpack.c.l.b16 %v2516
      %v2539 = vunpack.c.l.b16 %v2517
      %v2540 = vpack.c.b16 %v2532, %v2531
      %v2541 = vpack.c.b16 %v2534, %v2533
      %v2542 = vpack.c.b16 %v2536, %v2535
      %v2543 = vpack.c.b16 %v2538, %v2537
      %v2544 = vpack.c.b16 %v2539, %v2539
      %v2545 = vrot.slane %v2540, 1
      %v2546 = vrot.slane %v2541, 1
      %v2547 = vsel %vm1660, %v2545, %v2546
      %v2548 = vrot.slane %v2542, 1
      %v2549 = vsel %vm1660, %v2546, %v2548
      %v2550 = vrot.slane %v2543, 1
      %v2551 = vsel %vm1660, %v2548, %v2550
      %v2552 = vrot.slane %v2544, 1
      %v2553 = vsel %vm1660, %v2550, %v2552
      %v2558 = vunpack.c.l.b16 %v2518
      %v2559 = vunpack.c.l.b16 %v2519
      %v2560 = vunpack.c.l.b16 %v2520
      %v2561 = vunpack.c.l.b16 %v2521
      %v2562 = vpack.c.b16 %v2559, %v2558
      %v2563 = vpack.c.b16 %v2561, %v2560
      %v2567 = vsel %vm533, %v2547, 0
      %v2570 = vsel %vm533, %v2549, 0
      %v2573 = vsel %vm533, %v2551, 0
      %v2576 = vsel %vm533, %v2553, 0
      %2578 = vmatprep.subr.bf16.mxu0 0
      %2579 = vmatpush1.bf16.msra.mxu0 %v2562
      %2580 = vmatprep.subr.bf16.mxu0 0
      %2581 = vmatpush1.bf16.msra.mxu0 %v2563
      %2582 = vmatprep.subr.bf16.mxu0 0
      %2583 = vmatpush1.bf16.msra.mxu0 0
      %2584 = vmatprep.subr.bf16.mxu0 0
      %2585 = vmatpush1.bf16.msra.mxu0 0
      %2586 = vmatprep.subr.bf16.mxu0 0
      %2587 = vmatpush1.bf16.msra.mxu0 0
      %2588 = vmatprep.subr.bf16.mxu0 0
      %2589 = vmatpush1.bf16.msra.mxu0 0
      %2590 = vmatprep.subr.bf16.mxu0 0
      %2591 = vmatpush1.bf16.msra.mxu0 0
      %2592 = vmatprep.subr.bf16.mxu0 0
      %2593 = vmatpush1.bf16.msra.mxu0 0
      %2594 = vmatprep.subr.bf16.mxu0 0
      %2595 = vmatpush1.bf16.msra.mxu0 0
      %2596 = vmatprep.subr.bf16.mxu0 0
      %2597 = vmatpush1.bf16.msra.mxu0 0
      %2598 = vmatprep.subr.bf16.mxu0 0
      %2599 = vmatpush1.bf16.msra.mxu0 0
      %2600 = vmatprep.subr.bf16.mxu0 0
      %2601 = vmatpush1.bf16.msra.mxu0 0
      %2602 = vmatprep.subr.bf16.mxu0 0
      %2603 = vmatpush1.bf16.msra.mxu0 0
      %2604 = vmatprep.subr.bf16.mxu0 0
      %2605 = vmatpush1.bf16.msra.mxu0 0
      %2606 = vmatprep.subr.bf16.mxu0 0
      %2607 = vmatpush1.bf16.msra.mxu0 0
      %2608 = vmatprep.subr.bf16.mxu0 0
      %2609 = vmatpush1.bf16.msra.mxu0 0
      %2610 = vmatprep.mubr.bf16.mxu0 0
      %2611 = vmatmul.mubr.bf16.gmra.mrb[0].mxu0 %v2567
      %v2612 = vpop.f32.mrb[0].mxu0
      %v2613 = vadd.f32 0.0, %v2612
      %v2614 = vpop.f32.mrb[0].mxu0
      %v2615 = vpop.f32.mrb[0].mxu0
      %v2616 = vadd.f32 0.0, %v2615
      %v2617 = vpop.f32.mrb[0].mxu0
      %2618 = vmatprep.mubr.bf16.mxu0 0
      %2619 = vmatmul.mubr.bf16.gmra.mrb[0].mxu0 %v2570
      %v2620 = vpop.f32.mrb[0].mxu0
      %v2621 = vadd.f32 0.0, %v2620
      %v2622 = vpop.f32.mrb[0].mxu0
      %v2623 = vpop.f32.mrb[0].mxu0
      %v2624 = vadd.f32 0.0, %v2623
      %v2625 = vpop.f32.mrb[0].mxu0
      %2626 = vmatprep.mubr.bf16.mxu0 0
      %2627 = vmatmul.mubr.bf16.gmra.mrb[0].mxu0 %v2573
      %v2628 = vpop.f32.mrb[0].mxu0
      %v2629 = vadd.f32 0.0, %v2628
      %v2630 = vpop.f32.mrb[0].mxu0
      %v2631 = vpop.f32.mrb[0].mxu0
      %v2632 = vadd.f32 0.0, %v2631
      %v2633 = vpop.f32.mrb[0].mxu0
      %2634 = vmatprep.mubr.bf16.mxu0 0
      %2635 = vmatmul.mubr.bf16.gmra.mrb[0].mxu0 %v2576
      %v2636 = vpop.f32.mrb[0].mxu0
      %v2637 = vadd.f32 0.0, %v2636
      %v2638 = vpop.f32.mrb[0].mxu0
      %v2639 = vpop.f32.mrb[0].mxu0
      %v2640 = vadd.f32 0.0, %v2639
      %v2641 = vpop.f32.mrb[0].mxu0
      %2642 = vdwg.mxu0
      %v2643 = vadd.f32 %v2500, %v2613
      %v2644 = vadd.f32 %v2501, %v2616
      %v2645 = vadd.f32 %v2502, %v2621
      %v2646 = vadd.f32 %v2503, %v2624
      %v2647 = vadd.f32 %v2504, %v2629
      %v2648 = vadd.f32 %v2505, %v2632
      %v2649 = vadd.f32 %v2506, %v2637
      %v2650 = vadd.f32 %v2507, %v2640
      %v2652 = vlaneseq
      %v2653 = vshrl.u32 %v2652, 7
      %v2654 = vsub.s32 0, %v2653
      %v2655 = vrot.slane %v977, %v2654
      %v2657 = vadd.f32 %v2643, %v2655
      %v2658 = vadd.f32 %v2644, %v2655
      %v2659 = vadd.f32 %v2645, %v2655
      %v2660 = vadd.f32 %v2646, %v2655
      %v2661 = vadd.f32 %v2647, %v2655
      %v2662 = vadd.f32 %v2648, %v2655
      %v2663 = vadd.f32 %v2649, %v2655
      %v2664 = vadd.f32 %v2650, %v2655
      %v2665 = vld [vmem:[%s476] sm:$0x1]
      %v2667 = vlaneseq
      %v2668 = vshrl.u32 %v2667, 7
      %v2669 = vsub.s32 0, %v2668
      %v2670 = vrot.slane %v2665, %v2669
      %v2672 = vadd.f32 %v2657, %v2670
      %v2673 = vadd.f32 %v2658, %v2670
      %v2674 = vadd.f32 %v2659, %v2670
      %v2675 = vadd.f32 %v2660, %v2670
      %v2676 = vadd.f32 %v2661, %v2670
      %v2677 = vadd.f32 %v2662, %v2670
      %v2678 = vadd.f32 %v2663, %v2670
      %v2679 = vadd.f32 %v2664, %v2670
      %v2680 = vld [vmem:[%s10] sm:$0x1]
      %v2681 = vld [vmem:[%s11] sm:$0x1]
      %v2682 = vsel %vm533, %v2672, 0.0
      %v2683 = vsel %vm533, %v2673, 0.0
      %v2684 = vadd.f32 %v2682, %v2683
      %v2685 = vsel %vm533, %v2674, 0.0
      %v2686 = vadd.f32 %v2684, %v2685
      %v2687 = vsel %vm533, %v2675, 0.0
      %v2688 = vadd.f32 %v2686, %v2687
      %v2689 = vsel %vm533, %v2676, 0.0
      %v2690 = vadd.f32 %v2688, %v2689
      %v2691 = vsel %vm533, %v2677, 0.0
      %v2692 = vadd.f32 %v2690, %v2691
      %v2693 = vsel %vm533, %v2678, 0.0
      %v2694 = vadd.f32 %v2692, %v2693
      %v2695 = vsel %vm533, %v2679, 0.0
      %v2696 = vadd.f32 %v2694, %v2695
      %v2697 = vrot.slane %v2696, 4
      %v2698 = vadd.f32 %v2696, %v2697
      %v2699 = vrot.slane %v2698, 2
      %v2700 = vadd.f32 %v2698, %v2699
      %v2701 = vrot.slane %v2700, 1
      %v2702 = vadd.f32 %v2700, %v2701
      %v2704 = vsel %vm533, %v2702, 0
      %2706 = vmatprep.subr.mxu0 0.0
      %2707 = vmatpush1.msra.mxu0 %v507
      %2708 = vmatprep.subr.mxu0 0.0
      %2709 = vmatpush1.msra.mxu0 %v508
      %2710 = vmatprep.subr.mxu0 0.0
      %2711 = vmatpush1.msra.mxu0 %v509
      %2712 = vmatprep.subr.mxu0 0.0
      %2713 = vmatpush1.msra.mxu0 %v510
      %2714 = vmatprep.subr.mxu0 0.0
      %2715 = vmatpush1.msra.mxu0 0.0
      %2716 = vmatprep.subr.mxu0 0.0
      %2717 = vmatpush1.msra.mxu0 0.0
      %2718 = vmatprep.subr.mxu0 0.0
      %2719 = vmatpush1.msra.mxu0 0.0
      %2720 = vmatprep.subr.mxu0 0.0
      %2721 = vmatpush1.msra.mxu0 0.0
      %2722 = vmatprep.subr.mxu0 0.0
      %2723 = vmatpush1.msra.mxu0 0.0
      %2724 = vmatprep.subr.mxu0 0.0
      %2725 = vmatpush1.msra.mxu0 0.0
      %2726 = vmatprep.subr.mxu0 0.0
      %2727 = vmatpush1.msra.mxu0 0.0
      %2728 = vmatprep.subr.mxu0 0.0
      %2729 = vmatpush1.msra.mxu0 0.0
      %2730 = vmatprep.subr.mxu0 0.0
      %2731 = vmatpush1.msra.mxu0 0.0
      %2732 = vmatprep.subr.mxu0 0.0
      %2733 = vmatpush1.msra.mxu0 0.0
      %2734 = vmatprep.subr.mxu0 0.0
      %2735 = vmatpush1.msra.mxu0 0.0
      %2736 = vmatprep.subr.mxu0 0.0
      %2737 = vmatpush1.msra.mxu0 0.0
      %2738 = vmatprep.subr.mxu0 0.0
      %2739 = vmatpush1.msra.mxu0 0.0
      %2740 = vmatprep.subr.mxu0 0.0
      %2741 = vmatpush1.msra.mxu0 0.0
      %2742 = vmatprep.subr.mxu0 0.0
      %2743 = vmatpush1.msra.mxu0 0.0
      %2744 = vmatprep.subr.mxu0 0.0
      %2745 = vmatpush1.msra.mxu0 0.0
      %2746 = vmatprep.subr.mxu0 0.0
      %2747 = vmatpush1.msra.mxu0 0.0
      %2748 = vmatprep.subr.mxu0 0.0
      %2749 = vmatpush1.msra.mxu0 0.0
      %2750 = vmatprep.subr.mxu0 0.0
      %2751 = vmatpush1.msra.mxu0 0.0
      %2752 = vmatprep.subr.mxu0 0.0
      %2753 = vmatpush1.msra.mxu0 0.0
      %2754 = vmatprep.subr.mxu0 0.0
      %2755 = vmatpush1.msra.mxu0 0.0
      %2756 = vmatprep.subr.mxu0 0.0
      %2757 = vmatpush1.msra.mxu0 0.0
      %2758 = vmatprep.subr.mxu0 0.0
      %2759 = vmatpush1.msra.mxu0 0.0
      %2760 = vmatprep.subr.mxu0 0.0
      %2761 = vmatpush1.msra.mxu0 0.0
      %2762 = vmatprep.subr.mxu0 0.0
      %2763 = vmatpush1.msra.mxu0 0.0
      %2764 = vmatprep.subr.mxu0 0.0
      %2765 = vmatpush1.msra.mxu0 0.0
      %2766 = vmatprep.subr.mxu0 0.0
      %2767 = vmatpush1.msra.mxu0 0.0
      %2768 = vmatprep.subr.mxu0 0.0
      %2769 = vmatpush1.msra.mxu0 0.0
      %2770 = vmatprep.mubr.f32.mxu0 0.0
      %2771 = vmatmul.mubr.f32.gmra.mrb[0].mxu0 %v2704
      %v2772 = vpop.f32.mrb[0].mxu0
      %v2773 = vadd.f32 0.0, %v2772
      %v2774 = vpop.f32.mrb[0].mxu0
      %2775 = vdwg.mxu0
      %v2776 = vmul.f32 %v2773, %v628
      %v2778 = vsel %vm533, %v2776, 0
      %2780 = vmatprep.subr.mxu0 0.0
      %2781 = vmatpush1.msra.mxu0 %v511
      %2782 = vmatprep.subr.mxu0 0.0
      %2783 = vmatpush1.msra.mxu0 %v512
      %2784 = vmatprep.subr.mxu0 0.0
      %2785 = vmatpush1.msra.mxu0 %v513
      %2786 = vmatprep.subr.mxu0 0.0
      %2787 = vmatpush1.msra.mxu0 %v514
      %2788 = vmatprep.subr.mxu0 0.0
      %2789 = vmatpush1.msra.mxu0 0.0
      %2790 = vmatprep.subr.mxu0 0.0
      %2791 = vmatpush1.msra.mxu0 0.0
      %2792 = vmatprep.subr.mxu0 0.0
      %2793 = vmatpush1.msra.mxu0 0.0
      %2794 = vmatprep.subr.mxu0 0.0
      %2795 = vmatpush1.msra.mxu0 0.0
      %2796 = vmatprep.subr.mxu0 0.0
      %2797 = vmatpush1.msra.mxu0 0.0
      %2798 = vmatprep.subr.mxu0 0.0
      %2799 = vmatpush1.msra.mxu0 0.0
      %2800 = vmatprep.subr.mxu0 0.0
      %2801 = vmatpush1.msra.mxu0 0.0
      %2802 = vmatprep.subr.mxu0 0.0
      %2803 = vmatpush1.msra.mxu0 0.0
      %2804 = vmatprep.subr.mxu0 0.0
      %2805 = vmatpush1.msra.mxu0 0.0
      %2806 = vmatprep.subr.mxu0 0.0
      %2807 = vmatpush1.msra.mxu0 0.0
      %2808 = vmatprep.subr.mxu0 0.0
      %2809 = vmatpush1.msra.mxu0 0.0
      %2810 = vmatprep.subr.mxu0 0.0
      %2811 = vmatpush1.msra.mxu0 0.0
      %2812 = vmatprep.subr.mxu0 0.0
      %2813 = vmatpush1.msra.mxu0 0.0
      %2814 = vmatprep.subr.mxu0 0.0
      %2815 = vmatpush1.msra.mxu0 0.0
      %2816 = vmatprep.subr.mxu0 0.0
      %2817 = vmatpush1.msra.mxu0 0.0
      %2818 = vmatprep.subr.mxu0 0.0
      %2819 = vmatpush1.msra.mxu0 0.0
      %2820 = vmatprep.subr.mxu0 0.0
      %2821 = vmatpush1.msra.mxu0 0.0
      %2822 = vmatprep.subr.mxu0 0.0
      %2823 = vmatpush1.msra.mxu0 0.0
      %2824 = vmatprep.subr.mxu0 0.0
      %2825 = vmatpush1.msra.mxu0 0.0
      %2826 = vmatprep.subr.mxu0 0.0
      %2827 = vmatpush1.msra.mxu0 0.0
      %2828 = vmatprep.subr.mxu0 0.0
      %2829 = vmatpush1.msra.mxu0 0.0
      %2830 = vmatprep.subr.mxu0 0.0
      %2831 = vmatpush1.msra.mxu0 0.0
      %2832 = vmatprep.subr.mxu0 0.0
      %2833 = vmatpush1.msra.mxu0 0.0
      %2834 = vmatprep.subr.mxu0 0.0
      %2835 = vmatpush1.msra.mxu0 0.0
      %2836 = vmatprep.subr.mxu0 0.0
      %2837 = vmatpush1.msra.mxu0 0.0
      %2838 = vmatprep.subr.mxu0 0.0
      %2839 = vmatpush1.msra.mxu0 0.0
      %2840 = vmatprep.subr.mxu0 0.0
      %2841 = vmatpush1.msra.mxu0 0.0
      %2842 = vmatprep.subr.mxu0 0.0
      %2843 = vmatpush1.msra.mxu0 0.0
      %2844 = vmatprep.mubr.f32.mxu0 0.0
      %2845 = vmatmul.mubr.f32.gmra.mrb[0].mxu0 %v2778
      %v2846 = vpop.f32.mrb[0].mxu0
      %v2847 = vadd.f32 0.0, %v2846
      %v2848 = vpop.f32.mrb[0].mxu0
      %2849 = vdwg.mxu0
      %v2850 = vlaneseq
      %v2851 = vshrl.u32 %v2850, 7
      %v2852 = vsub.s32 0, %v2851
      %v2853 = vrot.slane %v2847, %v2852
      %v2854 = vsub.f32 %v2672, %v2853
      %v2855 = vsub.f32 %v2673, %v2853
      %v2856 = vsub.f32 %v2674, %v2853
      %v2857 = vsub.f32 %v2675, %v2853
      %v2858 = vsub.f32 %v2676, %v2853
      %v2859 = vsub.f32 %v2677, %v2853
      %v2860 = vsub.f32 %v2678, %v2853
      %v2861 = vsub.f32 %v2679, %v2853
      %v2862 = vmul.f32 %v2854, %v2854
      %v2863 = vmul.f32 %v2855, %v2855
      %v2864 = vmul.f32 %v2856, %v2856
      %v2865 = vmul.f32 %v2857, %v2857
      %v2866 = vmul.f32 %v2858, %v2858
      %v2867 = vmul.f32 %v2859, %v2859
      %v2868 = vmul.f32 %v2860, %v2860
      %v2869 = vmul.f32 %v2861, %v2861
      %v2870 = vsel %vm533, %v2862, 0.0
      %v2871 = vsel %vm533, %v2863, 0.0
      %v2872 = vadd.f32 %v2870, %v2871
      %v2873 = vsel %vm533, %v2864, 0.0
      %v2874 = vadd.f32 %v2872, %v2873
      %v2875 = vsel %vm533, %v2865, 0.0
      %v2876 = vadd.f32 %v2874, %v2875
      %v2877 = vsel %vm533, %v2866, 0.0
      %v2878 = vadd.f32 %v2876, %v2877
      %v2879 = vsel %vm533, %v2867, 0.0
      %v2880 = vadd.f32 %v2878, %v2879
      %v2881 = vsel %vm533, %v2868, 0.0
      %v2882 = vadd.f32 %v2880, %v2881
      %v2883 = vsel %vm533, %v2869, 0.0
      %v2884 = vadd.f32 %v2882, %v2883
      %v2885 = vrot.slane %v2884, 4
      %v2886 = vadd.f32 %v2884, %v2885
      %v2887 = vrot.slane %v2886, 2
      %v2888 = vadd.f32 %v2886, %v2887
      %v2889 = vrot.slane %v2888, 1
      %v2890 = vadd.f32 %v2888, %v2889
      %v2892 = vsel %vm533, %v2890, 0
      %2894 = vmatprep.subr.mxu0 0.0
      %2895 = vmatpush1.msra.mxu0 %v507
      %2896 = vmatprep.subr.mxu0 0.0
      %2897 = vmatpush1.msra.mxu0 %v508
      %2898 = vmatprep.subr.mxu0 0.0
      %2899 = vmatpush1.msra.mxu0 %v509
      %2900 = vmatprep.subr.mxu0 0.0
      %2901 = vmatpush1.msra.mxu0 %v510
      %2902 = vmatprep.subr.mxu0 0.0
      %2903 = vmatpush1.msra.mxu0 0.0
      %2904 = vmatprep.subr.mxu0 0.0
      %2905 = vmatpush1.msra.mxu0 0.0
      %2906 = vmatprep.subr.mxu0 0.0
      %2907 = vmatpush1.msra.mxu0 0.0
      %2908 = vmatprep.subr.mxu0 0.0
      %2909 = vmatpush1.msra.mxu0 0.0
      %2910 = vmatprep.subr.mxu0 0.0
      %2911 = vmatpush1.msra.mxu0 0.0
      %2912 = vmatprep.subr.mxu0 0.0
      %2913 = vmatpush1.msra.mxu0 0.0
      %2914 = vmatprep.subr.mxu0 0.0
      %2915 = vmatpush1.msra.mxu0 0.0
      %2916 = vmatprep.subr.mxu0 0.0
      %2917 = vmatpush1.msra.mxu0 0.0
      %2918 = vmatprep.subr.mxu0 0.0
      %2919 = vmatpush1.msra.mxu0 0.0
      %2920 = vmatprep.subr.mxu0 0.0
      %2921 = vmatpush1.msra.mxu0 0.0
      %2922 = vmatprep.subr.mxu0 0.0
      %2923 = vmatpush1.msra.mxu0 0.0
      %2924 = vmatprep.subr.mxu0 0.0
      %2925 = vmatpush1.msra.mxu0 0.0
      %2926 = vmatprep.subr.mxu0 0.0
      %2927 = vmatpush1.msra.mxu0 0.0
      %2928 = vmatprep.subr.mxu0 0.0
      %2929 = vmatpush1.msra.mxu0 0.0
      %2930 = vmatprep.subr.mxu0 0.0
      %2931 = vmatpush1.msra.mxu0 0.0
      %2932 = vmatprep.subr.mxu0 0.0
      %2933 = vmatpush1.msra.mxu0 0.0
      %2934 = vmatprep.subr.mxu0 0.0
      %2935 = vmatpush1.msra.mxu0 0.0
      %2936 = vmatprep.subr.mxu0 0.0
      %2937 = vmatpush1.msra.mxu0 0.0
      %2938 = vmatprep.subr.mxu0 0.0
      %2939 = vmatpush1.msra.mxu0 0.0
      %2940 = vmatprep.subr.mxu0 0.0
      %2941 = vmatpush1.msra.mxu0 0.0
      %2942 = vmatprep.subr.mxu0 0.0
      %2943 = vmatpush1.msra.mxu0 0.0
      %2944 = vmatprep.subr.mxu0 0.0
      %2945 = vmatpush1.msra.mxu0 0.0
      %2946 = vmatprep.subr.mxu0 0.0
      %2947 = vmatpush1.msra.mxu0 0.0
      %2948 = vmatprep.subr.mxu0 0.0
      %2949 = vmatpush1.msra.mxu0 0.0
      %2950 = vmatprep.subr.mxu0 0.0
      %2951 = vmatpush1.msra.mxu0 0.0
      %2952 = vmatprep.subr.mxu0 0.0
      %2953 = vmatpush1.msra.mxu0 0.0
      %2954 = vmatprep.subr.mxu0 0.0
      %2955 = vmatpush1.msra.mxu0 0.0
      %2956 = vmatprep.subr.mxu0 0.0
      %2957 = vmatpush1.msra.mxu0 0.0
      %2958 = vmatprep.mubr.f32.mxu0 0.0
      %2959 = vmatmul.mubr.f32.gmra.mrb[0].mxu0 %v2892
      %v2960 = vpop.f32.mrb[0].mxu0
      %v2961 = vadd.f32 0.0, %v2960
      %v2962 = vpop.f32.mrb[0].mxu0
      %2963 = vdwg.mxu0
      %v2964 = vmul.f32 %v2961, %v628
      %v2966 = vsel %vm533, %v2964, 0
      %2968 = vmatprep.subr.mxu0 0.0
      %2969 = vmatpush1.msra.mxu0 %v511
      %2970 = vmatprep.subr.mxu0 0.0
      %2971 = vmatpush1.msra.mxu0 %v512
      %2972 = vmatprep.subr.mxu0 0.0
      %2973 = vmatpush1.msra.mxu0 %v513
      %2974 = vmatprep.subr.mxu0 0.0
      %2975 = vmatpush1.msra.mxu0 %v514
      %2976 = vmatprep.subr.mxu0 0.0
      %2977 = vmatpush1.msra.mxu0 0.0
      %2978 = vmatprep.subr.mxu0 0.0
      %2979 = vmatpush1.msra.mxu0 0.0
      %2980 = vmatprep.subr.mxu0 0.0
      %2981 = vmatpush1.msra.mxu0 0.0
      %2982 = vmatprep.subr.mxu0 0.0
      %2983 = vmatpush1.msra.mxu0 0.0
      %2984 = vmatprep.subr.mxu0 0.0
      %2985 = vmatpush1.msra.mxu0 0.0
      %2986 = vmatprep.subr.mxu0 0.0
      %2987 = vmatpush1.msra.mxu0 0.0
      %2988 = vmatprep.subr.mxu0 0.0
      %2989 = vmatpush1.msra.mxu0 0.0
      %2990 = vmatprep.subr.mxu0 0.0
      %2991 = vmatpush1.msra.mxu0 0.0
      %2992 = vmatprep.subr.mxu0 0.0
      %2993 = vmatpush1.msra.mxu0 0.0
      %2994 = vmatprep.subr.mxu0 0.0
      %2995 = vmatpush1.msra.mxu0 0.0
      %2996 = vmatprep.subr.mxu0 0.0
      %2997 = vmatpush1.msra.mxu0 0.0
      %2998 = vmatprep.subr.mxu0 0.0
      %2999 = vmatpush1.msra.mxu0 0.0
      %3000 = vmatprep.subr.mxu0 0.0
      %3001 = vmatpush1.msra.mxu0 0.0
      %3002 = vmatprep.subr.mxu0 0.0
      %3003 = vmatpush1.msra.mxu0 0.0
      %3004 = vmatprep.subr.mxu0 0.0
      %3005 = vmatpush1.msra.mxu0 0.0
      %3006 = vmatprep.subr.mxu0 0.0
      %3007 = vmatpush1.msra.mxu0 0.0
      %3008 = vmatprep.subr.mxu0 0.0
      %3009 = vmatpush1.msra.mxu0 0.0
      %3010 = vmatprep.subr.mxu0 0.0
      %3011 = vmatpush1.msra.mxu0 0.0
      %3012 = vmatprep.subr.mxu0 0.0
      %3013 = vmatpush1.msra.mxu0 0.0
      %3014 = vmatprep.subr.mxu0 0.0
      %3015 = vmatpush1.msra.mxu0 0.0
      %3016 = vmatprep.subr.mxu0 0.0
      %3017 = vmatpush1.msra.mxu0 0.0
      %3018 = vmatprep.subr.mxu0 0.0
      %3019 = vmatpush1.msra.mxu0 0.0
      %3020 = vmatprep.subr.mxu0 0.0
      %3021 = vmatpush1.msra.mxu0 0.0
      %3022 = vmatprep.subr.mxu0 0.0
      %3023 = vmatpush1.msra.mxu0 0.0
      %3024 = vmatprep.subr.mxu0 0.0
      %3025 = vmatpush1.msra.mxu0 0.0
      %3026 = vmatprep.subr.mxu0 0.0
      %3027 = vmatpush1.msra.mxu0 0.0
      %3028 = vmatprep.subr.mxu0 0.0
      %3029 = vmatpush1.msra.mxu0 0.0
      %3030 = vmatprep.subr.mxu0 0.0
      %3031 = vmatpush1.msra.mxu0 0.0
      %3032 = vmatprep.mubr.f32.mxu0 0.0
      %3033 = vmatmul.mubr.f32.gmra.mrb[0].mxu0 %v2966
      %v3034 = vpop.f32.mrb[0].mxu0
      %v3035 = vadd.f32 0.0, %v3034
      %v3036 = vpop.f32.mrb[0].mxu0
      %3037 = vdwg.mxu0
      %v3038 = vmax.f32 %v3035, 0.0
      %v3039 = vadd.f32 %v3038, 1e-05
      %v3040 = vrsqrt.pop %v3039
      %v3041 = vmul.f32 %v3040, %v2680
      %v3042 = vlaneseq
      %v3043 = vshrl.u32 %v3042, 7
      %v3044 = vsub.s32 0, %v3043
      %v3045 = vrot.slane %v3041, %v3044
      %v3046 = vmul.f32 %v2854, %v3045
      %v3047 = vmul.f32 %v2855, %v3045
      %v3048 = vmul.f32 %v2856, %v3045
      %v3049 = vmul.f32 %v2857, %v3045
      %v3050 = vmul.f32 %v2858, %v3045
      %v3051 = vmul.f32 %v2859, %v3045
      %v3052 = vmul.f32 %v2860, %v3045
      %v3053 = vmul.f32 %v2861, %v3045
      %v3055 = vlaneseq
      %v3056 = vshrl.u32 %v3055, 7
      %v3057 = vsub.s32 0, %v3056
      %v3058 = vrot.slane %v2681, %v3057
      %v3060 = vadd.f32 %v3046, %v3058
      %v3061 = vadd.f32 %v3047, %v3058
      %v3062 = vadd.f32 %v3048, %v3058
      %v3063 = vadd.f32 %v3049, %v3058
      %v3064 = vadd.f32 %v3050, %v3058
      %v3065 = vadd.f32 %v3051, %v3058
      %v3066 = vadd.f32 %v3052, %v3058
      %v3067 = vadd.f32 %v3053, %v3058
      %v3068 = vxor.u32 %v3060, 2147483648
      %v3069 = vxor.u32 %v3061, 2147483648
      %v3070 = vxor.u32 %v3062, 2147483648
      %v3071 = vxor.u32 %v3063, 2147483648
      %v3072 = vxor.u32 %v3064, 2147483648
      %v3073 = vxor.u32 %v3065, 2147483648
      %v3074 = vxor.u32 %v3066, 2147483648
      %v3075 = vxor.u32 %v3067, 2147483648
      %v3076 = vmul.f32 %v3068, 1.442695
      %v3077 = vpow.pop %v3076
      %v3078 = vmul.f32 %v3069, 1.442695
      %v3079 = vpow.pop %v3078
      %v3080 = vmul.f32 %v3070, 1.442695
      %v3081 = vpow.pop %v3080
      %v3082 = vmul.f32 %v3071, 1.442695
      %v3083 = vpow.pop %v3082
      %v3084 = vmul.f32 %v3072, 1.442695
      %v3085 = vpow.pop %v3084
      %v3086 = vmul.f32 %v3073, 1.442695
      %v3087 = vpow.pop %v3086
      %v3088 = vmul.f32 %v3074, 1.442695
      %v3089 = vpow.pop %v3088
      %v3090 = vmul.f32 %v3075, 1.442695
      %v3091 = vpow.pop %v3090
      %v3092 = vadd.f32 %v3077, 1.0
      %v3093 = vadd.f32 %v3079, 1.0
      %v3094 = vadd.f32 %v3081, 1.0
      %v3095 = vadd.f32 %v3083, 1.0
      %v3096 = vadd.f32 %v3085, 1.0
      %v3097 = vadd.f32 %v3087, 1.0
      %v3098 = vadd.f32 %v3089, 1.0
      %v3099 = vadd.f32 %v3091, 1.0
      %v3100 = vrcp.pop %v3092
      %v3101 = vmul.f32 1.0, %v3100
      %v3102 = vrcp.pop %v3093
      %v3103 = vmul.f32 1.0, %v3102
      %v3104 = vrcp.pop %v3094
      %v3105 = vmul.f32 1.0, %v3104
      %v3106 = vrcp.pop %v3095
      %v3107 = vmul.f32 1.0, %v3106
      %v3108 = vrcp.pop %v3096
      %v3109 = vmul.f32 1.0, %v3108
      %v3110 = vrcp.pop %v3097
      %v3111 = vmul.f32 1.0, %v3110
      %v3112 = vrcp.pop %v3098
      %v3113 = vmul.f32 1.0, %v3112
      %v3114 = vrcp.pop %v3099
      %v3115 = vmul.f32 1.0, %v3114
      %v3116 = vmul.f32 %v3060, %v3101
      %v3117 = vmul.f32 %v3061, %v3103
      %v3118 = vmul.f32 %v3062, %v3105
      %v3119 = vmul.f32 %v3063, %v3107
      %v3120 = vmul.f32 %v3064, %v3109
      %v3121 = vmul.f32 %v3065, %v3111
      %v3122 = vmul.f32 %v3066, %v3113
      %v3123 = vmul.f32 %v3067, %v3115
      %v3124 = vld [vmem:[%s13] sm:$0x1]
      %v3125 = vpack.c.bf16 %v3117, %v3116
      %v3126 = vpack.c.bf16 %v3119, %v3118
      %v3127 = vpack.c.bf16 %v3121, %v3120
      %v3128 = vpack.c.bf16 %v3123, %v3122
      %v3133 = vunpack.c.l.b16 %v3125
      %v3134 = vunpack.c.h.b16 %v3125
      %v3135 = vunpack.c.l.b16 %v3126
      %v3136 = vunpack.c.h.b16 %v3126
      %v3137 = vunpack.c.l.b16 %v3127
      %v3138 = vunpack.c.h.b16 %v3127
      %v3139 = vunpack.c.l.b16 %v3128
      %v3140 = vunpack.c.h.b16 %v3128
      %v3141 = vpack.c.b16 %v3133, %v3133
      %v3142 = vpack.c.b16 %v3134, %v3134
      %v3143 = vpack.c.b16 %v3135, %v3135
      %v3144 = vpack.c.b16 %v3136, %v3136
      %v3145 = vpack.c.b16 %v3137, %v3137
      %v3146 = vpack.c.b16 %v3138, %v3138
      %v3147 = vpack.c.b16 %v3139, %v3139
      %v3148 = vpack.c.b16 %v3140, %v3140
      %v3150 = vshrl.u32 %v3141, 16
      %v3152 = vrot.slane %v3150, 7
      %v3153 = vshll.u32 %v3141, 16
      %v3155 = vor.u32 %v3152, %v3153
      %v3156 = vrot.slane %v3152, 4
      %v3158 = vshrl.u32 %v3142, 16
      %v3160 = vrot.slane %v3158, 7
      %v3161 = vshll.u32 %v3142, 16
      %v3163 = vor.u32 %v3160, %v3161
      %v3164 = vsel %vm1003, %v3156, %v3163
      %v3165 = vrot.slane %v3160, 4
      %v3167 = vshrl.u32 %v3143, 16
      %v3169 = vrot.slane %v3167, 7
      %v3170 = vshll.u32 %v3143, 16
      %v3172 = vor.u32 %v3169, %v3170
      %v3173 = vsel %vm1003, %v3165, %v3172
      %v3174 = vrot.slane %v3169, 4
      %v3176 = vshrl.u32 %v3144, 16
      %v3178 = vrot.slane %v3176, 7
      %v3179 = vshll.u32 %v3144, 16
      %v3181 = vor.u32 %v3178, %v3179
      %v3182 = vsel %vm1003, %v3174, %v3181
      %v3183 = vrot.slane %v3178, 4
      %v3185 = vshrl.u32 %v3145, 16
      %v3187 = vrot.slane %v3185, 7
      %v3188 = vshll.u32 %v3145, 16
      %v3190 = vor.u32 %v3187, %v3188
      %v3191 = vsel %vm1003, %v3183, %v3190
      %v3192 = vrot.slane %v3187, 4
      %v3194 = vshrl.u32 %v3146, 16
      %v3196 = vrot.slane %v3194, 7
      %v3197 = vshll.u32 %v3146, 16
      %v3199 = vor.u32 %v3196, %v3197
      %v3200 = vsel %vm1003, %v3192, %v3199
      %v3201 = vrot.slane %v3196, 4
      %v3203 = vshrl.u32 %v3147, 16
      %v3205 = vrot.slane %v3203, 7
      %v3206 = vshll.u32 %v3147, 16
      %v3208 = vor.u32 %v3205, %v3206
      %v3209 = vsel %vm1003, %v3201, %v3208
      %v3210 = vrot.slane %v3205, 4
      %v3212 = vshrl.u32 %v3148, 16
      %v3214 = vrot.slane %v3212, 7
      %v3215 = vshll.u32 %v3148, 16
      %v3217 = vor.u32 %v3214, %v3215
      %v3218 = vsel %vm1003, %v3210, %v3217
      %v3219 = vrot.slane %v3214, 4
      %v3229 = vsel %vm525, %v3155, %v1897
      %3230 = vst [vmem:[#allocation2 + $0x4] sm:$0xf] %v3229
      %3231 = vst.msk [vmem:[#allocation2 + $0x8] sm:$0xf] %vm515, %v3164
      %3232 = vst.msk [vmem:[#allocation2 + $0xc] sm:$0xf] %vm515, %v3173
      %3233 = vst.msk [vmem:[#allocation2 + $0x10] sm:$0xf] %vm515, %v3182
      %3234 = vst.msk [vmem:[#allocation2 + $0x14] sm:$0xf] %vm515, %v3191
      %3235 = vst.msk [vmem:[#allocation2 + $0x18] sm:$0xf] %vm515, %v3200
      %3236 = vst.msk [vmem:[#allocation2 + $0x1c] sm:$0xf] %vm515, %v3209
      %3237 = vst.msk [vmem:[#allocation2 + $0x20] sm:$0xf] %vm515, %v3218
      %v3238 = vld [vmem:[#allocation2 + $0x24] sm:$0x1]
      %v3239 = vsel %vm519, %v3219, %v3238
      %3240 = vst [vmem:[#allocation2 + $0x24] sm:$0x1] %v3239
      %v3241 = vld [vmem:[#allocation2] sm:$0xf]
      %v3242 = vld [vmem:[#allocation2 + $0x4] sm:$0xf]
      %v3243 = vld [vmem:[#allocation2 + $0x8] sm:$0xf]
      %v3244 = vld [vmem:[#allocation2 + $0xc] sm:$0xf]
      %v3245 = vld [vmem:[#allocation2 + $0x10] sm:$0xf]
      %v3246 = vld [vmem:[#allocation2 + $0x14] sm:$0xf]
      %v3247 = vld [vmem:[#allocation2 + $0x18] sm:$0xf]
      %v3248 = vld [vmem:[#allocation2 + $0x1c] sm:$0xf]
      %v3249 = vmul.bf16 %v3241, %v1116
      %v3250 = vmul.bf16 %v3242, %v1128
      %v3251 = vmul.bf16 %v3243, %v1140
      %v3252 = vmul.bf16 %v3244, %v1152
      %v3253 = vmul.bf16 %v3245, %v1164
      %v3254 = vmul.bf16 %v3246, %v1176
      %v3255 = vmul.bf16 %v3247, %v1188
      %v3256 = vmul.bf16 %v3248, %v1200
      %v3257 = vld [vmem:[%s12] sm:$0xf]
      %v3258 = vld [vmem:[%s12 + $0x4] sm:$0xf]
      %v3259 = vld [vmem:[%s12 + $0x8] sm:$0xf]
      %v3260 = vld [vmem:[%s12 + $0xc] sm:$0xf]
      %v3261 = vld [vmem:[#allocation2 + $0x20] sm:$0x1]
      %v3262 = vld [vmem:[%s12 + $0x10] sm:$0xf]
      %v3263 = vld [vmem:[%s12 + $0x14] sm:$0xf]
      %v3264 = vld [vmem:[%s12 + $0x18] sm:$0xf]
      %v3265 = vld [vmem:[%s12 + $0x1c] sm:$0xf]
      %v3275 = vunpack.c.l.b16 %v3241
      %v3276 = vunpack.c.l.b16 %v3242
      %v3277 = vunpack.c.l.b16 %v3243
      %v3278 = vunpack.c.l.b16 %v3244
      %v3279 = vunpack.c.l.b16 %v3245
      %v3280 = vunpack.c.l.b16 %v3246
      %v3281 = vunpack.c.l.b16 %v3247
      %v3282 = vunpack.c.l.b16 %v3248
      %v3283 = vunpack.c.l.b16 %v3261
      %v3284 = vpack.c.b16 %v3276, %v3275
      %v3285 = vpack.c.b16 %v3278, %v3277
      %v3286 = vpack.c.b16 %v3280, %v3279
      %v3287 = vpack.c.b16 %v3282, %v3281
      %v3288 = vpack.c.b16 %v3283, %v3283
      %v3290 = vshrl.u32 %v3284, 16
      %v3292 = vshll.u32 %v3284, 16
      %v3294 = vrot.slane %v3292, 1
      %v3295 = vor.u32 %v3290, %v3294
      %v3297 = vshll.u32 %v3285, 16
      %v3299 = vrot.slane %v3297, 1
      %v3300 = vsel %vm1249, %v3295, %v3299
      %v3301 = vshrl.u32 %v3285, 16
      %v3303 = vor.u32 %v3301, %v3299
      %v3305 = vshll.u32 %v3286, 16
      %v3307 = vrot.slane %v3305, 1
      %v3308 = vsel %vm1249, %v3303, %v3307
      %v3309 = vshrl.u32 %v3286, 16
      %v3311 = vor.u32 %v3309, %v3307
      %v3313 = vshll.u32 %v3287, 16
      %v3315 = vrot.slane %v3313, 1
      %v3316 = vsel %vm1249, %v3311, %v3315
      %v3317 = vshrl.u32 %v3287, 16
      %v3319 = vor.u32 %v3317, %v3315
      %v3321 = vshll.u32 %v3288, 16
      %v3323 = vrot.slane %v3321, 1
      %v3324 = vsel %vm1249, %v3319, %v3323
      %v3329 = vunpack.c.l.b16 %v3262
      %v3330 = vunpack.c.l.b16 %v3263
      %v3331 = vunpack.c.l.b16 %v3264
      %v3332 = vunpack.c.l.b16 %v3265
      %v3333 = vpack.c.b16 %v3330, %v3329
      %v3334 = vpack.c.b16 %v3332, %v3331
      %v3338 = vsel %vm533, %v3300, 0
      %v3341 = vsel %vm533, %v3308, 0
      %v3344 = vsel %vm533, %v3316, 0
      %v3347 = vsel %vm533, %v3324, 0
      %3349 = vmatprep.subr.bf16.mxu0 0
      %3350 = vmatpush1.bf16.msra.mxu0 %v3333
      %3351 = vmatprep.subr.bf16.mxu0 0
      %3352 = vmatpush1.bf16.msra.mxu0 %v3334
      %3353 = vmatprep.subr.bf16.mxu0 0
      %3354 = vmatpush1.bf16.msra.mxu0 0
      %3355 = vmatprep.subr.bf16.mxu0 0
      %3356 = vmatpush1.bf16.msra.mxu0 0
      %3357 = vmatprep.subr.bf16.mxu0 0
      %3358 = vmatpush1.bf16.msra.mxu0 0
      %3359 = vmatprep.subr.bf16.mxu0 0
      %3360 = vmatpush1.bf16.msra.mxu0 0
      %3361 = vmatprep.subr.bf16.mxu0 0
      %3362 = vmatpush1.bf16.msra.mxu0 0
      %3363 = vmatprep.subr.bf16.mxu0 0
      %3364 = vmatpush1.bf16.msra.mxu0 0
      %3365 = vmatprep.subr.bf16.mxu0 0
      %3366 = vmatpush1.bf16.msra.mxu0 0
      %3367 = vmatprep.subr.bf16.mxu0 0
      %3368 = vmatpush1.bf16.msra.mxu0 0
      %3369 = vmatprep.subr.bf16.mxu0 0
      %3370 = vmatpush1.bf16.msra.mxu0 0
      %3371 = vmatprep.subr.bf16.mxu0 0
      %3372 = vmatpush1.bf16.msra.mxu0 0
      %3373 = vmatprep.subr.bf16.mxu0 0
      %3374 = vmatpush1.bf16.msra.mxu0 0
      %3375 = vmatprep.subr.bf16.mxu0 0
      %3376 = vmatpush1.bf16.msra.mxu0 0
      %3377 = vmatprep.subr.bf16.mxu0 0
      %3378 = vmatpush1.bf16.msra.mxu0 0
      %3379 = vmatprep.subr.bf16.mxu0 0
      %3380 = vmatpush1.bf16.msra.mxu0 0
      %3381 = vmatprep.mubr.bf16.mxu0 0
      %3382 = vmatmul.mubr.bf16.gmra.mrb[0].mxu0 %v3338
      %v3383 = vpop.f32.mrb[0].mxu0
      %v3384 = vadd.f32 0.0, %v3383
      %v3385 = vpop.f32.mrb[0].mxu0
      %v3386 = vpop.f32.mrb[0].mxu0
      %v3387 = vadd.f32 0.0, %v3386
      %v3388 = vpop.f32.mrb[0].mxu0
      %3389 = vmatprep.mubr.bf16.mxu0 0
      %3390 = vmatmul.mubr.bf16.gmra.mrb[0].mxu0 %v3341
      %v3391 = vpop.f32.mrb[0].mxu0
      %v3392 = vadd.f32 0.0, %v3391
      %v3393 = vpop.f32.mrb[0].mxu0
      %v3394 = vpop.f32.mrb[0].mxu0
      %v3395 = vadd.f32 0.0, %v3394
      %v3396 = vpop.f32.mrb[0].mxu0
      %3397 = vmatprep.mubr.bf16.mxu0 0
      %3398 = vmatmul.mubr.bf16.gmra.mrb[0].mxu0 %v3344
      %v3399 = vpop.f32.mrb[0].mxu0
      %v3400 = vadd.f32 0.0, %v3399
      %v3401 = vpop.f32.mrb[0].mxu0
      %v3402 = vpop.f32.mrb[0].mxu0
      %v3403 = vadd.f32 0.0, %v3402
      %v3404 = vpop.f32.mrb[0].mxu0
      %3405 = vmatprep.mubr.bf16.mxu0 0
      %3406 = vmatmul.mubr.bf16.gmra.mrb[0].mxu0 %v3347
      %v3407 = vpop.f32.mrb[0].mxu0
      %v3408 = vadd.f32 0.0, %v3407
      %v3409 = vpop.f32.mrb[0].mxu0
      %v3410 = vpop.f32.mrb[0].mxu0
      %v3411 = vadd.f32 0.0, %v3410
      %v3412 = vpop.f32.mrb[0].mxu0
      %3413 = vdwg.mxu0
      %v3422 = vunpack.c.l.b16 %v3249
      %v3423 = vunpack.c.l.b16 %v3250
      %v3424 = vunpack.c.l.b16 %v3251
      %v3425 = vunpack.c.l.b16 %v3252
      %v3426 = vunpack.c.l.b16 %v3253
      %v3427 = vunpack.c.l.b16 %v3254
      %v3428 = vunpack.c.l.b16 %v3255
      %v3429 = vunpack.c.l.b16 %v3256
      %v3430 = vpack.c.b16 %v3423, %v3422
      %v3431 = vpack.c.b16 %v3425, %v3424
      %v3432 = vpack.c.b16 %v3427, %v3426
      %v3433 = vpack.c.b16 %v3429, %v3428
      %v3438 = vunpack.c.l.b16 %v3257
      %v3439 = vunpack.c.l.b16 %v3258
      %v3440 = vunpack.c.l.b16 %v3259
      %v3441 = vunpack.c.l.b16 %v3260
      %v3442 = vpack.c.b16 %v3439, %v3438
      %v3443 = vpack.c.b16 %v3441, %v3440
      %v3447 = vsel %vm533, %v3430, 0
      %v3450 = vsel %vm533, %v3431, 0
      %v3453 = vsel %vm533, %v3432, 0
      %v3456 = vsel %vm533, %v3433, 0
      %3458 = vmatprep.subr.bf16.mxu0 0
      %3459 = vmatpush1.bf16.msra.mxu0 %v3442
      %3460 = vmatprep.subr.bf16.mxu0 0
      %3461 = vmatpush1.bf16.msra.mxu0 %v3443
      %3462 = vmatprep.subr.bf16.mxu0 0
      %3463 = vmatpush1.bf16.msra.mxu0 0
      %3464 = vmatprep.subr.bf16.mxu0 0
      %3465 = vmatpush1.bf16.msra.mxu0 0
      %3466 = vmatprep.subr.bf16.mxu0 0
      %3467 = vmatpush1.bf16.msra.mxu0 0
      %3468 = vmatprep.subr.bf16.mxu0 0
      %3469 = vmatpush1.bf16.msra.mxu0 0
      %3470 = vmatprep.subr.bf16.mxu0 0
      %3471 = vmatpush1.bf16.msra.mxu0 0
      %3472 = vmatprep.subr.bf16.mxu0 0
      %3473 = vmatpush1.bf16.msra.mxu0 0
      %3474 = vmatprep.subr.bf16.mxu0 0
      %3475 = vmatpush1.bf16.msra.mxu0 0
      %3476 = vmatprep.subr.bf16.mxu0 0
      %3477 = vmatpush1.bf16.msra.mxu0 0
      %3478 = vmatprep.subr.bf16.mxu0 0
      %3479 = vmatpush1.bf16.msra.mxu0 0
      %3480 = vmatprep.subr.bf16.mxu0 0
      %3481 = vmatpush1.bf16.msra.mxu0 0
      %3482 = vmatprep.subr.bf16.mxu0 0
      %3483 = vmatpush1.bf16.msra.mxu0 0
      %3484 = vmatprep.subr.bf16.mxu0 0
      %3485 = vmatpush1.bf16.msra.mxu0 0
      %3486 = vmatprep.subr.bf16.mxu0 0
      %3487 = vmatpush1.bf16.msra.mxu0 0
      %3488 = vmatprep.subr.bf16.mxu0 0
      %3489 = vmatpush1.bf16.msra.mxu0 0
      %3490 = vmatprep.mubr.bf16.mxu0 0
      %3491 = vmatmul.mubr.bf16.gmra.mrb[0].mxu0 %v3447
      %v3492 = vpop.f32.mrb[0].mxu0
      %v3493 = vadd.f32 %v3384, %v3492
      %v3494 = vpop.f32.mrb[0].mxu0
      %v3495 = vpop.f32.mrb[0].mxu0
      %v3496 = vadd.f32 %v3387, %v3495
      %v3497 = vpop.f32.mrb[0].mxu0
      %3498 = vmatprep.mubr.bf16.mxu0 0
      %3499 = vmatmul.mubr.bf16.gmra.mrb[0].mxu0 %v3450
      %v3500 = vpop.f32.mrb[0].mxu0
      %v3501 = vadd.f32 %v3392, %v3500
      %v3502 = vpop.f32.mrb[0].mxu0
      %v3503 = vpop.f32.mrb[0].mxu0
      %v3504 = vadd.f32 %v3395, %v3503
      %v3505 = vpop.f32.mrb[0].mxu0
      %3506 = vmatprep.mubr.bf16.mxu0 0
      %3507 = vmatmul.mubr.bf16.gmra.mrb[0].mxu0 %v3453
      %v3508 = vpop.f32.mrb[0].mxu0
      %v3509 = vadd.f32 %v3400, %v3508
      %v3510 = vpop.f32.mrb[0].mxu0
      %v3511 = vpop.f32.mrb[0].mxu0
      %v3512 = vadd.f32 %v3403, %v3511
      %v3513 = vpop.f32.mrb[0].mxu0
      %3514 = vmatprep.mubr.bf16.mxu0 0
      %3515 = vmatmul.mubr.bf16.gmra.mrb[0].mxu0 %v3456
      %v3516 = vpop.f32.mrb[0].mxu0
      %v3517 = vadd.f32 %v3408, %v3516
      %v3518 = vpop.f32.mrb[0].mxu0
      %v3519 = vpop.f32.mrb[0].mxu0
      %v3520 = vadd.f32 %v3411, %v3519
      %v3521 = vpop.f32.mrb[0].mxu0
      %3522 = vdwg.mxu0
      %v3523 = vld [vmem:[#allocation2] sm:$0xe]
      %v3524 = vmul.bf16 %v3523, %v1592
      %v3525 = vmul.bf16 %v3242, %v1595
      %v3526 = vmul.bf16 %v3243, %v1598
      %v3527 = vmul.bf16 %v3244, %v1601
      %v3528 = vmul.bf16 %v3245, %v1604
      %v3529 = vmul.bf16 %v3246, %v1607
      %v3530 = vmul.bf16 %v3247, %v1610
      %v3531 = vmul.bf16 %v3248, %v1613
      %v3532 = vmul.bf16 %v3261, %v1614
      %v3533 = vld [vmem:[%s12 + $0x20] sm:$0xf]
      %v3534 = vld [vmem:[%s12 + $0x24] sm:$0xf]
      %v3535 = vld [vmem:[%s12 + $0x28] sm:$0xf]
      %v3536 = vld [vmem:[%s12 + $0x2c] sm:$0xf]
      %v3546 = vunpack.c.l.b16 %v3524
      %v3547 = vunpack.c.l.b16 %v3525
      %v3548 = vunpack.c.l.b16 %v3526
      %v3549 = vunpack.c.l.b16 %v3527
      %v3550 = vunpack.c.l.b16 %v3528
      %v3551 = vunpack.c.l.b16 %v3529
      %v3552 = vunpack.c.l.b16 %v3530
      %v3553 = vunpack.c.l.b16 %v3531
      %v3554 = vunpack.c.l.b16 %v3532
      %v3555 = vpack.c.b16 %v3547, %v3546
      %v3556 = vpack.c.b16 %v3549, %v3548
      %v3557 = vpack.c.b16 %v3551, %v3550
      %v3558 = vpack.c.b16 %v3553, %v3552
      %v3559 = vpack.c.b16 %v3554, %v3554
      %v3560 = vrot.slane %v3555, 1
      %v3561 = vrot.slane %v3556, 1
      %v3562 = vsel %vm1660, %v3560, %v3561
      %v3563 = vrot.slane %v3557, 1
      %v3564 = vsel %vm1660, %v3561, %v3563
      %v3565 = vrot.slane %v3558, 1
      %v3566 = vsel %vm1660, %v3563, %v3565
      %v3567 = vrot.slane %v3559, 1
      %v3568 = vsel %vm1660, %v3565, %v3567
      %v3573 = vunpack.c.l.b16 %v3533
      %v3574 = vunpack.c.l.b16 %v3534
      %v3575 = vunpack.c.l.b16 %v3535
      %v3576 = vunpack.c.l.b16 %v3536
      %v3577 = vpack.c.b16 %v3574, %v3573
      %v3578 = vpack.c.b16 %v3576, %v3575
      %v3582 = vsel %vm533, %v3562, 0
      %v3585 = vsel %vm533, %v3564, 0
      %v3588 = vsel %vm533, %v3566, 0
      %v3591 = vsel %vm533, %v3568, 0
      %3593 = vmatprep.subr.bf16.mxu0 0
      %3594 = vmatpush1.bf16.msra.mxu0 %v3577
      %3595 = vmatprep.subr.bf16.mxu0 0
      %3596 = vmatpush1.bf16.msra.mxu0 %v3578
      %3597 = vmatprep.subr.bf16.mxu0 0
      %3598 = vmatpush1.bf16.msra.mxu0 0
      %3599 = vmatprep.subr.bf16.mxu0 0
      %3600 = vmatpush1.bf16.msra.mxu0 0
      %3601 = vmatprep.subr.bf16.mxu0 0
      %3602 = vmatpush1.bf16.msra.mxu0 0
      %3603 = vmatprep.subr.bf16.mxu0 0
      %3604 = vmatpush1.bf16.msra.mxu0 0
      %3605 = vmatprep.subr.bf16.mxu0 0
      %3606 = vmatpush1.bf16.msra.mxu0 0
      %3607 = vmatprep.subr.bf16.mxu0 0
      %3608 = vmatpush1.bf16.msra.mxu0 0
      %3609 = vmatprep.subr.bf16.mxu0 0
      %3610 = vmatpush1.bf16.msra.mxu0 0
      %3611 = vmatprep.subr.bf16.mxu0 0
      %3612 = vmatpush1.bf16.msra.mxu0 0
      %3613 = vmatprep.subr.bf16.mxu0 0
      %3614 = vmatpush1.bf16.msra.mxu0 0
      %3615 = vmatprep.subr.bf16.mxu0 0
      %3616 = vmatpush1.bf16.msra.mxu0 0
      %3617 = vmatprep.subr.bf16.mxu0 0
      %3618 = vmatpush1.bf16.msra.mxu0 0
      %3619 = vmatprep.subr.bf16.mxu0 0
      %3620 = vmatpush1.bf16.msra.mxu0 0
      %3621 = vmatprep.subr.bf16.mxu0 0
      %3622 = vmatpush1.bf16.msra.mxu0 0
      %3623 = vmatprep.subr.bf16.mxu0 0
      %3624 = vmatpush1.bf16.msra.mxu0 0
      %3625 = vmatprep.mubr.bf16.mxu0 0
      %3626 = vmatmul.mubr.bf16.gmra.mrb[0].mxu0 %v3582
      %v3627 = vpop.f32.mrb[0].mxu0
      %v3628 = vadd.f32 0.0, %v3627
      %v3629 = vpop.f32.mrb[0].mxu0
      %v3630 = vpop.f32.mrb[0].mxu0
      %v3631 = vadd.f32 0.0, %v3630
      %v3632 = vpop.f32.mrb[0].mxu0
      %3633 = vmatprep.mubr.bf16.mxu0 0
      %3634 = vmatmul.mubr.bf16.gmra.mrb[0].mxu0 %v3585
      %v3635 = vpop.f32.mrb[0].mxu0
      %v3636 = vadd.f32 0.0, %v3635
      %v3637 = vpop.f32.mrb[0].mxu0
      %v3638 = vpop.f32.mrb[0].mxu0
      %v3639 = vadd.f32 0.0, %v3638
      %v3640 = vpop.f32.mrb[0].mxu0
      %3641 = vmatprep.mubr.bf16.mxu0 0
      %3642 = vmatmul.mubr.bf16.gmra.mrb[0].mxu0 %v3588
      %v3643 = vpop.f32.mrb[0].mxu0
      %v3644 = vadd.f32 0.0, %v3643
      %v3645 = vpop.f32.mrb[0].mxu0
      %v3646 = vpop.f32.mrb[0].mxu0
      %v3647 = vadd.f32 0.0, %v3646
      %v3648 = vpop.f32.mrb[0].mxu0
      %3649 = vmatprep.mubr.bf16.mxu0 0
      %3650 = vmatmul.mubr.bf16.gmra.mrb[0].mxu0 %v3591
      %v3651 = vpop.f32.mrb[0].mxu0
      %v3652 = vadd.f32 0.0, %v3651
      %v3653 = vpop.f32.mrb[0].mxu0
      %v3654 = vpop.f32.mrb[0].mxu0
      %v3655 = vadd.f32 0.0, %v3654
      %v3656 = vpop.f32.mrb[0].mxu0
      %3657 = vdwg.mxu0
      %v3658 = vadd.f32 %v3493, %v3628
      %v3659 = vadd.f32 %v3496, %v3631
      %v3660 = vadd.f32 %v3501, %v3636
      %v3661 = vadd.f32 %v3504, %v3639
      %v3662 = vadd.f32 %v3509, %v3644
      %v3663 = vadd.f32 %v3512, %v3647
      %v3664 = vadd.f32 %v3517, %v3652
      %v3665 = vadd.f32 %v3520, %v3655
      %v3666 = vld [vmem:[#allocation2 + $0x20] sm:$0xf]
      %v3667 = vmul.bf16 %v3242, %v1116
      %v3668 = vmul.bf16 %v3243, %v1128
      %v3669 = vmul.bf16 %v3244, %v1140
      %v3670 = vmul.bf16 %v3245, %v1152
      %v3671 = vmul.bf16 %v3246, %v1164
      %v3672 = vmul.bf16 %v3247, %v1176
      %v3673 = vmul.bf16 %v3248, %v1188
      %v3674 = vmul.bf16 %v3666, %v1200
      %v3675 = vld [vmem:[%s12 + $0x30] sm:$0xf]
      %v3676 = vld [vmem:[%s12 + $0x34] sm:$0xf]
      %v3677 = vld [vmem:[%s12 + $0x38] sm:$0xf]
      %v3678 = vld [vmem:[%s12 + $0x3c] sm:$0xf]
      %v3687 = vunpack.c.l.b16 %v3667
      %v3688 = vunpack.c.l.b16 %v3668
      %v3689 = vunpack.c.l.b16 %v3669
      %v3690 = vunpack.c.l.b16 %v3670
      %v3691 = vunpack.c.l.b16 %v3671
      %v3692 = vunpack.c.l.b16 %v3672
      %v3693 = vunpack.c.l.b16 %v3673
      %v3694 = vunpack.c.l.b16 %v3674
      %v3695 = vpack.c.b16 %v3688, %v3687
      %v3696 = vpack.c.b16 %v3690, %v3689
      %v3697 = vpack.c.b16 %v3692, %v3691
      %v3698 = vpack.c.b16 %v3694, %v3693
      %v3703 = vunpack.c.l.b16 %v3675
      %v3704 = vunpack.c.l.b16 %v3676
      %v3705 = vunpack.c.l.b16 %v3677
      %v3706 = vunpack.c.l.b16 %v3678
      %v3707 = vpack.c.b16 %v3704, %v3703
      %v3708 = vpack.c.b16 %v3706, %v3705
      %v3712 = vsel %vm533, %v3695, 0
      %v3715 = vsel %vm533, %v3696, 0
      %v3718 = vsel %vm533, %v3697, 0
      %v3721 = vsel %vm533, %v3698, 0
      %3723 = vmatprep.subr.bf16.mxu0 0
      %3724 = vmatpush1.bf16.msra.mxu0 %v3707
      %3725 = vmatprep.subr.bf16.mxu0 0
      %3726 = vmatpush1.bf16.msra.mxu0 %v3708
      %3727 = vmatprep.subr.bf16.mxu0 0
      %3728 = vmatpush1.bf16.msra.mxu0 0
      %3729 = vmatprep.subr.bf16.mxu0 0
      %3730 = vmatpush1.bf16.msra.mxu0 0
      %3731 = vmatprep.subr.bf16.mxu0 0
      %3732 = vmatpush1.bf16.msra.mxu0 0
      %3733 = vmatprep.subr.bf16.mxu0 0
      %3734 = vmatpush1.bf16.msra.mxu0 0
      %3735 = vmatprep.subr.bf16.mxu0 0
      %3736 = vmatpush1.bf16.msra.mxu0 0
      %3737 = vmatprep.subr.bf16.mxu0 0
      %3738 = vmatpush1.bf16.msra.mxu0 0
      %3739 = vmatprep.subr.bf16.mxu0 0
      %3740 = vmatpush1.bf16.msra.mxu0 0
      %3741 = vmatprep.subr.bf16.mxu0 0
      %3742 = vmatpush1.bf16.msra.mxu0 0
      %3743 = vmatprep.subr.bf16.mxu0 0
      %3744 = vmatpush1.bf16.msra.mxu0 0
      %3745 = vmatprep.subr.bf16.mxu0 0
      %3746 = vmatpush1.bf16.msra.mxu0 0
      %3747 = vmatprep.subr.bf16.mxu0 0
      %3748 = vmatpush1.bf16.msra.mxu0 0
      %3749 = vmatprep.subr.bf16.mxu0 0
      %3750 = vmatpush1.bf16.msra.mxu0 0
      %3751 = vmatprep.subr.bf16.mxu0 0
      %3752 = vmatpush1.bf16.msra.mxu0 0
      %3753 = vmatprep.subr.bf16.mxu0 0
      %3754 = vmatpush1.bf16.msra.mxu0 0
      %3755 = vmatprep.mubr.bf16.mxu0 0
      %3756 = vmatmul.mubr.bf16.gmra.mrb[0].mxu0 %v3712
      %v3757 = vpop.f32.mrb[0].mxu0
      %v3758 = vadd.f32 0.0, %v3757
      %v3759 = vpop.f32.mrb[0].mxu0
      %v3760 = vpop.f32.mrb[0].mxu0
      %v3761 = vadd.f32 0.0, %v3760
      %v3762 = vpop.f32.mrb[0].mxu0
      %3763 = vmatprep.mubr.bf16.mxu0 0
      %3764 = vmatmul.mubr.bf16.gmra.mrb[0].mxu0 %v3715
      %v3765 = vpop.f32.mrb[0].mxu0
      %v3766 = vadd.f32 0.0, %v3765
      %v3767 = vpop.f32.mrb[0].mxu0
      %v3768 = vpop.f32.mrb[0].mxu0
      %v3769 = vadd.f32 0.0, %v3768
      %v3770 = vpop.f32.mrb[0].mxu0
      %3771 = vmatprep.mubr.bf16.mxu0 0
      %3772 = vmatmul.mubr.bf16.gmra.mrb[0].mxu0 %v3718
      %v3773 = vpop.f32.mrb[0].mxu0
      %v3774 = vadd.f32 0.0, %v3773
      %v3775 = vpop.f32.mrb[0].mxu0
      %v3776 = vpop.f32.mrb[0].mxu0
      %v3777 = vadd.f32 0.0, %v3776
      %v3778 = vpop.f32.mrb[0].mxu0
      %3779 = vmatprep.mubr.bf16.mxu0 0
      %3780 = vmatmul.mubr.bf16.gmra.mrb[0].mxu0 %v3721
      %v3781 = vpop.f32.mrb[0].mxu0
      %v3782 = vadd.f32 0.0, %v3781
      %v3783 = vpop.f32.mrb[0].mxu0
      %v3784 = vpop.f32.mrb[0].mxu0
      %v3785 = vadd.f32 0.0, %v3784
      %v3786 = vpop.f32.mrb[0].mxu0
      %3787 = vdwg.mxu0
      %v3788 = vadd.f32 %v3658, %v3758
      %v3789 = vadd.f32 %v3659, %v3761
      %v3790 = vadd.f32 %v3660, %v3766
      %v3791 = vadd.f32 %v3661, %v3769
      %v3792 = vadd.f32 %v3662, %v3774
      %v3793 = vadd.f32 %v3663, %v3777
      %v3794 = vadd.f32 %v3664, %v3782
      %v3795 = vadd.f32 %v3665, %v3785
      %v3796 = vld [vmem:[#allocation2 + $0x4] sm:$0xf]
      %v3797 = vld [vmem:[#allocation2 + $0x8] sm:$0xf]
      %v3798 = vld [vmem:[#allocation2 + $0xc] sm:$0xf]
      %v3799 = vld [vmem:[#allocation2 + $0x10] sm:$0xf]
      %v3800 = vld [vmem:[#allocation2 + $0x14] sm:$0xf]
      %v3801 = vld [vmem:[#allocation2 + $0x18] sm:$0xf]
      %v3802 = vld [vmem:[#allocation2 + $0x1c] sm:$0xf]
      %v3803 = vld [vmem:[#allocation2 + $0x20] sm:$0xf]
      %v3804 = vld [vmem:[#allocation2 + $0x24] sm:$0x1]
      %v3805 = vld [vmem:[%s12 + $0x40] sm:$0xf]
      %v3806 = vld [vmem:[%s12 + $0x44] sm:$0xf]
      %v3807 = vld [vmem:[%s12 + $0x48] sm:$0xf]
      %v3808 = vld [vmem:[%s12 + $0x4c] sm:$0xf]
      %v3818 = vunpack.c.l.b16 %v3796
      %v3819 = vunpack.c.l.b16 %v3797
      %v3820 = vunpack.c.l.b16 %v3798
      %v3821 = vunpack.c.l.b16 %v3799
      %v3822 = vunpack.c.l.b16 %v3800
      %v3823 = vunpack.c.l.b16 %v3801
      %v3824 = vunpack.c.l.b16 %v3802
      %v3825 = vunpack.c.l.b16 %v3803
      %v3826 = vunpack.c.l.b16 %v3804
      %v3827 = vpack.c.b16 %v3819, %v3818
      %v3828 = vpack.c.b16 %v3821, %v3820
      %v3829 = vpack.c.b16 %v3823, %v3822
      %v3830 = vpack.c.b16 %v3825, %v3824
      %v3831 = vpack.c.b16 %v3826, %v3826
      %v3833 = vshrl.u32 %v3827, 16
      %v3835 = vshll.u32 %v3827, 16
      %v3837 = vrot.slane %v3835, 1
      %v3838 = vor.u32 %v3833, %v3837
      %v3840 = vshll.u32 %v3828, 16
      %v3842 = vrot.slane %v3840, 1
      %v3843 = vsel %vm1249, %v3838, %v3842
      %v3844 = vshrl.u32 %v3828, 16
      %v3846 = vor.u32 %v3844, %v3842
      %v3848 = vshll.u32 %v3829, 16
      %v3850 = vrot.slane %v3848, 1
      %v3851 = vsel %vm1249, %v3846, %v3850
      %v3852 = vshrl.u32 %v3829, 16
      %v3854 = vor.u32 %v3852, %v3850
      %v3856 = vshll.u32 %v3830, 16
      %v3858 = vrot.slane %v3856, 1
      %v3859 = vsel %vm1249, %v3854, %v3858
      %v3860 = vshrl.u32 %v3830, 16
      %v3862 = vor.u32 %v3860, %v3858
      %v3864 = vshll.u32 %v3831, 16
      %v3866 = vrot.slane %v3864, 1
      %v3867 = vsel %vm1249, %v3862, %v3866
      %v3872 = vunpack.c.l.b16 %v3805
      %v3873 = vunpack.c.l.b16 %v3806
      %v3874 = vunpack.c.l.b16 %v3807
      %v3875 = vunpack.c.l.b16 %v3808
      %v3876 = vpack.c.b16 %v3873, %v3872
      %v3877 = vpack.c.b16 %v3875, %v3874
      %v3881 = vsel %vm533, %v3843, 0
      %v3884 = vsel %vm533, %v3851, 0
      %v3887 = vsel %vm533, %v3859, 0
      %v3890 = vsel %vm533, %v3867, 0
      %3892 = vmatprep.subr.bf16.mxu0 0
      %3893 = vmatpush1.bf16.msra.mxu0 %v3876
      %3894 = vmatprep.subr.bf16.mxu0 0
      %3895 = vmatpush1.bf16.msra.mxu0 %v3877
      %3896 = vmatprep.subr.bf16.mxu0 0
      %3897 = vmatpush1.bf16.msra.mxu0 0
      %3898 = vmatprep.subr.bf16.mxu0 0
      %3899 = vmatpush1.bf16.msra.mxu0 0
      %3900 = vmatprep.subr.bf16.mxu0 0
      %3901 = vmatpush1.bf16.msra.mxu0 0
      %3902 = vmatprep.subr.bf16.mxu0 0
      %3903 = vmatpush1.bf16.msra.mxu0 0
      %3904 = vmatprep.subr.bf16.mxu0 0
      %3905 = vmatpush1.bf16.msra.mxu0 0
      %3906 = vmatprep.subr.bf16.mxu0 0
      %3907 = vmatpush1.bf16.msra.mxu0 0
      %3908 = vmatprep.subr.bf16.mxu0 0
      %3909 = vmatpush1.bf16.msra.mxu0 0
      %3910 = vmatprep.subr.bf16.mxu0 0
      %3911 = vmatpush1.bf16.msra.mxu0 0
      %3912 = vmatprep.subr.bf16.mxu0 0
      %3913 = vmatpush1.bf16.msra.mxu0 0
      %3914 = vmatprep.subr.bf16.mxu0 0
      %3915 = vmatpush1.bf16.msra.mxu0 0
      %3916 = vmatprep.subr.bf16.mxu0 0
      %3917 = vmatpush1.bf16.msra.mxu0 0
      %3918 = vmatprep.subr.bf16.mxu0 0
      %3919 = vmatpush1.bf16.msra.mxu0 0
      %3920 = vmatprep.subr.bf16.mxu0 0
      %3921 = vmatpush1.bf16.msra.mxu0 0
      %3922 = vmatprep.subr.bf16.mxu0 0
      %3923 = vmatpush1.bf16.msra.mxu0 0
      %3924 = vmatprep.mubr.bf16.mxu0 0
      %3925 = vmatmul.mubr.bf16.gmra.mrb[0].mxu0 %v3881
      %v3926 = vpop.f32.mrb[0].mxu0
      %v3927 = vadd.f32 0.0, %v3926
      %v3928 = vpop.f32.mrb[0].mxu0
      %v3929 = vpop.f32.mrb[0].mxu0
      %v3930 = vadd.f32 0.0, %v3929
      %v3931 = vpop.f32.mrb[0].mxu0
      %3932 = vmatprep.mubr.bf16.mxu0 0
      %3933 = vmatmul.mubr.bf16.gmra.mrb[0].mxu0 %v3884
      %v3934 = vpop.f32.mrb[0].mxu0
      %v3935 = vadd.f32 0.0, %v3934
      %v3936 = vpop.f32.mrb[0].mxu0
      %v3937 = vpop.f32.mrb[0].mxu0
      %v3938 = vadd.f32 0.0, %v3937
      %v3939 = vpop.f32.mrb[0].mxu0
      %3940 = vmatprep.mubr.bf16.mxu0 0
      %3941 = vmatmul.mubr.bf16.gmra.mrb[0].mxu0 %v3887
      %v3942 = vpop.f32.mrb[0].mxu0
      %v3943 = vadd.f32 0.0, %v3942
      %v3944 = vpop.f32.mrb[0].mxu0
      %v3945 = vpop.f32.mrb[0].mxu0
      %v3946 = vadd.f32 0.0, %v3945
      %v3947 = vpop.f32.mrb[0].mxu0
      %3948 = vmatprep.mubr.bf16.mxu0 0
      %3949 = vmatmul.mubr.bf16.gmra.mrb[0].mxu0 %v3890
      %v3950 = vpop.f32.mrb[0].mxu0
      %v3951 = vadd.f32 0.0, %v3950
      %v3952 = vpop.f32.mrb[0].mxu0
      %v3953 = vpop.f32.mrb[0].mxu0
      %v3954 = vadd.f32 0.0, %v3953
      %v3955 = vpop.f32.mrb[0].mxu0
      %3956 = vdwg.mxu0
      %v3957 = vadd.f32 %v3788, %v3927
      %v3958 = vadd.f32 %v3789, %v3930
      %v3959 = vadd.f32 %v3790, %v3935
      %v3960 = vadd.f32 %v3791, %v3938
      %v3961 = vadd.f32 %v3792, %v3943
      %v3962 = vadd.f32 %v3793, %v3946
      %v3963 = vadd.f32 %v3794, %v3951
      %v3964 = vadd.f32 %v3795, %v3954
      %v3965 = vld [vmem:[#allocation2 + $0x4] sm:$0xe]
      %v3966 = vmul.bf16 %v3965, %v1592
      %v3967 = vmul.bf16 %v3797, %v1595
      %v3968 = vmul.bf16 %v3798, %v1598
      %v3969 = vmul.bf16 %v3799, %v1601
      %v3970 = vmul.bf16 %v3800, %v1604
      %v3971 = vmul.bf16 %v3801, %v1607
      %v3972 = vmul.bf16 %v3802, %v1610
      %v3973 = vmul.bf16 %v3803, %v1613
      %v3974 = vmul.bf16 %v3804, %v1614
      %v3975 = vld [vmem:[%s12 + $0x50] sm:$0xf]
      %v3976 = vld [vmem:[%s12 + $0x54] sm:$0xf]
      %v3977 = vld [vmem:[%s12 + $0x58] sm:$0xf]
      %v3978 = vld [vmem:[%s12 + $0x5c] sm:$0xf]
      %v3988 = vunpack.c.l.b16 %v3966
      %v3989 = vunpack.c.l.b16 %v3967
      %v3990 = vunpack.c.l.b16 %v3968
      %v3991 = vunpack.c.l.b16 %v3969
      %v3992 = vunpack.c.l.b16 %v3970
      %v3993 = vunpack.c.l.b16 %v3971
      %v3994 = vunpack.c.l.b16 %v3972
      %v3995 = vunpack.c.l.b16 %v3973
      %v3996 = vunpack.c.l.b16 %v3974
      %v3997 = vpack.c.b16 %v3989, %v3988
      %v3998 = vpack.c.b16 %v3991, %v3990
      %v3999 = vpack.c.b16 %v3993, %v3992
      %v4000 = vpack.c.b16 %v3995, %v3994
      %v4001 = vpack.c.b16 %v3996, %v3996
      %v4002 = vrot.slane %v3997, 1
      %v4003 = vrot.slane %v3998, 1
      %v4004 = vsel %vm1660, %v4002, %v4003
      %v4005 = vrot.slane %v3999, 1
      %v4006 = vsel %vm1660, %v4003, %v4005
      %v4007 = vrot.slane %v4000, 1
      %v4008 = vsel %vm1660, %v4005, %v4007
      %v4009 = vrot.slane %v4001, 1
      %v4010 = vsel %vm1660, %v4007, %v4009
      %v4015 = vunpack.c.l.b16 %v3975
      %v4016 = vunpack.c.l.b16 %v3976
      %v4017 = vunpack.c.l.b16 %v3977
      %v4018 = vunpack.c.l.b16 %v3978
      %v4019 = vpack.c.b16 %v4016, %v4015
      %v4020 = vpack.c.b16 %v4018, %v4017
      %v4024 = vsel %vm533, %v4004, 0
      %v4027 = vsel %vm533, %v4006, 0
      %v4030 = vsel %vm533, %v4008, 0
      %v4033 = vsel %vm533, %v4010, 0
      %4035 = vmatprep.subr.bf16.mxu0 0
      %4036 = vmatpush1.bf16.msra.mxu0 %v4019
      %4037 = vmatprep.subr.bf16.mxu0 0
      %4038 = vmatpush1.bf16.msra.mxu0 %v4020
      %4039 = vmatprep.subr.bf16.mxu0 0
      %4040 = vmatpush1.bf16.msra.mxu0 0
      %4041 = vmatprep.subr.bf16.mxu0 0
      %4042 = vmatpush1.bf16.msra.mxu0 0
      %4043 = vmatprep.subr.bf16.mxu0 0
      %4044 = vmatpush1.bf16.msra.mxu0 0
      %4045 = vmatprep.subr.bf16.mxu0 0
      %4046 = vmatpush1.bf16.msra.mxu0 0
      %4047 = vmatprep.subr.bf16.mxu0 0
      %4048 = vmatpush1.bf16.msra.mxu0 0
      %4049 = vmatprep.subr.bf16.mxu0 0
      %4050 = vmatpush1.bf16.msra.mxu0 0
      %4051 = vmatprep.subr.bf16.mxu0 0
      %4052 = vmatpush1.bf16.msra.mxu0 0
      %4053 = vmatprep.subr.bf16.mxu0 0
      %4054 = vmatpush1.bf16.msra.mxu0 0
      %4055 = vmatprep.subr.bf16.mxu0 0
      %4056 = vmatpush1.bf16.msra.mxu0 0
      %4057 = vmatprep.subr.bf16.mxu0 0
      %4058 = vmatpush1.bf16.msra.mxu0 0
      %4059 = vmatprep.subr.bf16.mxu0 0
      %4060 = vmatpush1.bf16.msra.mxu0 0
      %4061 = vmatprep.subr.bf16.mxu0 0
      %4062 = vmatpush1.bf16.msra.mxu0 0
      %4063 = vmatprep.subr.bf16.mxu0 0
      %4064 = vmatpush1.bf16.msra.mxu0 0
      %4065 = vmatprep.subr.bf16.mxu0 0
      %4066 = vmatpush1.bf16.msra.mxu0 0
      %4067 = vmatprep.mubr.bf16.mxu0 0
      %4068 = vmatmul.mubr.bf16.gmra.mrb[0].mxu0 %v4024
      %v4069 = vpop.f32.mrb[0].mxu0
      %v4070 = vadd.f32 0.0, %v4069
      %v4071 = vpop.f32.mrb[0].mxu0
      %v4072 = vpop.f32.mrb[0].mxu0
      %v4073 = vadd.f32 0.0, %v4072
      %v4074 = vpop.f32.mrb[0].mxu0
      %4075 = vmatprep.mubr.bf16.mxu0 0
      %4076 = vmatmul.mubr.bf16.gmra.mrb[0].mxu0 %v4027
      %v4077 = vpop.f32.mrb[0].mxu0
      %v4078 = vadd.f32 0.0, %v4077
      %v4079 = vpop.f32.mrb[0].mxu0
      %v4080 = vpop.f32.mrb[0].mxu0
      %v4081 = vadd.f32 0.0, %v4080
      %v4082 = vpop.f32.mrb[0].mxu0
      %4083 = vmatprep.mubr.bf16.mxu0 0
      %4084 = vmatmul.mubr.bf16.gmra.mrb[0].mxu0 %v4030
      %v4085 = vpop.f32.mrb[0].mxu0
      %v4086 = vadd.f32 0.0, %v4085
      %v4087 = vpop.f32.mrb[0].mxu0
      %v4088 = vpop.f32.mrb[0].mxu0
      %v4089 = vadd.f32 0.0, %v4088
      %v4090 = vpop.f32.mrb[0].mxu0
      %4091 = vmatprep.mubr.bf16.mxu0 0
      %4092 = vmatmul.mubr.bf16.gmra.mrb[0].mxu0 %v4033
      %v4093 = vpop.f32.mrb[0].mxu0
      %v4094 = vadd.f32 0.0, %v4093
      %v4095 = vpop.f32.mrb[0].mxu0
      %v4096 = vpop.f32.mrb[0].mxu0
      %v4097 = vadd.f32 0.0, %v4096
      %v4098 = vpop.f32.mrb[0].mxu0
      %4099 = vdwg.mxu0
      %v4100 = vadd.f32 %v3957, %v4070
      %v4101 = vadd.f32 %v3958, %v4073
      %v4102 = vadd.f32 %v3959, %v4078
      %v4103 = vadd.f32 %v3960, %v4081
      %v4104 = vadd.f32 %v3961, %v4086
      %v4105 = vadd.f32 %v3962, %v4089
      %v4106 = vadd.f32 %v3963, %v4094
      %v4107 = vadd.f32 %v3964, %v4097
      %v4108 = vld [vmem:[#allocation2 + $0x24] sm:$0xf]
      %v4109 = vmul.bf16 %v3797, %v1116
      %v4110 = vmul.bf16 %v3798, %v1128
      %v4111 = vmul.bf16 %v3799, %v1140
      %v4112 = vmul.bf16 %v3800, %v1152
      %v4113 = vmul.bf16 %v3801, %v1164
      %v4114 = vmul.bf16 %v3802, %v1176
      %v4115 = vmul.bf16 %v3803, %v1188
      %v4116 = vmul.bf16 %v4108, %v1200
      %v4117 = vld [vmem:[%s12 + $0x60] sm:$0xf]
      %v4118 = vld [vmem:[%s12 + $0x64] sm:$0xf]
      %v4119 = vld [vmem:[%s12 + $0x68] sm:$0xf]
      %v4120 = vld [vmem:[%s12 + $0x6c] sm:$0xf]
      %v4129 = vunpack.c.l.b16 %v4109
      %v4130 = vunpack.c.l.b16 %v4110
      %v4131 = vunpack.c.l.b16 %v4111
      %v4132 = vunpack.c.l.b16 %v4112
      %v4133 = vunpack.c.l.b16 %v4113
      %v4134 = vunpack.c.l.b16 %v4114
      %v4135 = vunpack.c.l.b16 %v4115
      %v4136 = vunpack.c.l.b16 %v4116
      %v4137 = vpack.c.b16 %v4130, %v4129
      %v4138 = vpack.c.b16 %v4132, %v4131
      %v4139 = vpack.c.b16 %v4134, %v4133
      %v4140 = vpack.c.b16 %v4136, %v4135
      %v4145 = vunpack.c.l.b16 %v4117
      %v4146 = vunpack.c.l.b16 %v4118
      %v4147 = vunpack.c.l.b16 %v4119
      %v4148 = vunpack.c.l.b16 %v4120
      %v4149 = vpack.c.b16 %v4146, %v4145
      %v4150 = vpack.c.b16 %v4148, %v4147
      %v4154 = vsel %vm533, %v4137, 0
      %v4157 = vsel %vm533, %v4138, 0
      %v4160 = vsel %vm533, %v4139, 0
      %v4163 = vsel %vm533, %v4140, 0
      %4165 = vmatprep.subr.bf16.mxu0 0
      %4166 = vmatpush1.bf16.msra.mxu0 %v4149
      %4167 = vmatprep.subr.bf16.mxu0 0
      %4168 = vmatpush1.bf16.msra.mxu0 %v4150
      %4169 = vmatprep.subr.bf16.mxu0 0
      %4170 = vmatpush1.bf16.msra.mxu0 0
      %4171 = vmatprep.subr.bf16.mxu0 0
      %4172 = vmatpush1.bf16.msra.mxu0 0
      %4173 = vmatprep.subr.bf16.mxu0 0
      %4174 = vmatpush1.bf16.msra.mxu0 0
      %4175 = vmatprep.subr.bf16.mxu0 0
      %4176 = vmatpush1.bf16.msra.mxu0 0
      %4177 = vmatprep.subr.bf16.mxu0 0
      %4178 = vmatpush1.bf16.msra.mxu0 0
      %4179 = vmatprep.subr.bf16.mxu0 0
      %4180 = vmatpush1.bf16.msra.mxu0 0
      %4181 = vmatprep.subr.bf16.mxu0 0
      %4182 = vmatpush1.bf16.msra.mxu0 0
      %4183 = vmatprep.subr.bf16.mxu0 0
      %4184 = vmatpush1.bf16.msra.mxu0 0
      %4185 = vmatprep.subr.bf16.mxu0 0
      %4186 = vmatpush1.bf16.msra.mxu0 0
      %4187 = vmatprep.subr.bf16.mxu0 0
      %4188 = vmatpush1.bf16.msra.mxu0 0
      %4189 = vmatprep.subr.bf16.mxu0 0
      %4190 = vmatpush1.bf16.msra.mxu0 0
      %4191 = vmatprep.subr.bf16.mxu0 0
      %4192 = vmatpush1.bf16.msra.mxu0 0
      %4193 = vmatprep.subr.bf16.mxu0 0
      %4194 = vmatpush1.bf16.msra.mxu0 0
      %4195 = vmatprep.subr.bf16.mxu0 0
      %4196 = vmatpush1.bf16.msra.mxu0 0
      %4197 = vmatprep.mubr.bf16.mxu0 0
      %4198 = vmatmul.mubr.bf16.gmra.mrb[0].mxu0 %v4154
      %v4199 = vpop.f32.mrb[0].mxu0
      %v4200 = vadd.f32 0.0, %v4199
      %v4201 = vpop.f32.mrb[0].mxu0
      %v4202 = vpop.f32.mrb[0].mxu0
      %v4203 = vadd.f32 0.0, %v4202
      %v4204 = vpop.f32.mrb[0].mxu0
      %4205 = vmatprep.mubr.bf16.mxu0 0
      %4206 = vmatmul.mubr.bf16.gmra.mrb[0].mxu0 %v4157
      %v4207 = vpop.f32.mrb[0].mxu0
      %v4208 = vadd.f32 0.0, %v4207
      %v4209 = vpop.f32.mrb[0].mxu0
      %v4210 = vpop.f32.mrb[0].mxu0
      %v4211 = vadd.f32 0.0, %v4210
      %v4212 = vpop.f32.mrb[0].mxu0
      %4213 = vmatprep.mubr.bf16.mxu0 0
      %4214 = vmatmul.mubr.bf16.gmra.mrb[0].mxu0 %v4160
      %v4215 = vpop.f32.mrb[0].mxu0
      %v4216 = vadd.f32 0.0, %v4215
      %v4217 = vpop.f32.mrb[0].mxu0
      %v4218 = vpop.f32.mrb[0].mxu0
      %v4219 = vadd.f32 0.0, %v4218
      %v4220 = vpop.f32.mrb[0].mxu0
      %4221 = vmatprep.mubr.bf16.mxu0 0
      %4222 = vmatmul.mubr.bf16.gmra.mrb[0].mxu0 %v4163
      %v4223 = vpop.f32.mrb[0].mxu0
      %v4224 = vadd.f32 0.0, %v4223
      %v4225 = vpop.f32.mrb[0].mxu0
      %v4226 = vpop.f32.mrb[0].mxu0
      %v4227 = vadd.f32 0.0, %v4226
      %v4228 = vpop.f32.mrb[0].mxu0
      %4229 = vdwg.mxu0
      %v4230 = vadd.f32 %v4100, %v4200
      %v4231 = vadd.f32 %v4101, %v4203
      %v4232 = vadd.f32 %v4102, %v4208
      %v4233 = vadd.f32 %v4103, %v4211
      %v4234 = vadd.f32 %v4104, %v4216
      %v4235 = vadd.f32 %v4105, %v4219
      %v4236 = vadd.f32 %v4106, %v4224
      %v4237 = vadd.f32 %v4107, %v4227
      %v4238 = vld [vmem:[#allocation2 + $0x8] sm:$0xf]
      %v4239 = vld [vmem:[#allocation2 + $0xc] sm:$0xf]
      %v4240 = vld [vmem:[#allocation2 + $0x10] sm:$0xf]
      %v4241 = vld [vmem:[#allocation2 + $0x14] sm:$0xf]
      %v4242 = vld [vmem:[#allocation2 + $0x18] sm:$0xf]
      %v4243 = vld [vmem:[#allocation2 + $0x1c] sm:$0xf]
      %v4244 = vld [vmem:[#allocation2 + $0x20] sm:$0xf]
      %v4245 = vld [vmem:[#allocation2 + $0x24] sm:$0xf]
      %v4246 = vld [vmem:[#allocation2 + $0x28] sm:$0x1]
      %v4247 = vld [vmem:[%s12 + $0x70] sm:$0xf]
      %v4248 = vld [vmem:[%s12 + $0x74] sm:$0xf]
      %v4249 = vld [vmem:[%s12 + $0x78] sm:$0xf]
      %v4250 = vld [vmem:[%s12 + $0x7c] sm:$0xf]
      %v4260 = vunpack.c.l.b16 %v4238
      %v4261 = vunpack.c.l.b16 %v4239
      %v4262 = vunpack.c.l.b16 %v4240
      %v4263 = vunpack.c.l.b16 %v4241
      %v4264 = vunpack.c.l.b16 %v4242
      %v4265 = vunpack.c.l.b16 %v4243
      %v4266 = vunpack.c.l.b16 %v4244
      %v4267 = vunpack.c.l.b16 %v4245
      %v4268 = vunpack.c.l.b16 %v4246
      %v4269 = vpack.c.b16 %v4261, %v4260
      %v4270 = vpack.c.b16 %v4263, %v4262
      %v4271 = vpack.c.b16 %v4265, %v4264
      %v4272 = vpack.c.b16 %v4267, %v4266
      %v4273 = vpack.c.b16 %v4268, %v4268
      %v4275 = vshrl.u32 %v4269, 16
      %v4277 = vshll.u32 %v4269, 16
      %v4279 = vrot.slane %v4277, 1
      %v4280 = vor.u32 %v4275, %v4279
      %v4282 = vshll.u32 %v4270, 16
      %v4284 = vrot.slane %v4282, 1
      %v4285 = vsel %vm1249, %v4280, %v4284
      %v4286 = vshrl.u32 %v4270, 16
      %v4288 = vor.u32 %v4286, %v4284
      %v4290 = vshll.u32 %v4271, 16
      %v4292 = vrot.slane %v4290, 1
      %v4293 = vsel %vm1249, %v4288, %v4292
      %v4294 = vshrl.u32 %v4271, 16
      %v4296 = vor.u32 %v4294, %v4292
      %v4298 = vshll.u32 %v4272, 16
      %v4300 = vrot.slane %v4298, 1
      %v4301 = vsel %vm1249, %v4296, %v4300
      %v4302 = vshrl.u32 %v4272, 16
      %v4304 = vor.u32 %v4302, %v4300
      %v4306 = vshll.u32 %v4273, 16
      %v4308 = vrot.slane %v4306, 1
      %v4309 = vsel %vm1249, %v4304, %v4308
      %v4314 = vunpack.c.l.b16 %v4247
      %v4315 = vunpack.c.l.b16 %v4248
      %v4316 = vunpack.c.l.b16 %v4249
      %v4317 = vunpack.c.l.b16 %v4250
      %v4318 = vpack.c.b16 %v4315, %v4314
      %v4319 = vpack.c.b16 %v4317, %v4316
      %v4323 = vsel %vm533, %v4285, 0
      %v4326 = vsel %vm533, %v4293, 0
      %v4329 = vsel %vm533, %v4301, 0
      %v4332 = vsel %vm533, %v4309, 0
      %4334 = vmatprep.subr.bf16.mxu0 0
      %4335 = vmatpush1.bf16.msra.mxu0 %v4318
      %4336 = vmatprep.subr.bf16.mxu0 0
      %4337 = vmatpush1.bf16.msra.mxu0 %v4319
      %4338 = vmatprep.subr.bf16.mxu0 0
      %4339 = vmatpush1.bf16.msra.mxu0 0
      %4340 = vmatprep.subr.bf16.mxu0 0
      %4341 = vmatpush1.bf16.msra.mxu0 0
      %4342 = vmatprep.subr.bf16.mxu0 0
      %4343 = vmatpush1.bf16.msra.mxu0 0
      %4344 = vmatprep.subr.bf16.mxu0 0
      %4345 = vmatpush1.bf16.msra.mxu0 0
      %4346 = vmatprep.subr.bf16.mxu0 0
      %4347 = vmatpush1.bf16.msra.mxu0 0
      %4348 = vmatprep.subr.bf16.mxu0 0
      %4349 = vmatpush1.bf16.msra.mxu0 0
      %4350 = vmatprep.subr.bf16.mxu0 0
      %4351 = vmatpush1.bf16.msra.mxu0 0
      %4352 = vmatprep.subr.bf16.mxu0 0
      %4353 = vmatpush1.bf16.msra.mxu0 0
      %4354 = vmatprep.subr.bf16.mxu0 0
      %4355 = vmatpush1.bf16.msra.mxu0 0
      %4356 = vmatprep.subr.bf16.mxu0 0
      %4357 = vmatpush1.bf16.msra.mxu0 0
      %4358 = vmatprep.subr.bf16.mxu0 0
      %4359 = vmatpush1.bf16.msra.mxu0 0
      %4360 = vmatprep.subr.bf16.mxu0 0
      %4361 = vmatpush1.bf16.msra.mxu0 0
      %4362 = vmatprep.subr.bf16.mxu0 0
      %4363 = vmatpush1.bf16.msra.mxu0 0
      %4364 = vmatprep.subr.bf16.mxu0 0
      %4365 = vmatpush1.bf16.msra.mxu0 0
      %4366 = vmatprep.mubr.bf16.mxu0 0
      %4367 = vmatmul.mubr.bf16.gmra.mrb[0].mxu0 %v4323
      %v4368 = vpop.f32.mrb[0].mxu0
      %v4369 = vadd.f32 0.0, %v4368
      %v4370 = vpop.f32.mrb[0].mxu0
      %v4371 = vpop.f32.mrb[0].mxu0
      %v4372 = vadd.f32 0.0, %v4371
      %v4373 = vpop.f32.mrb[0].mxu0
      %4374 = vmatprep.mubr.bf16.mxu0 0
      %4375 = vmatmul.mubr.bf16.gmra.mrb[0].mxu0 %v4326
      %v4376 = vpop.f32.mrb[0].mxu0
      %v4377 = vadd.f32 0.0, %v4376
      %v4378 = vpop.f32.mrb[0].mxu0
      %v4379 = vpop.f32.mrb[0].mxu0
      %v4380 = vadd.f32 0.0, %v4379
      %v4381 = vpop.f32.mrb[0].mxu0
      %4382 = vmatprep.mubr.bf16.mxu0 0
      %4383 = vmatmul.mubr.bf16.gmra.mrb[0].mxu0 %v4329
      %v4384 = vpop.f32.mrb[0].mxu0
      %v4385 = vadd.f32 0.0, %v4384
      %v4386 = vpop.f32.mrb[0].mxu0
      %v4387 = vpop.f32.mrb[0].mxu0
      %v4388 = vadd.f32 0.0, %v4387
      %v4389 = vpop.f32.mrb[0].mxu0
      %4390 = vmatprep.mubr.bf16.mxu0 0
      %4391 = vmatmul.mubr.bf16.gmra.mrb[0].mxu0 %v4332
      %v4392 = vpop.f32.mrb[0].mxu0
      %v4393 = vadd.f32 0.0, %v4392
      %v4394 = vpop.f32.mrb[0].mxu0
      %v4395 = vpop.f32.mrb[0].mxu0
      %v4396 = vadd.f32 0.0, %v4395
      %v4397 = vpop.f32.mrb[0].mxu0
      %4398 = vdwg.mxu0
      %v4399 = vadd.f32 %v4230, %v4369
      %v4400 = vadd.f32 %v4231, %v4372
      %v4401 = vadd.f32 %v4232, %v4377
      %v4402 = vadd.f32 %v4233, %v4380
      %v4403 = vadd.f32 %v4234, %v4385
      %v4404 = vadd.f32 %v4235, %v4388
      %v4405 = vadd.f32 %v4236, %v4393
      %v4406 = vadd.f32 %v4237, %v4396
      %v4407 = vld [vmem:[#allocation2 + $0x8] sm:$0xe]
      %v4408 = vmul.bf16 %v4407, %v1592
      %v4409 = vmul.bf16 %v4239, %v1595
      %v4410 = vmul.bf16 %v4240, %v1598
      %v4411 = vmul.bf16 %v4241, %v1601
      %v4412 = vmul.bf16 %v4242, %v1604
      %v4413 = vmul.bf16 %v4243, %v1607
      %v4414 = vmul.bf16 %v4244, %v1610
      %v4415 = vmul.bf16 %v4245, %v1613
      %v4416 = vmul.bf16 %v4246, %v1614
      %v4417 = vld [vmem:[%s12 + $0x80] sm:$0xf]
      %v4418 = vld [vmem:[%s12 + $0x84] sm:$0xf]
      %v4419 = vld [vmem:[%s12 + $0x88] sm:$0xf]
      %v4420 = vld [vmem:[%s12 + $0x8c] sm:$0xf]
      %v4430 = vunpack.c.l.b16 %v4408
      %v4431 = vunpack.c.l.b16 %v4409
      %v4432 = vunpack.c.l.b16 %v4410
      %v4433 = vunpack.c.l.b16 %v4411
      %v4434 = vunpack.c.l.b16 %v4412
      %v4435 = vunpack.c.l.b16 %v4413
      %v4436 = vunpack.c.l.b16 %v4414
      %v4437 = vunpack.c.l.b16 %v4415
      %v4438 = vunpack.c.l.b16 %v4416
      %v4439 = vpack.c.b16 %v4431, %v4430
      %v4440 = vpack.c.b16 %v4433, %v4432
      %v4441 = vpack.c.b16 %v4435, %v4434
      %v4442 = vpack.c.b16 %v4437, %v4436
      %v4443 = vpack.c.b16 %v4438, %v4438
      %v4444 = vrot.slane %v4439, 1
      %v4445 = vrot.slane %v4440, 1
      %v4446 = vsel %vm1660, %v4444, %v4445
      %v4447 = vrot.slane %v4441, 1
      %v4448 = vsel %vm1660, %v4445, %v4447
      %v4449 = vrot.slane %v4442, 1
      %v4450 = vsel %vm1660, %v4447, %v4449
      %v4451 = vrot.slane %v4443, 1
      %v4452 = vsel %vm1660, %v4449, %v4451
      %v4457 = vunpack.c.l.b16 %v4417
      %v4458 = vunpack.c.l.b16 %v4418
      %v4459 = vunpack.c.l.b16 %v4419
      %v4460 = vunpack.c.l.b16 %v4420
      %v4461 = vpack.c.b16 %v4458, %v4457
      %v4462 = vpack.c.b16 %v4460, %v4459
      %v4466 = vsel %vm533, %v4446, 0
      %v4469 = vsel %vm533, %v4448, 0
      %v4472 = vsel %vm533, %v4450, 0
      %v4475 = vsel %vm533, %v4452, 0
      %4477 = vmatprep.subr.bf16.mxu0 0
      %4478 = vmatpush1.bf16.msra.mxu0 %v4461
      %4479 = vmatprep.subr.bf16.mxu0 0
      %4480 = vmatpush1.bf16.msra.mxu0 %v4462
      %4481 = vmatprep.subr.bf16.mxu0 0
      %4482 = vmatpush1.bf16.msra.mxu0 0
      %4483 = vmatprep.subr.bf16.mxu0 0
      %4484 = vmatpush1.bf16.msra.mxu0 0
      %4485 = vmatprep.subr.bf16.mxu0 0
      %4486 = vmatpush1.bf16.msra.mxu0 0
      %4487 = vmatprep.subr.bf16.mxu0 0
      %4488 = vmatpush1.bf16.msra.mxu0 0
      %4489 = vmatprep.subr.bf16.mxu0 0
      %4490 = vmatpush1.bf16.msra.mxu0 0
      %4491 = vmatprep.subr.bf16.mxu0 0
      %4492 = vmatpush1.bf16.msra.mxu0 0
      %4493 = vmatprep.subr.bf16.mxu0 0
      %4494 = vmatpush1.bf16.msra.mxu0 0
      %4495 = vmatprep.subr.bf16.mxu0 0
      %4496 = vmatpush1.bf16.msra.mxu0 0
      %4497 = vmatprep.subr.bf16.mxu0 0
      %4498 = vmatpush1.bf16.msra.mxu0 0
      %4499 = vmatprep.subr.bf16.mxu0 0
      %4500 = vmatpush1.bf16.msra.mxu0 0
      %4501 = vmatprep.subr.bf16.mxu0 0
      %4502 = vmatpush1.bf16.msra.mxu0 0
      %4503 = vmatprep.subr.bf16.mxu0 0
      %4504 = vmatpush1.bf16.msra.mxu0 0
      %4505 = vmatprep.subr.bf16.mxu0 0
      %4506 = vmatpush1.bf16.msra.mxu0 0
      %4507 = vmatprep.subr.bf16.mxu0 0
      %4508 = vmatpush1.bf16.msra.mxu0 0
      %4509 = vmatprep.mubr.bf16.mxu0 0
      %4510 = vmatmul.mubr.bf16.gmra.mrb[0].mxu0 %v4466
      %v4511 = vpop.f32.mrb[0].mxu0
      %v4512 = vadd.f32 0.0, %v4511
      %v4513 = vpop.f32.mrb[0].mxu0
      %v4514 = vpop.f32.mrb[0].mxu0
      %v4515 = vadd.f32 0.0, %v4514
      %v4516 = vpop.f32.mrb[0].mxu0
      %4517 = vmatprep.mubr.bf16.mxu0 0
      %4518 = vmatmul.mubr.bf16.gmra.mrb[0].mxu0 %v4469
      %v4519 = vpop.f32.mrb[0].mxu0
      %v4520 = vadd.f32 0.0, %v4519
      %v4521 = vpop.f32.mrb[0].mxu0
      %v4522 = vpop.f32.mrb[0].mxu0
      %v4523 = vadd.f32 0.0, %v4522
      %v4524 = vpop.f32.mrb[0].mxu0
      %4525 = vmatprep.mubr.bf16.mxu0 0
      %4526 = vmatmul.mubr.bf16.gmra.mrb[0].mxu0 %v4472
      %v4527 = vpop.f32.mrb[0].mxu0
      %v4528 = vadd.f32 0.0, %v4527
      %v4529 = vpop.f32.mrb[0].mxu0
      %v4530 = vpop.f32.mrb[0].mxu0
      %v4531 = vadd.f32 0.0, %v4530
      %v4532 = vpop.f32.mrb[0].mxu0
      %4533 = vmatprep.mubr.bf16.mxu0 0
      %4534 = vmatmul.mubr.bf16.gmra.mrb[0].mxu0 %v4475
      %v4535 = vpop.f32.mrb[0].mxu0
      %v4536 = vadd.f32 0.0, %v4535
      %v4537 = vpop.f32.mrb[0].mxu0
      %v4538 = vpop.f32.mrb[0].mxu0
      %v4539 = vadd.f32 0.0, %v4538
      %v4540 = vpop.f32.mrb[0].mxu0
      %4541 = vdwg.mxu0
      %v4542 = vadd.f32 %v4399, %v4512
      %v4543 = vadd.f32 %v4400, %v4515
      %v4544 = vadd.f32 %v4401, %v4520
      %v4545 = vadd.f32 %v4402, %v4523
      %v4546 = vadd.f32 %v4403, %v4528
      %v4547 = vadd.f32 %v4404, %v4531
      %v4548 = vadd.f32 %v4405, %v4536
      %v4549 = vadd.f32 %v4406, %v4539
      %v4551 = vlaneseq
      %v4552 = vshrl.u32 %v4551, 7
      %v4553 = vsub.s32 0, %v4552
      %v4554 = vrot.slane %v3124, %v4553
      %v4556 = vadd.f32 %v4542, %v4554
      %v4557 = vadd.f32 %v4543, %v4554
      %v4558 = vadd.f32 %v4544, %v4554
      %v4559 = vadd.f32 %v4545, %v4554
      %v4560 = vadd.f32 %v4546, %v4554
      %v4561 = vadd.f32 %v4547, %v4554
      %v4562 = vadd.f32 %v4548, %v4554
      %v4563 = vadd.f32 %v4549, %v4554
      %v4564 = vadd.f32 %v483, %v4556
      %v4565 = vadd.f32 %v484, %v4557
      %v4566 = vadd.f32 %v485, %v4558
      %v4567 = vadd.f32 %v486, %v4559
      %v4568 = vadd.f32 %v487, %v4560
      %v4569 = vadd.f32 %v488, %v4561
      %v4570 = vadd.f32 %v489, %v4562
      %v4571 = vadd.f32 %v490, %v4563
      %4572 = vst.msk [vmem:[%s481] sm:$0xff] %vm533, %v4564
      %4573 = vst.msk [vmem:[%s481 + $0x8] sm:$0xff] %vm533, %v4565
      %4574 = vst.msk [vmem:[%s481 + $0x10] sm:$0xff] %vm533, %v4566
      %4575 = vst.msk [vmem:[%s481 + $0x18] sm:$0xff] %vm533, %v4567
      %4576 = vst.msk [vmem:[%s481 + $0x20] sm:$0xff] %vm533, %v4568
      %4577 = vst.msk [vmem:[%s481 + $0x28] sm:$0xff] %vm533, %v4569
      %4578 = vst.msk [vmem:[%s481 + $0x30] sm:$0xff] %vm533, %v4570
      %4579 = vst.msk [vmem:[%s481 + $0x38] sm:$0xff] %vm533, %v4571
      %p4580 = scmp.lt.s32.totalorder %s25, 1
      %s4581 = scalar_select %p4580, %s25, 1
      %s4582 = smul.addr %s4581, 8
      %s4583 = smul.addr %s4582, 8
      %s4584 = scalar_lea.vmem %s14, %s4583
      // Predicated region
      $region77: #{tpu_custom_call.1} parent=75 // pred_check
        %p4585 = pneg %p347
      $region78: #{tpu_custom_call.1} parent=75 // pred_check_branch
        %4587 = sbr.rel (%p4585) target = $region80
      $region79: #{tpu_custom_call.1} parent=75 // pred_region
        _
      $region80: #{tpu_custom_call.1} parent=75 // pred_fallthru
        _
    $region76: #{tpu_custom_call.1} parent=5 // pred_fallthru
      _
    %p4588 = scmp.le.s32.totalorder 2, %s20
    // Predicated region
    $region81: #{tpu_custom_call.1} parent=5 // pred_check
      %p4589 = pneg %p4588
    $region82: #{tpu_custom_call.1} parent=5 // pred_check_branch
      %4591 = sbr.rel (%p4589) target = $region84
    $region83: #{tpu_custom_call.1} parent=5 // pred_region
      %s4592 = ssub.s32 %s20, 2
      // Predicated region
      $region85: #{tpu_custom_call.1} parent=83 // pred_check
        %p4593 = pneg %p353
      $region86: #{tpu_custom_call.1} parent=83 // pred_check_branch
        %4595 = sbr.rel (%p4593) target = $region88
      $region87: #{tpu_custom_call.1} parent=83 // pred_region
        %p4596 = scmp.lt.s32.totalorder %s26, 1
        %s4597 = scalar_select %p4596, %s26, 1
        %s4598 = smul.addr %s4597, 8
        %s4599 = smul.addr %s4598, 8
        %s4600 = scalar_lea.vmem %s14, %s4599
      $region88: #{tpu_custom_call.1} parent=83 // pred_fallthru
        _
    $region84: #{tpu_custom_call.1} parent=5 // pred_fallthru
      _
  $region6: #{tpu_custom_call.1} parent=0 // loop_footer
    %s24 = sadd.s32 1, %s20
  $region7: #{tpu_custom_call.1} parent=0 // loop_footer_branch
    %19 = sbr.rel target = $region3
  $region8: #{tpu_custom_call.1} parent=0 // loop_exit
    _

</llo_original>
